<compile_context>
chip_gen: v7x
topology: tpu7x:2x2x1
jax: 0.10.0
libtpu: 0.0.40
codegen_flags: <defaults>
</compile_context>

<pallas_src>
import functools
import math

import numpy as np
import jax
import jax.numpy as jnp
from jax.experimental import pallas as pl
from jax.experimental.pallas import tpu as pltpu

BN_EPS = 1e-5
LN_EPS = 1e-5

IN_CHAN = 4
LENGTH = 96
NUM_CLASSES = 6
HEAD = 2
D_ATT = 16          # agca self.d
EXP_SIZE = 24       # Block exp_size

C_FRONT = 4 * IN_CHAN                     # 16
L_FRONT = (LENGTH - 5) // 2 + 1           # 46  (front conv, k=5, s=2)
L_POOL = LENGTH // 2                      # 48  (AdaptiveMaxPool1d target)
L_MID = LENGTH // 4                       # 24  (Global_Convolution output length)
DW_K = 15
L_DW = (L_MID + 2 * 7 - DW_K) // 2 + 1    # 12  (depthwise conv output length)
C_ATT = 4 * EXP_SIZE                      # 96

# eval BatchNorm with identity running stats folds to a single positive scalar.
# With a real checkpoint, multiply the per-channel gamma/sqrt(var+eps) into the same
# weight *columns* (output-channel dim) and add the shift to the bias; the only BN
# whose channel dim is not the matmul output dim (Global_Convolution's BN(16)) would
# then need an explicit (1,16) row FMA instead.
_BN_FOLD = 1.0 / math.sqrt(1.0 + BN_EPS)


# ------------------------------ small helpers -------------------------------
def _relu(x):
    return jnp.maximum(x, 0.0)


def _hsigmoid(x):                        # relu6(x+3)/6
    return jnp.clip(x + 3.0, 0.0, 6.0) * (1.0 / 6.0)


def _hswish(x):                          # x * relu6(x+3)/6
    return x * _hsigmoid(x)


def _full(shape):
    """Full-array block, resident across all grid steps."""
    return pl.BlockSpec(shape, lambda *_: (0,) * len(shape))


# ------------------------------ Pallas kernels -------------------------------
def _qkv_kernel(win_ref, wf_ref, s1_ref, s2_ref, w1_ref, b1_ref, w2_ref, b2_ref,
                wfu_ref, wbc_ref, sdw_ref, wd_ref, wcf_ref, wqkv_ref, o_ref):
    """Global_Convolution + fuse + Block.conv + depthwise + agca.channel_fuse + qkv + LN.

    One batch element per grid step, channels-last everywhere (rows = length,
    lanes = channels).  Output (L_DW, 96) = [q_ln(h0)|q_ln(h1)|k_ln(h0)|k_ln(h1)|v].
    """
    win = win_ref[0]                                                          # (46, 20)
    # --- Global_Convolution.front: Conv1d(4->16,k=5,s=2)+BN+ReLU (BN folded) ------
    h = _relu(jnp.dot(win, wf_ref[...], preferred_element_type=jnp.float32))  # (46, 16)
    # --- AdaptiveMaxPool1d(48): every 46->48 window is <= 2 wide -> max of gathers -
    pooled = jnp.maximum(
        jnp.dot(s1_ref[...], h, preferred_element_type=jnp.float32),
        jnp.dot(s2_ref[...], h, preferred_element_type=jnp.float32))          # (48, 16)
    # --- Linear(48,8)+ReLU -> Linear(8,24)+BN(16)+h_sigmoid (per-channel MLP) -----
    z = _relu(jnp.dot(w1_ref[...], pooled, preferred_element_type=jnp.float32)
              + b1_ref[...])                                                  # (8, 16)
    g = _hsigmoid(jnp.dot(w2_ref[...], z, preferred_element_type=jnp.float32)
                  + b2_ref[...])                                              # (24, 16)
    # --- fuse: channel_fuse(16->10) + BN + h_swish --------------------------------
    f = _hswish(jnp.dot(g, wfu_ref[...], preferred_element_type=jnp.float32))  # (24, 10)
    # --- Block.conv: Conv1d(10->24, k=1) + BN + ReLU -------------------------------
    e = _relu(jnp.dot(f, wbc_ref[...], preferred_element_type=jnp.float32))    # (24, 24)
    # --- Block.depth_conv: Conv1d(24->24,k=15,s=2,p=7,groups=24) + BN --------------
    # Tap-major: one-hot row-selection matmul per tap + per-lane FMA.  Channels stay
    # in lanes; no cross-sublane reductions, no concat (padding folded into sdw).
    wd = wd_ref[...]                                                          # (15, 24)
    d = jnp.zeros((L_DW, EXP_SIZE), jnp.float32)
    for t in range(DW_K):
        sel = jnp.dot(sdw_ref[t], e, preferred_element_type=jnp.float32)      # (12, 24)
        d = d + sel * wd[t:t + 1, :]
    # --- agca: channel_fuse(24->96)+BN+h_swish, then qkv Linear(96->96, no bias) ---
    a = _hswish(jnp.dot(d, wcf_ref[...], preferred_element_type=jnp.float32))  # (12, 96)
    qkv = jnp.dot(a, wqkv_ref[...], preferred_element_type=jnp.float32)        # (12, 96)
    # --- LayerNorm(16) per head on q (cols 0:32) and k (cols 32:64); v untouched. --
    # Direct slice stores into the output ref (no 5-way lane concat).
    for idx in range(2 * HEAD):
        lo = idx * D_ATT
        sl = qkv[:, lo:lo + D_ATT]                                            # (12, 16)
        mu = jnp.mean(sl, axis=-1, keepdims=True)
        xc = sl - mu
        var = jnp.mean(xc * xc, axis=-1, keepdims=True)
        o_ref[0, :, lo:lo + D_ATT] = xc * jax.lax.rsqrt(var + LN_EPS)
    o_ref[0, :, 2 * HEAD * D_ATT:] = qkv[:, 2 * HEAD * D_ATT:]                # v (12, 32)


def _attn_kernel(qkv_ref, vre_ref, wph_ref, bp_ref, wpc_ref, woc1_ref, woc2_ref,
                 o_ref, *, scale):
    """Attention + proj + point_conv + avg-pool + classifier for one batch element."""
    qkv = qkv_ref[0]                                                          # (12, 96)
    q = qkv[:, 0:HEAD * D_ATT]                                                # (12, 32)
    k = qkv[:, HEAD * D_ATT:2 * HEAD * D_ATT]                                 # (12, 32)
    half = L_DW // HEAD                                                       # 6
    # The reference's (B,L,H,D)->(B,H,L*D) flatten gives head g rows 6g..6g+5, so the
    # scaled-dot-product score reduces to 2x2 block inner products (no reshape).
    def _bsum(x):
        return jnp.sum(jnp.sum(x, axis=1, keepdims=True), axis=0, keepdims=True)
    s00 = _bsum(q[0:half] * k[0:half]) * scale
    s01 = _bsum(q[0:half] * k[half:]) * scale
    s10 = _bsum(q[half:] * k[0:half]) * scale
    s11 = _bsum(q[half:] * k[half:]) * scale
    m0 = jnp.maximum(s00, s01)
    m1 = jnp.maximum(s10, s11)
    e00 = jnp.exp(s00 - m0)
    e01 = jnp.exp(s01 - m0)
    e10 = jnp.exp(s10 - m1)
    e11 = jnp.exp(s11 - m1)
    d0 = e00 + e01
    d1 = e10 + e11
    p00 = e00 / d0
    p01 = e01 / d0
    p10 = e10 / d1
    p11 = e11 / d1
    # Softmax-weighted V per head (P @ V folded into two (12,16) broadcast-FMAs),
    # then proj Linear(32->24) with the reference's scrambled att permute pre-applied
    # to V (host) and split per head into wph.
    v0 = vre_ref[0, 0]                                                        # (12, 16)
    v1 = vre_ref[0, 1]
    av0 = p00 * v0 + p01 * v1
    av1 = p10 * v0 + p11 * v1
    proj = _hswish(jnp.dot(av0, wph_ref[0], preferred_element_type=jnp.float32)
                   + jnp.dot(av1, wph_ref[1], preferred_element_type=jnp.float32)
                   + bp_ref[...])                                             # (12, 24)
    # Block.point_conv: Conv1d(24->24, k=1) + BN + ReLU
    pc = _relu(jnp.dot(proj, wpc_ref[...], preferred_element_type=jnp.float32))  # (12, 24)
    pooled = jnp.mean(pc, axis=0, keepdims=True)                              # (1, 24)
    hsw = _hswish(jnp.dot(pooled, woc1_ref[...],
                          preferred_element_type=jnp.float32))                # (1, 18)
    o_ref[0] = jnp.dot(hsw, woc2_ref[...], preferred_element_type=jnp.float32)  # (1, 6)


# ------------------------------ stage wrappers --------------------------------
def _qkv_stage(params, x):
    """Everything up to the qkv + LayerNorm output: (B, 12, 96)."""
    B = x.shape[0]
    CK = IN_CHAN * 5

    # host: im2col for the k=5, s=2 front conv, channels-last: (B, 46, Cin*K).
    idx = 2 * np.arange(L_FRONT)[:, None] + np.arange(5)[None, :]             # (46, 5)
    win = jnp.transpose(x[:, :, idx], (0, 2, 1, 3)).reshape(B, L_FRONT, CK)

    # host: one-hot selection matrices implementing AdaptiveMaxPool1d(48) (static).
    s1 = np.zeros((L_POOL, L_FRONT), np.float32)
    s2 = np.zeros((L_POOL, L_FRONT), np.float32)
    for i in range(L_POOL):
        lo = (i * L_FRONT) // L_POOL
        hi = ((i + 1) * L_FRONT + L_POOL - 1) // L_POOL - 1
        assert hi - lo <= 1          # every window is <= 2 wide for 46 -> 48
        s1[i, lo] = 1.0
        s2[i, hi] = 1.0

    # host: depthwise-conv tap selectors (zero padding folded in):
    # sdw[t, l, r] = 1  iff  r == 2*l + t - 7  and  0 <= r < 24.
    sdw = np.zeros((DW_K, L_DW, L_MID), np.float32)
    for t in range(DW_K):
        for l in range(L_DW):
            r = 2 * l + t - 7
            if 0 <= r < L_MID:
                sdw[t, l, r] = 1.0

    # host: BN folded into the adjacent weights (identity running stats; conv bias 0).
    wf = params["front_w"].reshape(C_FRONT, CK).T * _BN_FOLD                  # (20, 16)
    w1 = params["gc_lin1_w"]                                                  # (8, 48)
    b1 = params["gc_lin1_b"].reshape(-1, 1)                                   # (8, 1)
    w2 = params["gc_lin2_w"] * _BN_FOLD                                       # (24, 8)
    b2 = (params["gc_lin2_b"] * _BN_FOLD).reshape(-1, 1)                      # (24, 1)
    wfu = params["fuse_w"][:, :, 0].T * _BN_FOLD                              # (16, 10)
    wbc = params["blk_conv_w"][:, :, 0].T * _BN_FOLD                          # (10, 24)
    wd = params["blk_dw_w"][:, 0, :].T * _BN_FOLD                             # (15, 24)
    wcf = params["ca_fuse_w"][:, :, 0].T * _BN_FOLD                           # (24, 96)
    wqkv = params["ca_qkv_w"].T                                               # (96, 96)

    return pl.pallas_call(
        _qkv_kernel,
        out_shape=jax.ShapeDtypeStruct((B, L_DW, C_ATT), jnp.float32),
        grid=(B,),
        in_specs=[
            pl.BlockSpec((1, L_FRONT, CK), lambda b: (b, 0, 0)),
            _full((CK, C_FRONT)),
            _full((L_POOL, L_FRONT)), _full((L_POOL, L_FRONT)),
            _full((L_POOL // 6, L_POOL)), _full((L_POOL // 6, 1)),
            _full((L_MID, L_POOL // 6)), _full((L_MID, 1)),
            _full((C_FRONT, 10)), _full((10, EXP_SIZE)),
            _full((DW_K, L_DW, L_MID)), _full((DW_K, EXP_SIZE)),
            _full((EXP_SIZE, C_ATT)), _full((C_ATT, C_ATT)),
        ],
        out_specs=pl.BlockSpec((1, L_DW, C_ATT), lambda b: (b, 0, 0)),
        compiler_params=pltpu.CompilerParams(dimension_semantics=("parallel",)),
    )(win, wf, jnp.asarray(s1), jnp.asarray(s2), w1, b1, w2, b2,
      wfu, wbc, jnp.asarray(sdw), wd, wcf, wqkv)


def _attn_stage(params, qkv):
    """scaled-dot-product attention + proj + point_conv + pool + classifier."""
    B = qkv.shape[0]
    H, D, L = HEAD, D_ATT, L_DW
    # The reference's scrambled view/permute chain applied to V on the host — the
    # only data permutation that genuinely has to materialize between the kernels.
    v = qkv[:, :, 2 * H * D:]                                                 # (B, 12, 32)
    v_h = v.reshape(B, H, L * D)                                              # faithful flatten
    v_re = jnp.transpose(v_h.reshape(B, H, D, L), (0, 1, 3, 2))               # (B, H, L, D)

    wp = params["ca_proj_w"]                                                  # (24, 32)
    wph = jnp.stack([wp[:, hh::H].T for hh in range(H)], axis=0)              # (H, 16, 24)
    bp = params["ca_proj_b"].reshape(1, EXP_SIZE)
    wpc = params["blk_pc_w"][:, :, 0].T * _BN_FOLD                            # (24, 24)
    woc1 = params["oc1_w"][:, :, 0].T                                         # (24, 18)
    woc2 = params["oc2_w"][:, :, 0].T                                         # (18, 6)

    # scale matches F.scaled_dot_product_attention on the flattened (B,H,L*D) tensors
    # (faithful reproduction of the reference's view semantics).
    out3 = pl.pallas_call(
        functools.partial(_attn_kernel, scale=1.0 / math.sqrt(L * D)),
        out_shape=jax.ShapeDtypeStruct((B, 1, NUM_CLASSES), jnp.float32),
        grid=(B,),
        in_specs=[
            pl.BlockSpec((1, L, C_ATT), lambda b: (b, 0, 0)),
            pl.BlockSpec((1, H, L, D), lambda b: (b, 0, 0, 0)),
            _full((H, D, EXP_SIZE)), _full((1, EXP_SIZE)),
            _full((EXP_SIZE, EXP_SIZE)),
            _full((EXP_SIZE, 18)), _full((18, NUM_CLASSES)),
        ],
        out_specs=pl.BlockSpec((1, 1, NUM_CLASSES), lambda b: (b, 0, 0)),
        compiler_params=pltpu.CompilerParams(dimension_semantics=("parallel",)),
    )(qkv, v_re, wph, bp, wpc, woc1, woc2)
    return out3[:, 0, :]


def gcanet_forward(params, x):
    qkv = _qkv_stage(params, x)              # (B, 12, 96)
    return _attn_stage(params, qkv)          # (B, num_classes)


# ------------------------------ parameters -----------------------------------
def _kaiming_uniform(key, shape, fan_in):
    bound = math.sqrt(6.0 / fan_in)
    return jax.random.uniform(key, shape, jnp.float32, -bound, bound)


def _linear_bias(key, shape, fan_in):
    bound = 1.0 / math.sqrt(fan_in)
    return jax.random.uniform(key, shape, jnp.float32, -bound, bound)


def init_params(key):
    ks = iter(jax.random.split(key, 16))
    p = {}
    # Global_Convolution.front: Conv1d(4, 16, k=5, s=2)   (conv biases -> 0)
    p["front_w"] = _kaiming_uniform(next(ks), (C_FRONT, IN_CHAN, 5), IN_CHAN * 5)
    # Global_Convolution.conv: Linear(48, 8), Linear(8, 24)
    p["gc_lin1_w"] = _kaiming_uniform(next(ks), (L_POOL // 6, L_POOL), L_POOL)
    p["gc_lin1_b"] = _linear_bias(next(ks), (L_POOL // 6,), L_POOL)
    p["gc_lin2_w"] = _kaiming_uniform(next(ks), (L_MID, L_POOL // 6), L_POOL // 6)
    p["gc_lin2_b"] = _linear_bias(next(ks), (L_MID,), L_POOL // 6)
    # fuse: channel_fuse(16, 10)
    p["fuse_w"] = _kaiming_uniform(next(ks), (10, C_FRONT, 1), C_FRONT)
    # Block.conv: Conv1d(10, 24, 1, bias=False)
    p["blk_conv_w"] = _kaiming_uniform(next(ks), (EXP_SIZE, 10, 1), 10)
    # Block.depth_conv: Conv1d(24, 24, 15, s=2, p=7, groups=24)
    p["blk_dw_w"] = _kaiming_uniform(next(ks), (EXP_SIZE, 1, DW_K), DW_K)
    # agca.GCU: channel_fuse(24, 96)
    p["ca_fuse_w"] = _kaiming_uniform(next(ks), (C_ATT, EXP_SIZE, 1), EXP_SIZE)
    # agca.qkv: Linear(96, head*16*3, bias=False)
    p["ca_qkv_w"] = _kaiming_uniform(next(ks), (HEAD * D_ATT * 3, C_ATT), C_ATT)
    # agca.proj: Linear(head*16, 24)
    p["ca_proj_w"] = _kaiming_uniform(next(ks), (EXP_SIZE, HEAD * D_ATT), HEAD * D_ATT)
    p["ca_proj_b"] = _linear_bias(next(ks), (EXP_SIZE,), HEAD * D_ATT)
    # Block.point_conv: Conv1d(24, 24, 1)
    p["blk_pc_w"] = _kaiming_uniform(next(ks), (EXP_SIZE, EXP_SIZE, 1), EXP_SIZE)
    # out_conv2: Conv1d(24, 18, 1), Conv1d(18, num_classes, 1)
    p["oc1_w"] = _kaiming_uniform(next(ks), (18, EXP_SIZE, 1), EXP_SIZE)
    p["oc2_w"] = _kaiming_uniform(next(ks), (NUM_CLASSES, 18, 1), 18)
    return p


# ------------------------------------ main -----------------------------------
if __name__ == "__main__":
    key = jax.random.PRNGKey(0)
    pkey, xkey = jax.random.split(key)
    params = init_params(pkey)
    x = jax.random.normal(xkey, (2, IN_CHAN, LENGTH), dtype=jnp.float32)

    fwd = jax.jit(gcanet_forward)
    out = jax.block_until_ready(fwd(params, x))
    assert out.shape == (2, NUM_CLASSES), out.shape
    assert bool(jnp.all(jnp.isfinite(out)))
    print("KERNEL_OK")
</pallas_src>

<mosaic_0001>
module attributes {stable_mosaic.version = 11 : i64} {
  func.func @_qkv_kernel(%arg0: i32, %arg1: memref<1x46x20xf32, #tpu.memory_space<vmem>>, %arg2: memref<20x16xf32, #tpu.memory_space<vmem>>, %arg3: memref<48x46xf32, #tpu.memory_space<vmem>>, %arg4: memref<48x46xf32, #tpu.memory_space<vmem>>, %arg5: memref<8x48xf32, #tpu.memory_space<vmem>>, %arg6: memref<8x1xf32, #tpu.memory_space<vmem>>, %arg7: memref<24x8xf32, #tpu.memory_space<vmem>>, %arg8: memref<24x1xf32, #tpu.memory_space<vmem>>, %arg9: memref<16x10xf32, #tpu.memory_space<vmem>>, %arg10: memref<10x24xf32, #tpu.memory_space<vmem>>, %arg11: memref<15x12x24xf32, #tpu.memory_space<vmem>>, %arg12: memref<15x24xf32, #tpu.memory_space<vmem>>, %arg13: memref<24x96xf32, #tpu.memory_space<vmem>>, %arg14: memref<96x96xf32, #tpu.memory_space<vmem>>, %arg15: memref<1x12x96xf32, #tpu.memory_space<vmem>>) attributes {dimension_semantics = [#tpu.dimension_semantics<parallel>], iteration_bounds = array<i64: 2>, scalar_prefetch = 0 : i64, scratch_operands = 0 : i64, tpu.core_type = #tpu.core_type<tc>, window_params = [{transform_indices = @transform_0, window_bounds = array<i64: 1, 46, 20>}, {pipeline_mode = #tpu.pipeline_mode<synchronous>, transform_indices = @transform_1, window_bounds = array<i64: 20, 16>}, {pipeline_mode = #tpu.pipeline_mode<synchronous>, transform_indices = @transform_2, window_bounds = array<i64: 48, 46>}, {pipeline_mode = #tpu.pipeline_mode<synchronous>, transform_indices = @transform_3, window_bounds = array<i64: 48, 46>}, {pipeline_mode = #tpu.pipeline_mode<synchronous>, transform_indices = @transform_4, window_bounds = array<i64: 8, 48>}, {pipeline_mode = #tpu.pipeline_mode<synchronous>, transform_indices = @transform_5, window_bounds = array<i64: 8, 1>}, {pipeline_mode = #tpu.pipeline_mode<synchronous>, transform_indices = @transform_6, window_bounds = array<i64: 24, 8>}, {pipeline_mode = #tpu.pipeline_mode<synchronous>, transform_indices = @transform_7, window_bounds = array<i64: 24, 1>}, {pipeline_mode = #tpu.pipeline_mode<synchronous>, transform_indices = @transform_8, window_bounds = array<i64: 16, 10>}, {pipeline_mode = #tpu.pipeline_mode<synchronous>, transform_indices = @transform_9, window_bounds = array<i64: 10, 24>}, {pipeline_mode = #tpu.pipeline_mode<synchronous>, transform_indices = @transform_10, window_bounds = array<i64: 15, 12, 24>}, {pipeline_mode = #tpu.pipeline_mode<synchronous>, transform_indices = @transform_11, window_bounds = array<i64: 15, 24>}, {pipeline_mode = #tpu.pipeline_mode<synchronous>, transform_indices = @transform_12, window_bounds = array<i64: 24, 96>}, {pipeline_mode = #tpu.pipeline_mode<synchronous>, transform_indices = @transform_13, window_bounds = array<i64: 96, 96>}, {transform_indices = @transform_14, window_bounds = array<i64: 1, 12, 96>}]} {
    %c0 = arith.constant 0 : index
    %c0_0 = arith.constant 0 : index
    %c0_1 = arith.constant 0 : index
    %0 = vector.load %arg1[%c0, %c0_0, %c0_1] : memref<1x46x20xf32, #tpu.memory_space<vmem>>, vector<1x46x20xf32>
    %1 = vector.shape_cast %0 : vector<1x46x20xf32> to vector<46x20xf32>
    %c0_2 = arith.constant 0 : index
    %c0_3 = arith.constant 0 : index
    %2 = vector.load %arg2[%c0_2, %c0_3] : memref<20x16xf32, #tpu.memory_space<vmem>>, vector<20x16xf32>
    %cst = arith.constant dense<0.000000e+00> : vector<46x16xf32>
    %3 = tpu.matmul %1, %2, %cst {dimension_numbers = #tpu.dot_dimension_numbers<[1], [0], [0], [1], [0, 0, 1, 1], [], []>} : vector<46x20xf32>, vector<20x16xf32>, vector<46x16xf32> -> vector<46x16xf32>
    %cst_4 = arith.constant 0.000000e+00 : f32
    %4 = vector.broadcast %cst_4 : f32 to vector<46x16xf32>
    %5 = arith.maximumf %3, %4 : vector<46x16xf32>
    %c0_5 = arith.constant 0 : index
    %c0_6 = arith.constant 0 : index
    %6 = vector.load %arg3[%c0_5, %c0_6] : memref<48x46xf32, #tpu.memory_space<vmem>>, vector<48x46xf32>
    %cst_7 = arith.constant dense<0.000000e+00> : vector<48x16xf32>
    %7 = tpu.matmul %6, %5, %cst_7 {dimension_numbers = #tpu.dot_dimension_numbers<[1], [0], [0], [1], [0, 0, 1, 1], [], []>} : vector<48x46xf32>, vector<46x16xf32>, vector<48x16xf32> -> vector<48x16xf32>
    %c0_8 = arith.constant 0 : index
    %c0_9 = arith.constant 0 : index
    %8 = vector.load %arg4[%c0_8, %c0_9] : memref<48x46xf32, #tpu.memory_space<vmem>>, vector<48x46xf32>
    %cst_10 = arith.constant dense<0.000000e+00> : vector<48x16xf32>
    %9 = tpu.matmul %8, %5, %cst_10 {dimension_numbers = #tpu.dot_dimension_numbers<[1], [0], [0], [1], [0, 0, 1, 1], [], []>} : vector<48x46xf32>, vector<46x16xf32>, vector<48x16xf32> -> vector<48x16xf32>
    %10 = arith.maximumf %7, %9 : vector<48x16xf32>
    %c0_11 = arith.constant 0 : index
    %c0_12 = arith.constant 0 : index
    %11 = vector.load %arg5[%c0_11, %c0_12] : memref<8x48xf32, #tpu.memory_space<vmem>>, vector<8x48xf32>
    %cst_13 = arith.constant dense<0.000000e+00> : vector<8x16xf32>
    %12 = tpu.matmul %11, %10, %cst_13 {dimension_numbers = #tpu.dot_dimension_numbers<[1], [0], [0], [1], [0, 0, 1, 1], [], []>} : vector<8x48xf32>, vector<48x16xf32>, vector<8x16xf32> -> vector<8x16xf32>
    %c0_14 = arith.constant 0 : index
    %c0_15 = arith.constant 0 : index
    %13 = vector.load %arg6[%c0_14, %c0_15] : memref<8x1xf32, #tpu.memory_space<vmem>>, vector<8x1xf32>
    %14 = vector.broadcast %13 : vector<8x1xf32> to vector<8x16xf32>
    %15 = arith.addf %12, %14 : vector<8x16xf32>
    %cst_16 = arith.constant 0.000000e+00 : f32
    %16 = vector.broadcast %cst_16 : f32 to vector<8x16xf32>
    %17 = arith.maximumf %15, %16 : vector<8x16xf32>
    %c0_17 = arith.constant 0 : index
    %c0_18 = arith.constant 0 : index
    %18 = vector.load %arg7[%c0_17, %c0_18] : memref<24x8xf32, #tpu.memory_space<vmem>>, vector<24x8xf32>
    %cst_19 = arith.constant dense<0.000000e+00> : vector<24x16xf32>
    %19 = tpu.matmul %18, %17, %cst_19 {dimension_numbers = #tpu.dot_dimension_numbers<[1], [0], [0], [1], [0, 0, 1, 1], [], []>} : vector<24x8xf32>, vector<8x16xf32>, vector<24x16xf32> -> vector<24x16xf32>
    %c0_20 = arith.constant 0 : index
    %c0_21 = arith.constant 0 : index
    %20 = vector.load %arg8[%c0_20, %c0_21] : memref<24x1xf32, #tpu.memory_space<vmem>>, vector<24x1xf32>
    %21 = vector.broadcast %20 : vector<24x1xf32> to vector<24x16xf32>
    %22 = arith.addf %19, %21 : vector<24x16xf32>
    %cst_22 = arith.constant 3.000000e+00 : f32
    %23 = vector.broadcast %cst_22 : f32 to vector<24x16xf32>
    %24 = arith.addf %22, %23 : vector<24x16xf32>
    %cst_23 = arith.constant 0.000000e+00 : f32
    %cst_24 = arith.constant 6.000000e+00 : f32
    %25 = vector.broadcast %cst_23 : f32 to vector<24x16xf32>
    %26 = arith.maximumf %25, %24 : vector<24x16xf32>
    %27 = vector.broadcast %cst_24 : f32 to vector<24x16xf32>
    %28 = arith.minimumf %27, %26 : vector<24x16xf32>
    %cst_25 = arith.constant 0.166666672 : f32
    %29 = vector.broadcast %cst_25 : f32 to vector<24x16xf32>
    %30 = arith.mulf %28, %29 : vector<24x16xf32>
    %c0_26 = arith.constant 0 : index
    %c0_27 = arith.constant 0 : index
    %31 = vector.load %arg9[%c0_26, %c0_27] : memref<16x10xf32, #tpu.memory_space<vmem>>, vector<16x10xf32>
    %cst_28 = arith.constant dense<0.000000e+00> : vector<24x10xf32>
    %32 = tpu.matmul %30, %31, %cst_28 {dimension_numbers = #tpu.dot_dimension_numbers<[1], [0], [0], [1], [0, 0, 1, 1], [], []>} : vector<24x16xf32>, vector<16x10xf32>, vector<24x10xf32> -> vector<24x10xf32>
    %cst_29 = arith.constant 3.000000e+00 : f32
    %33 = vector.broadcast %cst_29 : f32 to vector<24x10xf32>
    %34 = arith.addf %32, %33 : vector<24x10xf32>
    %cst_30 = arith.constant 0.000000e+00 : f32
    %cst_31 = arith.constant 6.000000e+00 : f32
    %35 = vector.broadcast %cst_30 : f32 to vector<24x10xf32>
    %36 = arith.maximumf %35, %34 : vector<24x10xf32>
    %37 = vector.broadcast %cst_31 : f32 to vector<24x10xf32>
    %38 = arith.minimumf %37, %36 : vector<24x10xf32>
    %cst_32 = arith.constant 0.166666672 : f32
    %39 = vector.broadcast %cst_32 : f32 to vector<24x10xf32>
    %40 = arith.mulf %38, %39 : vector<24x10xf32>
    %41 = arith.mulf %32, %40 : vector<24x10xf32>
    %c0_33 = arith.constant 0 : index
    %c0_34 = arith.constant 0 : index
    %42 = vector.load %arg10[%c0_33, %c0_34] : memref<10x24xf32, #tpu.memory_space<vmem>>, vector<10x24xf32>
    %cst_35 = arith.constant dense<0.000000e+00> : vector<24x24xf32>
    %43 = tpu.matmul %41, %42, %cst_35 {dimension_numbers = #tpu.dot_dimension_numbers<[1], [0], [0], [1], [0, 0, 1, 1], [], []>} : vector<24x10xf32>, vector<10x24xf32>, vector<24x24xf32> -> vector<24x24xf32>
    %cst_36 = arith.constant 0.000000e+00 : f32
    %44 = vector.broadcast %cst_36 : f32 to vector<24x24xf32>
    %45 = arith.maximumf %43, %44 : vector<24x24xf32>
    %c0_37 = arith.constant 0 : index
    %c0_38 = arith.constant 0 : index
    %46 = vector.load %arg12[%c0_37, %c0_38] : memref<15x24xf32, #tpu.memory_space<vmem>>, vector<15x24xf32>
    %cst_39 = arith.constant 0.000000e+00 : f32
    %47 = vector.broadcast %cst_39 : f32 to vector<12x24xf32>
    %c0_40 = arith.constant 0 : index
    %c0_41 = arith.constant 0 : index
    %c0_42 = arith.constant 0 : index
    %48 = vector.load %arg11[%c0_40, %c0_41, %c0_42] : memref<15x12x24xf32, #tpu.memory_space<vmem>>, vector<1x12x24xf32>
    %49 = vector.shape_cast %48 : vector<1x12x24xf32> to vector<12x24xf32>
    %cst_43 = arith.constant dense<0.000000e+00> : vector<12x24xf32>
    %50 = tpu.matmul %49, %45, %cst_43 {dimension_numbers = #tpu.dot_dimension_numbers<[1], [0], [0], [1], [0, 0, 1, 1], [], []>} : vector<12x24xf32>, vector<24x24xf32>, vector<12x24xf32> -> vector<12x24xf32>
    %51 = vector.extract_strided_slice %46 {offsets = [0, 0], sizes = [1, 24], strides = [1, 1]} : vector<15x24xf32> to vector<1x24xf32>
    %52 = vector.broadcast %51 : vector<1x24xf32> to vector<12x24xf32>
    %53 = arith.mulf %50, %52 : vector<12x24xf32>
    %54 = arith.addf %47, %53 : vector<12x24xf32>
    %c1 = arith.constant 1 : index
    %c0_44 = arith.constant 0 : index
    %c0_45 = arith.constant 0 : index
    %55 = vector.load %arg11[%c1, %c0_44, %c0_45] : memref<15x12x24xf32, #tpu.memory_space<vmem>>, vector<1x12x24xf32>
    %56 = vector.shape_cast %55 : vector<1x12x24xf32> to vector<12x24xf32>
    %cst_46 = arith.constant dense<0.000000e+00> : vector<12x24xf32>
    %57 = tpu.matmul %56, %45, %cst_46 {dimension_numbers = #tpu.dot_dimension_numbers<[1], [0], [0], [1], [0, 0, 1, 1], [], []>} : vector<12x24xf32>, vector<24x24xf32>, vector<12x24xf32> -> vector<12x24xf32>
    %58 = vector.extract_strided_slice %46 {offsets = [1, 0], sizes = [1, 24], strides = [1, 1]} : vector<15x24xf32> to vector<1x24xf32>
    %59 = vector.broadcast %58 : vector<1x24xf32> to vector<12x24xf32>
    %60 = arith.mulf %57, %59 : vector<12x24xf32>
    %61 = arith.addf %54, %60 : vector<12x24xf32>
    %c2 = arith.constant 2 : index
    %c0_47 = arith.constant 0 : index
    %c0_48 = arith.constant 0 : index
    %62 = vector.load %arg11[%c2, %c0_47, %c0_48] : memref<15x12x24xf32, #tpu.memory_space<vmem>>, vector<1x12x24xf32>
    %63 = vector.shape_cast %62 : vector<1x12x24xf32> to vector<12x24xf32>
    %cst_49 = arith.constant dense<0.000000e+00> : vector<12x24xf32>
    %64 = tpu.matmul %63, %45, %cst_49 {dimension_numbers = #tpu.dot_dimension_numbers<[1], [0], [0], [1], [0, 0, 1, 1], [], []>} : vector<12x24xf32>, vector<24x24xf32>, vector<12x24xf32> -> vector<12x24xf32>
    %65 = vector.extract_strided_slice %46 {offsets = [2, 0], sizes = [1, 24], strides = [1, 1]} : vector<15x24xf32> to vector<1x24xf32>
    %66 = vector.broadcast %65 : vector<1x24xf32> to vector<12x24xf32>
    %67 = arith.mulf %64, %66 : vector<12x24xf32>
    %68 = arith.addf %61, %67 : vector<12x24xf32>
    %c3 = arith.constant 3 : index
    %c0_50 = arith.constant 0 : index
    %c0_51 = arith.constant 0 : index
    %69 = vector.load %arg11[%c3, %c0_50, %c0_51] : memref<15x12x24xf32, #tpu.memory_space<vmem>>, vector<1x12x24xf32>
    %70 = vector.shape_cast %69 : vector<1x12x24xf32> to vector<12x24xf32>
    %cst_52 = arith.constant dense<0.000000e+00> : vector<12x24xf32>
    %71 = tpu.matmul %70, %45, %cst_52 {dimension_numbers = #tpu.dot_dimension_numbers<[1], [0], [0], [1], [0, 0, 1, 1], [], []>} : vector<12x24xf32>, vector<24x24xf32>, vector<12x24xf32> -> vector<12x24xf32>
    %72 = vector.extract_strided_slice %46 {offsets = [3, 0], sizes = [1, 24], strides = [1, 1]} : vector<15x24xf32> to vector<1x24xf32>
    %73 = vector.broadcast %72 : vector<1x24xf32> to vector<12x24xf32>
    %74 = arith.mulf %71, %73 : vector<12x24xf32>
    %75 = arith.addf %68, %74 : vector<12x24xf32>
    %c4 = arith.constant 4 : index
    %c0_53 = arith.constant 0 : index
    %c0_54 = arith.constant 0 : index
    %76 = vector.load %arg11[%c4, %c0_53, %c0_54] : memref<15x12x24xf32, #tpu.memory_space<vmem>>, vector<1x12x24xf32>
    %77 = vector.shape_cast %76 : vector<1x12x24xf32> to vector<12x24xf32>
    %cst_55 = arith.constant dense<0.000000e+00> : vector<12x24xf32>
    %78 = tpu.matmul %77, %45, %cst_55 {dimension_numbers = #tpu.dot_dimension_numbers<[1], [0], [0], [1], [0, 0, 1, 1], [], []>} : vector<12x24xf32>, vector<24x24xf32>, vector<12x24xf32> -> vector<12x24xf32>
    %79 = vector.extract_strided_slice %46 {offsets = [4, 0], sizes = [1, 24], strides = [1, 1]} : vector<15x24xf32> to vector<1x24xf32>
    %80 = vector.broadcast %79 : vector<1x24xf32> to vector<12x24xf32>
    %81 = arith.mulf %78, %80 : vector<12x24xf32>
    %82 = arith.addf %75, %81 : vector<12x24xf32>
    %c5 = arith.constant 5 : index
    %c0_56 = arith.constant 0 : index
    %c0_57 = arith.constant 0 : index
    %83 = vector.load %arg11[%c5, %c0_56, %c0_57] : memref<15x12x24xf32, #tpu.memory_space<vmem>>, vector<1x12x24xf32>
    %84 = vector.shape_cast %83 : vector<1x12x24xf32> to vector<12x24xf32>
    %cst_58 = arith.constant dense<0.000000e+00> : vector<12x24xf32>
    %85 = tpu.matmul %84, %45, %cst_58 {dimension_numbers = #tpu.dot_dimension_numbers<[1], [0], [0], [1], [0, 0, 1, 1], [], []>} : vector<12x24xf32>, vector<24x24xf32>, vector<12x24xf32> -> vector<12x24xf32>
    %86 = vector.extract_strided_slice %46 {offsets = [5, 0], sizes = [1, 24], strides = [1, 1]} : vector<15x24xf32> to vector<1x24xf32>
    %87 = vector.broadcast %86 : vector<1x24xf32> to vector<12x24xf32>
    %88 = arith.mulf %85, %87 : vector<12x24xf32>
    %89 = arith.addf %82, %88 : vector<12x24xf32>
    %c6 = arith.constant 6 : index
    %c0_59 = arith.constant 0 : index
    %c0_60 = arith.constant 0 : index
    %90 = vector.load %arg11[%c6, %c0_59, %c0_60] : memref<15x12x24xf32, #tpu.memory_space<vmem>>, vector<1x12x24xf32>
    %91 = vector.shape_cast %90 : vector<1x12x24xf32> to vector<12x24xf32>
    %cst_61 = arith.constant dense<0.000000e+00> : vector<12x24xf32>
    %92 = tpu.matmul %91, %45, %cst_61 {dimension_numbers = #tpu.dot_dimension_numbers<[1], [0], [0], [1], [0, 0, 1, 1], [], []>} : vector<12x24xf32>, vector<24x24xf32>, vector<12x24xf32> -> vector<12x24xf32>
    %93 = vector.extract_strided_slice %46 {offsets = [6, 0], sizes = [1, 24], strides = [1, 1]} : vector<15x24xf32> to vector<1x24xf32>
    %94 = vector.broadcast %93 : vector<1x24xf32> to vector<12x24xf32>
    %95 = arith.mulf %92, %94 : vector<12x24xf32>
    %96 = arith.addf %89, %95 : vector<12x24xf32>
    %c7 = arith.constant 7 : index
    %c0_62 = arith.constant 0 : index
    %c0_63 = arith.constant 0 : index
    %97 = vector.load %arg11[%c7, %c0_62, %c0_63] : memref<15x12x24xf32, #tpu.memory_space<vmem>>, vector<1x12x24xf32>
    %98 = vector.shape_cast %97 : vector<1x12x24xf32> to vector<12x24xf32>
    %cst_64 = arith.constant dense<0.000000e+00> : vector<12x24xf32>
    %99 = tpu.matmul %98, %45, %cst_64 {dimension_numbers = #tpu.dot_dimension_numbers<[1], [0], [0], [1], [0, 0, 1, 1], [], []>} : vector<12x24xf32>, vector<24x24xf32>, vector<12x24xf32> -> vector<12x24xf32>
    %100 = vector.extract_strided_slice %46 {offsets = [7, 0], sizes = [1, 24], strides = [1, 1]} : vector<15x24xf32> to vector<1x24xf32>
    %101 = vector.broadcast %100 : vector<1x24xf32> to vector<12x24xf32>
    %102 = arith.mulf %99, %101 : vector<12x24xf32>
    %103 = arith.addf %96, %102 : vector<12x24xf32>
    %c8 = arith.constant 8 : index
    %c0_65 = arith.constant 0 : index
    %c0_66 = arith.constant 0 : index
    %104 = vector.load %arg11[%c8, %c0_65, %c0_66] : memref<15x12x24xf32, #tpu.memory_space<vmem>>, vector<1x12x24xf32>
    %105 = vector.shape_cast %104 : vector<1x12x24xf32> to vector<12x24xf32>
    %cst_67 = arith.constant dense<0.000000e+00> : vector<12x24xf32>
    %106 = tpu.matmul %105, %45, %cst_67 {dimension_numbers = #tpu.dot_dimension_numbers<[1], [0], [0], [1], [0, 0, 1, 1], [], []>} : vector<12x24xf32>, vector<24x24xf32>, vector<12x24xf32> -> vector<12x24xf32>
    %107 = vector.extract_strided_slice %46 {offsets = [8, 0], sizes = [1, 24], strides = [1, 1]} : vector<15x24xf32> to vector<1x24xf32>
    %108 = vector.broadcast %107 : vector<1x24xf32> to vector<12x24xf32>
    %109 = arith.mulf %106, %108 : vector<12x24xf32>
    %110 = arith.addf %103, %109 : vector<12x24xf32>
    %c9 = arith.constant 9 : index
    %c0_68 = arith.constant 0 : index
    %c0_69 = arith.constant 0 : index
    %111 = vector.load %arg11[%c9, %c0_68, %c0_69] : memref<15x12x24xf32, #tpu.memory_space<vmem>>, vector<1x12x24xf32>
    %112 = vector.shape_cast %111 : vector<1x12x24xf32> to vector<12x24xf32>
    %cst_70 = arith.constant dense<0.000000e+00> : vector<12x24xf32>
    %113 = tpu.matmul %112, %45, %cst_70 {dimension_numbers = #tpu.dot_dimension_numbers<[1], [0], [0], [1], [0, 0, 1, 1], [], []>} : vector<12x24xf32>, vector<24x24xf32>, vector<12x24xf32> -> vector<12x24xf32>
    %114 = vector.extract_strided_slice %46 {offsets = [9, 0], sizes = [1, 24], strides = [1, 1]} : vector<15x24xf32> to vector<1x24xf32>
    %115 = vector.broadcast %114 : vector<1x24xf32> to vector<12x24xf32>
    %116 = arith.mulf %113, %115 : vector<12x24xf32>
    %117 = arith.addf %110, %116 : vector<12x24xf32>
    %c10 = arith.constant 10 : index
    %c0_71 = arith.constant 0 : index
    %c0_72 = arith.constant 0 : index
    %118 = vector.load %arg11[%c10, %c0_71, %c0_72] : memref<15x12x24xf32, #tpu.memory_space<vmem>>, vector<1x12x24xf32>
    %119 = vector.shape_cast %118 : vector<1x12x24xf32> to vector<12x24xf32>
    %cst_73 = arith.constant dense<0.000000e+00> : vector<12x24xf32>
    %120 = tpu.matmul %119, %45, %cst_73 {dimension_numbers = #tpu.dot_dimension_numbers<[1], [0], [0], [1], [0, 0, 1, 1], [], []>} : vector<12x24xf32>, vector<24x24xf32>, vector<12x24xf32> -> vector<12x24xf32>
    %121 = vector.extract_strided_slice %46 {offsets = [10, 0], sizes = [1, 24], strides = [1, 1]} : vector<15x24xf32> to vector<1x24xf32>
    %122 = vector.broadcast %121 : vector<1x24xf32> to vector<12x24xf32>
    %123 = arith.mulf %120, %122 : vector<12x24xf32>
    %124 = arith.addf %117, %123 : vector<12x24xf32>
    %c11 = arith.constant 11 : index
    %c0_74 = arith.constant 0 : index
    %c0_75 = arith.constant 0 : index
    %125 = vector.load %arg11[%c11, %c0_74, %c0_75] : memref<15x12x24xf32, #tpu.memory_space<vmem>>, vector<1x12x24xf32>
    %126 = vector.shape_cast %125 : vector<1x12x24xf32> to vector<12x24xf32>
    %cst_76 = arith.constant dense<0.000000e+00> : vector<12x24xf32>
    %127 = tpu.matmul %126, %45, %cst_76 {dimension_numbers = #tpu.dot_dimension_numbers<[1], [0], [0], [1], [0, 0, 1, 1], [], []>} : vector<12x24xf32>, vector<24x24xf32>, vector<12x24xf32> -> vector<12x24xf32>
    %128 = vector.extract_strided_slice %46 {offsets = [11, 0], sizes = [1, 24], strides = [1, 1]} : vector<15x24xf32> to vector<1x24xf32>
    %129 = vector.broadcast %128 : vector<1x24xf32> to vector<12x24xf32>
    %130 = arith.mulf %127, %129 : vector<12x24xf32>
    %131 = arith.addf %124, %130 : vector<12x24xf32>
    %c12 = arith.constant 12 : index
    %c0_77 = arith.constant 0 : index
    %c0_78 = arith.constant 0 : index
    %132 = vector.load %arg11[%c12, %c0_77, %c0_78] : memref<15x12x24xf32, #tpu.memory_space<vmem>>, vector<1x12x24xf32>
    %133 = vector.shape_cast %132 : vector<1x12x24xf32> to vector<12x24xf32>
    %cst_79 = arith.constant dense<0.000000e+00> : vector<12x24xf32>
    %134 = tpu.matmul %133, %45, %cst_79 {dimension_numbers = #tpu.dot_dimension_numbers<[1], [0], [0], [1], [0, 0, 1, 1], [], []>} : vector<12x24xf32>, vector<24x24xf32>, vector<12x24xf32> -> vector<12x24xf32>
    %135 = vector.extract_strided_slice %46 {offsets = [12, 0], sizes = [1, 24], strides = [1, 1]} : vector<15x24xf32> to vector<1x24xf32>
    %136 = vector.broadcast %135 : vector<1x24xf32> to vector<12x24xf32>
    %137 = arith.mulf %134, %136 : vector<12x24xf32>
    %138 = arith.addf %131, %137 : vector<12x24xf32>
    %c13 = arith.constant 13 : index
    %c0_80 = arith.constant 0 : index
    %c0_81 = arith.constant 0 : index
    %139 = vector.load %arg11[%c13, %c0_80, %c0_81] : memref<15x12x24xf32, #tpu.memory_space<vmem>>, vector<1x12x24xf32>
    %140 = vector.shape_cast %139 : vector<1x12x24xf32> to vector<12x24xf32>
    %cst_82 = arith.constant dense<0.000000e+00> : vector<12x24xf32>
    %141 = tpu.matmul %140, %45, %cst_82 {dimension_numbers = #tpu.dot_dimension_numbers<[1], [0], [0], [1], [0, 0, 1, 1], [], []>} : vector<12x24xf32>, vector<24x24xf32>, vector<12x24xf32> -> vector<12x24xf32>
    %142 = vector.extract_strided_slice %46 {offsets = [13, 0], sizes = [1, 24], strides = [1, 1]} : vector<15x24xf32> to vector<1x24xf32>
    %143 = vector.broadcast %142 : vector<1x24xf32> to vector<12x24xf32>
    %144 = arith.mulf %141, %143 : vector<12x24xf32>
    %145 = arith.addf %138, %144 : vector<12x24xf32>
    %c14 = arith.constant 14 : index
    %c0_83 = arith.constant 0 : index
    %c0_84 = arith.constant 0 : index
    %146 = vector.load %arg11[%c14, %c0_83, %c0_84] : memref<15x12x24xf32, #tpu.memory_space<vmem>>, vector<1x12x24xf32>
    %147 = vector.shape_cast %146 : vector<1x12x24xf32> to vector<12x24xf32>
    %cst_85 = arith.constant dense<0.000000e+00> : vector<12x24xf32>
    %148 = tpu.matmul %147, %45, %cst_85 {dimension_numbers = #tpu.dot_dimension_numbers<[1], [0], [0], [1], [0, 0, 1, 1], [], []>} : vector<12x24xf32>, vector<24x24xf32>, vector<12x24xf32> -> vector<12x24xf32>
    %149 = vector.extract_strided_slice %46 {offsets = [14, 0], sizes = [1, 24], strides = [1, 1]} : vector<15x24xf32> to vector<1x24xf32>
    %150 = vector.broadcast %149 : vector<1x24xf32> to vector<12x24xf32>
    %151 = arith.mulf %148, %150 : vector<12x24xf32>
    %152 = arith.addf %145, %151 : vector<12x24xf32>
    %c0_86 = arith.constant 0 : index
    %c0_87 = arith.constant 0 : index
    %153 = vector.load %arg13[%c0_86, %c0_87] : memref<24x96xf32, #tpu.memory_space<vmem>>, vector<24x96xf32>
    %cst_88 = arith.constant dense<0.000000e+00> : vector<12x96xf32>
    %154 = tpu.matmul %152, %153, %cst_88 {dimension_numbers = #tpu.dot_dimension_numbers<[1], [0], [0], [1], [0, 0, 1, 1], [], []>} : vector<12x24xf32>, vector<24x96xf32>, vector<12x96xf32> -> vector<12x96xf32>
    %cst_89 = arith.constant 3.000000e+00 : f32
    %155 = vector.broadcast %cst_89 : f32 to vector<12x96xf32>
    %156 = arith.addf %154, %155 : vector<12x96xf32>
    %cst_90 = arith.constant 0.000000e+00 : f32
    %cst_91 = arith.constant 6.000000e+00 : f32
    %157 = vector.broadcast %cst_90 : f32 to vector<12x96xf32>
    %158 = arith.maximumf %157, %156 : vector<12x96xf32>
    %159 = vector.broadcast %cst_91 : f32 to vector<12x96xf32>
    %160 = arith.minimumf %159, %158 : vector<12x96xf32>
    %cst_92 = arith.constant 0.166666672 : f32
    %161 = vector.broadcast %cst_92 : f32 to vector<12x96xf32>
    %162 = arith.mulf %160, %161 : vector<12x96xf32>
    %163 = arith.mulf %154, %162 : vector<12x96xf32>
    %c0_93 = arith.constant 0 : index
    %c0_94 = arith.constant 0 : index
    %164 = vector.load %arg14[%c0_93, %c0_94] : memref<96x96xf32, #tpu.memory_space<vmem>>, vector<96x96xf32>
    %cst_95 = arith.constant dense<0.000000e+00> : vector<12x96xf32>
    %165 = tpu.matmul %163, %164, %cst_95 {dimension_numbers = #tpu.dot_dimension_numbers<[1], [0], [0], [1], [0, 0, 1, 1], [], []>} : vector<12x96xf32>, vector<96x96xf32>, vector<12x96xf32> -> vector<12x96xf32>
    %166 = vector.extract_strided_slice %165 {offsets = [0, 0], sizes = [12, 16], strides = [1, 1]} : vector<12x96xf32> to vector<12x16xf32>
    %cst_96 = arith.constant dense<0.000000e+00> : vector<12xf32>
    %167 = vector.multi_reduction <add>, %166, %cst_96 [1] : vector<12x16xf32> to vector<12xf32>
    %168 = vector.shape_cast %167 : vector<12xf32> to vector<12x1xf32>
    %cst_97 = arith.constant 1.600000e+01 : f32
    %169 = vector.broadcast %cst_97 : f32 to vector<12x1xf32>
    %170 = arith.divf %168, %169 : vector<12x1xf32>
    %171 = vector.broadcast %170 : vector<12x1xf32> to vector<12x16xf32>
    %172 = arith.subf %166, %171 : vector<12x16xf32>
    %173 = arith.mulf %172, %172 : vector<12x16xf32>
    %cst_98 = arith.constant dense<0.000000e+00> : vector<12xf32>
    %174 = vector.multi_reduction <add>, %173, %cst_98 [1] : vector<12x16xf32> to vector<12xf32>
    %175 = vector.shape_cast %174 : vector<12xf32> to vector<12x1xf32>
    %cst_99 = arith.constant 1.600000e+01 : f32
    %176 = vector.broadcast %cst_99 : f32 to vector<12x1xf32>
    %177 = arith.divf %175, %176 : vector<12x1xf32>
    %cst_100 = arith.constant 9.99999974E-6 : f32
    %178 = vector.broadcast %cst_100 : f32 to vector<12x1xf32>
    %179 = arith.addf %177, %178 : vector<12x1xf32>
    %180 = math.rsqrt %179 : vector<12x1xf32>
    %181 = vector.broadcast %180 : vector<12x1xf32> to vector<12x16xf32>
    %182 = arith.mulf %172, %181 : vector<12x16xf32>
    %c0_101 = arith.constant 0 : index
    %c0_102 = arith.constant 0 : index
    %c0_103 = arith.constant 0 : index
    %183 = vector.load %arg15[%c0_101, %c0_102, %c0_103] : memref<1x12x96xf32, #tpu.memory_space<vmem>>, vector<1x12x16xf32>
    %184 = vector.shape_cast %183 : vector<1x12x16xf32> to vector<12x16xf32>
    %185 = vector.shape_cast %182 : vector<12x16xf32> to vector<1x12x16xf32>
    tpu.vector_store %arg15[%c0_101, %c0_102, %c0_103], %185 {strides = array<i32>} : memref<1x12x96xf32, #tpu.memory_space<vmem>>, vector<1x12x16xf32>,
    %186 = vector.extract_strided_slice %165 {offsets = [0, 16], sizes = [12, 16], strides = [1, 1]} : vector<12x96xf32> to vector<12x16xf32>
    %cst_104 = arith.constant dense<0.000000e+00> : vector<12xf32>
    %187 = vector.multi_reduction <add>, %186, %cst_104 [1] : vector<12x16xf32> to vector<12xf32>
    %188 = vector.shape_cast %187 : vector<12xf32> to vector<12x1xf32>
    %cst_105 = arith.constant 1.600000e+01 : f32
    %189 = vector.broadcast %cst_105 : f32 to vector<12x1xf32>
    %190 = arith.divf %188, %189 : vector<12x1xf32>
    %191 = vector.broadcast %190 : vector<12x1xf32> to vector<12x16xf32>
    %192 = arith.subf %186, %191 : vector<12x16xf32>
    %193 = arith.mulf %192, %192 : vector<12x16xf32>
    %cst_106 = arith.constant dense<0.000000e+00> : vector<12xf32>
    %194 = vector.multi_reduction <add>, %193, %cst_106 [1] : vector<12x16xf32> to vector<12xf32>
    %195 = vector.shape_cast %194 : vector<12xf32> to vector<12x1xf32>
    %cst_107 = arith.constant 1.600000e+01 : f32
    %196 = vector.broadcast %cst_107 : f32 to vector<12x1xf32>
    %197 = arith.divf %195, %196 : vector<12x1xf32>
    %cst_108 = arith.constant 9.99999974E-6 : f32
    %198 = vector.broadcast %cst_108 : f32 to vector<12x1xf32>
    %199 = arith.addf %197, %198 : vector<12x1xf32>
    %200 = math.rsqrt %199 : vector<12x1xf32>
    %201 = vector.broadcast %200 : vector<12x1xf32> to vector<12x16xf32>
    %202 = arith.mulf %192, %201 : vector<12x16xf32>
    %c0_109 = arith.constant 0 : index
    %c0_110 = arith.constant 0 : index
    %c16 = arith.constant 16 : index
    %203 = vector.load %arg15[%c0_109, %c0_110, %c16] : memref<1x12x96xf32, #tpu.memory_space<vmem>>, vector<1x12x16xf32>
    %204 = vector.shape_cast %203 : vector<1x12x16xf32> to vector<12x16xf32>
    %205 = vector.shape_cast %202 : vector<12x16xf32> to vector<1x12x16xf32>
    tpu.vector_store %arg15[%c0_109, %c0_110, %c16], %205 {strides = array<i32>} : memref<1x12x96xf32, #tpu.memory_space<vmem>>, vector<1x12x16xf32>,
    %206 = vector.extract_strided_slice %165 {offsets = [0, 32], sizes = [12, 16], strides = [1, 1]} : vector<12x96xf32> to vector<12x16xf32>
    %cst_111 = arith.constant dense<0.000000e+00> : vector<12xf32>
    %207 = vector.multi_reduction <add>, %206, %cst_111 [1] : vector<12x16xf32> to vector<12xf32>
    %208 = vector.shape_cast %207 : vector<12xf32> to vector<12x1xf32>
    %cst_112 = arith.constant 1.600000e+01 : f32
    %209 = vector.broadcast %cst_112 : f32 to vector<12x1xf32>
    %210 = arith.divf %208, %209 : vector<12x1xf32>
    %211 = vector.broadcast %210 : vector<12x1xf32> to vector<12x16xf32>
    %212 = arith.subf %206, %211 : vector<12x16xf32>
    %213 = arith.mulf %212, %212 : vector<12x16xf32>
    %cst_113 = arith.constant dense<0.000000e+00> : vector<12xf32>
    %214 = vector.multi_reduction <add>, %213, %cst_113 [1] : vector<12x16xf32> to vector<12xf32>
    %215 = vector.shape_cast %214 : vector<12xf32> to vector<12x1xf32>
    %cst_114 = arith.constant 1.600000e+01 : f32
    %216 = vector.broadcast %cst_114 : f32 to vector<12x1xf32>
    %217 = arith.divf %215, %216 : vector<12x1xf32>
    %cst_115 = arith.constant 9.99999974E-6 : f32
    %218 = vector.broadcast %cst_115 : f32 to vector<12x1xf32>
    %219 = arith.addf %217, %218 : vector<12x1xf32>
    %220 = math.rsqrt %219 : vector<12x1xf32>
    %221 = vector.broadcast %220 : vector<12x1xf32> to vector<12x16xf32>
    %222 = arith.mulf %212, %221 : vector<12x16xf32>
    %c0_116 = arith.constant 0 : index
    %c0_117 = arith.constant 0 : index
    %c32 = arith.constant 32 : index
    %223 = vector.load %arg15[%c0_116, %c0_117, %c32] : memref<1x12x96xf32, #tpu.memory_space<vmem>>, vector<1x12x16xf32>
    %224 = vector.shape_cast %223 : vector<1x12x16xf32> to vector<12x16xf32>
    %225 = vector.shape_cast %222 : vector<12x16xf32> to vector<1x12x16xf32>
    tpu.vector_store %arg15[%c0_116, %c0_117, %c32], %225 {strides = array<i32>} : memref<1x12x96xf32, #tpu.memory_space<vmem>>, vector<1x12x16xf32>,
    %226 = vector.extract_strided_slice %165 {offsets = [0, 48], sizes = [12, 16], strides = [1, 1]} : vector<12x96xf32> to vector<12x16xf32>
    %cst_118 = arith.constant dense<0.000000e+00> : vector<12xf32>
    %227 = vector.multi_reduction <add>, %226, %cst_118 [1] : vector<12x16xf32> to vector<12xf32>
    %228 = vector.shape_cast %227 : vector<12xf32> to vector<12x1xf32>
    %cst_119 = arith.constant 1.600000e+01 : f32
    %229 = vector.broadcast %cst_119 : f32 to vector<12x1xf32>
    %230 = arith.divf %228, %229 : vector<12x1xf32>
    %231 = vector.broadcast %230 : vector<12x1xf32> to vector<12x16xf32>
    %232 = arith.subf %226, %231 : vector<12x16xf32>
    %233 = arith.mulf %232, %232 : vector<12x16xf32>
    %cst_120 = arith.constant dense<0.000000e+00> : vector<12xf32>
    %234 = vector.multi_reduction <add>, %233, %cst_120 [1] : vector<12x16xf32> to vector<12xf32>
    %235 = vector.shape_cast %234 : vector<12xf32> to vector<12x1xf32>
    %cst_121 = arith.constant 1.600000e+01 : f32
    %236 = vector.broadcast %cst_121 : f32 to vector<12x1xf32>
    %237 = arith.divf %235, %236 : vector<12x1xf32>
    %cst_122 = arith.constant 9.99999974E-6 : f32
    %238 = vector.broadcast %cst_122 : f32 to vector<12x1xf32>
    %239 = arith.addf %237, %238 : vector<12x1xf32>
    %240 = math.rsqrt %239 : vector<12x1xf32>
    %241 = vector.broadcast %240 : vector<12x1xf32> to vector<12x16xf32>
    %242 = arith.mulf %232, %241 : vector<12x16xf32>
    %c0_123 = arith.constant 0 : index
    %c0_124 = arith.constant 0 : index
    %c48 = arith.constant 48 : index
    %243 = vector.load %arg15[%c0_123, %c0_124, %c48] : memref<1x12x96xf32, #tpu.memory_space<vmem>>, vector<1x12x16xf32>
    %244 = vector.shape_cast %243 : vector<1x12x16xf32> to vector<12x16xf32>
    %245 = vector.shape_cast %242 : vector<12x16xf32> to vector<1x12x16xf32>
    tpu.vector_store %arg15[%c0_123, %c0_124, %c48], %245 {strides = array<i32>} : memref<1x12x96xf32, #tpu.memory_space<vmem>>, vector<1x12x16xf32>,
    %246 = vector.extract_strided_slice %165 {offsets = [0, 64], sizes = [12, 32], strides = [1, 1]} : vector<12x96xf32> to vector<12x32xf32>
    %c0_125 = arith.constant 0 : index
    %c0_126 = arith.constant 0 : index
    %c64 = arith.constant 64 : index
    %247 = vector.load %arg15[%c0_125, %c0_126, %c64] : memref<1x12x96xf32, #tpu.memory_space<vmem>>, vector<1x12x32xf32>
    %248 = vector.shape_cast %247 : vector<1x12x32xf32> to vector<12x32xf32>
    %249 = vector.shape_cast %246 : vector<12x32xf32> to vector<1x12x32xf32>
    tpu.vector_store %arg15[%c0_125, %c0_126, %c64], %249 {strides = array<i32>} : memref<1x12x96xf32, #tpu.memory_space<vmem>>, vector<1x12x32xf32>,
    return
  }
  func.func @transform_0(%arg0: i32) -> (i32, i32, i32) {
    %c0_i32 = arith.constant 0 : i32
    %c0_i32_0 = arith.constant 0 : i32
    %c0_i32_1 = arith.constant 0 : i32
    return %arg0, %c0_i32, %c0_i32_0 : i32, i32, i32
  }
  func.func @transform_1(%arg0: i32) -> (i32, i32) {
    %c0_i32 = arith.constant 0 : i32
    %c0_i32_0 = arith.constant 0 : i32
    %c0_i32_1 = arith.constant 0 : i32
    return %c0_i32, %c0_i32_0 : i32, i32
  }
  func.func @transform_2(%arg0: i32) -> (i32, i32) {
    %c0_i32 = arith.constant 0 : i32
    %c0_i32_0 = arith.constant 0 : i32
    %c0_i32_1 = arith.constant 0 : i32
    return %c0_i32, %c0_i32_0 : i32, i32
  }
  func.func @transform_3(%arg0: i32) -> (i32, i32) {
    %c0_i32 = arith.constant 0 : i32
    %c0_i32_0 = arith.constant 0 : i32
    %c0_i32_1 = arith.constant 0 : i32
    return %c0_i32, %c0_i32_0 : i32, i32
  }
  func.func @transform_4(%arg0: i32) -> (i32, i32) {
    %c0_i32 = arith.constant 0 : i32
    %c0_i32_0 = arith.constant 0 : i32
    %c0_i32_1 = arith.constant 0 : i32
    return %c0_i32, %c0_i32_0 : i32, i32
  }
  func.func @transform_5(%arg0: i32) -> (i32, i32) {
    %c0_i32 = arith.constant 0 : i32
    %c0_i32_0 = arith.constant 0 : i32
    %c0_i32_1 = arith.constant 0 : i32
    return %c0_i32, %c0_i32_0 : i32, i32
  }
  func.func @transform_6(%arg0: i32) -> (i32, i32) {
    %c0_i32 = arith.constant 0 : i32
    %c0_i32_0 = arith.constant 0 : i32
    %c0_i32_1 = arith.constant 0 : i32
    return %c0_i32, %c0_i32_0 : i32, i32
  }
  func.func @transform_7(%arg0: i32) -> (i32, i32) {
    %c0_i32 = arith.constant 0 : i32
    %c0_i32_0 = arith.constant 0 : i32
    %c0_i32_1 = arith.constant 0 : i32
    return %c0_i32, %c0_i32_0 : i32, i32
  }
  func.func @transform_8(%arg0: i32) -> (i32, i32) {
    %c0_i32 = arith.constant 0 : i32
    %c0_i32_0 = arith.constant 0 : i32
    %c0_i32_1 = arith.constant 0 : i32
    return %c0_i32, %c0_i32_0 : i32, i32
  }
  func.func @transform_9(%arg0: i32) -> (i32, i32) {
    %c0_i32 = arith.constant 0 : i32
    %c0_i32_0 = arith.constant 0 : i32
    %c0_i32_1 = arith.constant 0 : i32
    return %c0_i32, %c0_i32_0 : i32, i32
  }
  func.func @transform_10(%arg0: i32) -> (i32, i32, i32) {
    %c0_i32 = arith.constant 0 : i32
    %c0_i32_0 = arith.constant 0 : i32
    %c0_i32_1 = arith.constant 0 : i32
    %c0_i32_2 = arith.constant 0 : i32
    return %c0_i32, %c0_i32_0, %c0_i32_1 : i32, i32, i32
  }
  func.func @transform_11(%arg0: i32) -> (i32, i32) {
    %c0_i32 = arith.constant 0 : i32
    %c0_i32_0 = arith.constant 0 : i32
    %c0_i32_1 = arith.constant 0 : i32
    return %c0_i32, %c0_i32_0 : i32, i32
  }
  func.func @transform_12(%arg0: i32) -> (i32, i32) {
    %c0_i32 = arith.constant 0 : i32
    %c0_i32_0 = arith.constant 0 : i32
    %c0_i32_1 = arith.constant 0 : i32
    return %c0_i32, %c0_i32_0 : i32, i32
  }
  func.func @transform_13(%arg0: i32) -> (i32, i32) {
    %c0_i32 = arith.constant 0 : i32
    %c0_i32_0 = arith.constant 0 : i32
    %c0_i32_1 = arith.constant 0 : i32
    return %c0_i32, %c0_i32_0 : i32, i32
  }
  func.func @transform_14(%arg0: i32) -> (i32, i32, i32) {
    %c0_i32 = arith.constant 0 : i32
    %c0_i32_0 = arith.constant 0 : i32
    %c0_i32_1 = arith.constant 0 : i32
    return %arg0, %c0_i32, %c0_i32_0 : i32, i32, i32
  }
}

module attributes {stable_mosaic.version = 11 : i64} {
  func.func @_attn_kernel(%arg0: i32, %arg1: memref<1x12x96xf32, #tpu.memory_space<vmem>>, %arg2: memref<1x2x12x16xf32, #tpu.memory_space<vmem>>, %arg3: memref<2x16x24xf32, #tpu.memory_space<vmem>>, %arg4: memref<1x24xf32, #tpu.memory_space<vmem>>, %arg5: memref<24x24xf32, #tpu.memory_space<vmem>>, %arg6: memref<24x18xf32, #tpu.memory_space<vmem>>, %arg7: memref<18x6xf32, #tpu.memory_space<vmem>>, %arg8: memref<1x1x6xf32, #tpu.memory_space<vmem>>) attributes {dimension_semantics = [#tpu.dimension_semantics<parallel>], iteration_bounds = array<i64: 2>, scalar_prefetch = 0 : i64, scratch_operands = 0 : i64, tpu.core_type = #tpu.core_type<tc>, window_params = [{transform_indices = @transform_0, window_bounds = array<i64: 1, 12, 96>}, {transform_indices = @transform_1, window_bounds = array<i64: 1, 2, 12, 16>}, {pipeline_mode = #tpu.pipeline_mode<synchronous>, transform_indices = @transform_2, window_bounds = array<i64: 2, 16, 24>}, {pipeline_mode = #tpu.pipeline_mode<synchronous>, transform_indices = @transform_3, window_bounds = array<i64: 1, 24>}, {pipeline_mode = #tpu.pipeline_mode<synchronous>, transform_indices = @transform_4, window_bounds = array<i64: 24, 24>}, {pipeline_mode = #tpu.pipeline_mode<synchronous>, transform_indices = @transform_5, window_bounds = array<i64: 24, 18>}, {pipeline_mode = #tpu.pipeline_mode<synchronous>, transform_indices = @transform_6, window_bounds = array<i64: 18, 6>}, {transform_indices = @transform_7, window_bounds = array<i64: 1, 1, 6>}]} {
    %c0 = arith.constant 0 : index
    %c0_0 = arith.constant 0 : index
    %c0_1 = arith.constant 0 : index
    %0 = vector.load %arg1[%c0, %c0_0, %c0_1] : memref<1x12x96xf32, #tpu.memory_space<vmem>>, vector<1x12x96xf32>
    %1 = vector.shape_cast %0 : vector<1x12x96xf32> to vector<12x96xf32>
    %2 = vector.extract_strided_slice %1 {offsets = [0, 0], sizes = [12, 32], strides = [1, 1]} : vector<12x96xf32> to vector<12x32xf32>
    %3 = vector.extract_strided_slice %1 {offsets = [0, 32], sizes = [12, 32], strides = [1, 1]} : vector<12x96xf32> to vector<12x32xf32>
    %4 = vector.extract_strided_slice %2 {offsets = [0, 0], sizes = [6, 32], strides = [1, 1]} : vector<12x32xf32> to vector<6x32xf32>
    %5 = vector.extract_strided_slice %3 {offsets = [0, 0], sizes = [6, 32], strides = [1, 1]} : vector<12x32xf32> to vector<6x32xf32>
    %6 = arith.mulf %4, %5 : vector<6x32xf32>
    %cst = arith.constant dense<0.000000e+00> : vector<6xf32>
    %7 = vector.multi_reduction <add>, %6, %cst [1] : vector<6x32xf32> to vector<6xf32>
    %8 = vector.shape_cast %7 : vector<6xf32> to vector<6x1xf32>
    %cst_2 = arith.constant dense<0.000000e+00> : vector<1xf32>
    %9 = vector.multi_reduction <add>, %8, %cst_2 [0] : vector<6x1xf32> to vector<1xf32>
    %10 = vector.shape_cast %9 : vector<1xf32> to vector<1x1xf32>
    %cst_3 = arith.constant 0.0721687824 : f32
    %11 = vector.broadcast %cst_3 : f32 to vector<1x1xf32>
    %12 = arith.mulf %10, %11 : vector<1x1xf32>
    %13 = vector.extract_strided_slice %2 {offsets = [0, 0], sizes = [6, 32], strides = [1, 1]} : vector<12x32xf32> to vector<6x32xf32>
    %14 = vector.extract_strided_slice %3 {offsets = [6, 0], sizes = [6, 32], strides = [1, 1]} : vector<12x32xf32> to vector<6x32xf32>
    %15 = arith.mulf %13, %14 : vector<6x32xf32>
    %cst_4 = arith.constant dense<0.000000e+00> : vector<6xf32>
    %16 = vector.multi_reduction <add>, %15, %cst_4 [1] : vector<6x32xf32> to vector<6xf32>
    %17 = vector.shape_cast %16 : vector<6xf32> to vector<6x1xf32>
    %cst_5 = arith.constant dense<0.000000e+00> : vector<1xf32>
    %18 = vector.multi_reduction <add>, %17, %cst_5 [0] : vector<6x1xf32> to vector<1xf32>
    %19 = vector.shape_cast %18 : vector<1xf32> to vector<1x1xf32>
    %cst_6 = arith.constant 0.0721687824 : f32
    %20 = vector.broadcast %cst_6 : f32 to vector<1x1xf32>
    %21 = arith.mulf %19, %20 : vector<1x1xf32>
    %22 = vector.extract_strided_slice %2 {offsets = [6, 0], sizes = [6, 32], strides = [1, 1]} : vector<12x32xf32> to vector<6x32xf32>
    %23 = vector.extract_strided_slice %3 {offsets = [0, 0], sizes = [6, 32], strides = [1, 1]} : vector<12x32xf32> to vector<6x32xf32>
    %24 = arith.mulf %22, %23 : vector<6x32xf32>
    %cst_7 = arith.constant dense<0.000000e+00> : vector<6xf32>
    %25 = vector.multi_reduction <add>, %24, %cst_7 [1] : vector<6x32xf32> to vector<6xf32>
    %26 = vector.shape_cast %25 : vector<6xf32> to vector<6x1xf32>
    %cst_8 = arith.constant dense<0.000000e+00> : vector<1xf32>
    %27 = vector.multi_reduction <add>, %26, %cst_8 [0] : vector<6x1xf32> to vector<1xf32>
    %28 = vector.shape_cast %27 : vector<1xf32> to vector<1x1xf32>
    %cst_9 = arith.constant 0.0721687824 : f32
    %29 = vector.broadcast %cst_9 : f32 to vector<1x1xf32>
    %30 = arith.mulf %28, %29 : vector<1x1xf32>
    %31 = vector.extract_strided_slice %2 {offsets = [6, 0], sizes = [6, 32], strides = [1, 1]} : vector<12x32xf32> to vector<6x32xf32>
    %32 = vector.extract_strided_slice %3 {offsets = [6, 0], sizes = [6, 32], strides = [1, 1]} : vector<12x32xf32> to vector<6x32xf32>
    %33 = arith.mulf %31, %32 : vector<6x32xf32>
    %cst_10 = arith.constant dense<0.000000e+00> : vector<6xf32>
    %34 = vector.multi_reduction <add>, %33, %cst_10 [1] : vector<6x32xf32> to vector<6xf32>
    %35 = vector.shape_cast %34 : vector<6xf32> to vector<6x1xf32>
    %cst_11 = arith.constant dense<0.000000e+00> : vector<1xf32>
    %36 = vector.multi_reduction <add>, %35, %cst_11 [0] : vector<6x1xf32> to vector<1xf32>
    %37 = vector.shape_cast %36 : vector<1xf32> to vector<1x1xf32>
    %cst_12 = arith.constant 0.0721687824 : f32
    %38 = vector.broadcast %cst_12 : f32 to vector<1x1xf32>
    %39 = arith.mulf %37, %38 : vector<1x1xf32>
    %40 = arith.maximumf %12, %21 : vector<1x1xf32>
    %41 = arith.maximumf %30, %39 : vector<1x1xf32>
    %42 = arith.subf %12, %40 : vector<1x1xf32>
    %43 = math.exp %42 : vector<1x1xf32>
    %44 = arith.subf %21, %40 : vector<1x1xf32>
    %45 = math.exp %44 : vector<1x1xf32>
    %46 = arith.subf %30, %41 : vector<1x1xf32>
    %47 = math.exp %46 : vector<1x1xf32>
    %48 = arith.subf %39, %41 : vector<1x1xf32>
    %49 = math.exp %48 : vector<1x1xf32>
    %50 = arith.addf %43, %45 : vector<1x1xf32>
    %51 = arith.addf %47, %49 : vector<1x1xf32>
    %52 = arith.divf %43, %50 : vector<1x1xf32>
    %53 = arith.divf %45, %50 : vector<1x1xf32>
    %54 = arith.divf %47, %51 : vector<1x1xf32>
    %55 = arith.divf %49, %51 : vector<1x1xf32>
    %c0_13 = arith.constant 0 : index
    %c0_14 = arith.constant 0 : index
    %c0_15 = arith.constant 0 : index
    %c0_16 = arith.constant 0 : index
    %56 = vector.load %arg2[%c0_13, %c0_14, %c0_15, %c0_16] : memref<1x2x12x16xf32, #tpu.memory_space<vmem>>, vector<1x1x12x16xf32>
    %57 = vector.shape_cast %56 : vector<1x1x12x16xf32> to vector<12x16xf32>
    %c0_17 = arith.constant 0 : index
    %c1 = arith.constant 1 : index
    %c0_18 = arith.constant 0 : index
    %c0_19 = arith.constant 0 : index
    %58 = vector.load %arg2[%c0_17, %c1, %c0_18, %c0_19] : memref<1x2x12x16xf32, #tpu.memory_space<vmem>>, vector<1x1x12x16xf32>
    %59 = vector.shape_cast %58 : vector<1x1x12x16xf32> to vector<12x16xf32>
    %60 = vector.broadcast %52 : vector<1x1xf32> to vector<12x16xf32>
    %61 = arith.mulf %60, %57 : vector<12x16xf32>
    %62 = vector.broadcast %53 : vector<1x1xf32> to vector<12x16xf32>
    %63 = arith.mulf %62, %59 : vector<12x16xf32>
    %64 = arith.addf %61, %63 : vector<12x16xf32>
    %65 = vector.broadcast %54 : vector<1x1xf32> to vector<12x16xf32>
    %66 = arith.mulf %65, %57 : vector<12x16xf32>
    %67 = vector.broadcast %55 : vector<1x1xf32> to vector<12x16xf32>
    %68 = arith.mulf %67, %59 : vector<12x16xf32>
    %69 = arith.addf %66, %68 : vector<12x16xf32>
    %c0_20 = arith.constant 0 : index
    %c0_21 = arith.constant 0 : index
    %c0_22 = arith.constant 0 : index
    %70 = vector.load %arg3[%c0_20, %c0_21, %c0_22] : memref<2x16x24xf32, #tpu.memory_space<vmem>>, vector<1x16x24xf32>
    %71 = vector.shape_cast %70 : vector<1x16x24xf32> to vector<16x24xf32>
    %cst_23 = arith.constant dense<0.000000e+00> : vector<12x24xf32>
    %72 = tpu.matmul %64, %71, %cst_23 {dimension_numbers = #tpu.dot_dimension_numbers<[1], [0], [0], [1], [0, 0, 1, 1], [], []>} : vector<12x16xf32>, vector<16x24xf32>, vector<12x24xf32> -> vector<12x24xf32>
    %c1_24 = arith.constant 1 : index
    %c0_25 = arith.constant 0 : index
    %c0_26 = arith.constant 0 : index
    %73 = vector.load %arg3[%c1_24, %c0_25, %c0_26] : memref<2x16x24xf32, #tpu.memory_space<vmem>>, vector<1x16x24xf32>
    %74 = vector.shape_cast %73 : vector<1x16x24xf32> to vector<16x24xf32>
    %cst_27 = arith.constant dense<0.000000e+00> : vector<12x24xf32>
    %75 = tpu.matmul %69, %74, %cst_27 {dimension_numbers = #tpu.dot_dimension_numbers<[1], [0], [0], [1], [0, 0, 1, 1], [], []>} : vector<12x16xf32>, vector<16x24xf32>, vector<12x24xf32> -> vector<12x24xf32>
    %76 = arith.addf %72, %75 : vector<12x24xf32>
    %c0_28 = arith.constant 0 : index
    %c0_29 = arith.constant 0 : index
    %77 = vector.load %arg4[%c0_28, %c0_29] : memref<1x24xf32, #tpu.memory_space<vmem>>, vector<1x24xf32>
    %78 = vector.broadcast %77 : vector<1x24xf32> to vector<12x24xf32>
    %79 = arith.addf %76, %78 : vector<12x24xf32>
    %cst_30 = arith.constant 3.000000e+00 : f32
    %80 = vector.broadcast %cst_30 : f32 to vector<12x24xf32>
    %81 = arith.addf %79, %80 : vector<12x24xf32>
    %cst_31 = arith.constant 0.000000e+00 : f32
    %cst_32 = arith.constant 6.000000e+00 : f32
    %82 = vector.broadcast %cst_31 : f32 to vector<12x24xf32>
    %83 = arith.maximumf %82, %81 : vector<12x24xf32>
    %84 = vector.broadcast %cst_32 : f32 to vector<12x24xf32>
    %85 = arith.minimumf %84, %83 : vector<12x24xf32>
    %cst_33 = arith.constant 0.166666672 : f32
    %86 = vector.broadcast %cst_33 : f32 to vector<12x24xf32>
    %87 = arith.mulf %85, %86 : vector<12x24xf32>
    %88 = arith.mulf %79, %87 : vector<12x24xf32>
    %c0_34 = arith.constant 0 : index
    %c0_35 = arith.constant 0 : index
    %89 = vector.load %arg5[%c0_34, %c0_35] : memref<24x24xf32, #tpu.memory_space<vmem>>, vector<24x24xf32>
    %cst_36 = arith.constant dense<0.000000e+00> : vector<12x24xf32>
    %90 = tpu.matmul %88, %89, %cst_36 {dimension_numbers = #tpu.dot_dimension_numbers<[1], [0], [0], [1], [0, 0, 1, 1], [], []>} : vector<12x24xf32>, vector<24x24xf32>, vector<12x24xf32> -> vector<12x24xf32>
    %cst_37 = arith.constant 0.000000e+00 : f32
    %91 = vector.broadcast %cst_37 : f32 to vector<12x24xf32>
    %92 = arith.maximumf %90, %91 : vector<12x24xf32>
    %cst_38 = arith.constant dense<0.000000e+00> : vector<24xf32>
    %93 = vector.multi_reduction <add>, %92, %cst_38 [0] : vector<12x24xf32> to vector<24xf32>
    %94 = vector.shape_cast %93 : vector<24xf32> to vector<1x24xf32>
    %cst_39 = arith.constant 1.200000e+01 : f32
    %95 = vector.broadcast %cst_39 : f32 to vector<1x24xf32>
    %96 = arith.divf %94, %95 : vector<1x24xf32>
    %c0_40 = arith.constant 0 : index
    %c0_41 = arith.constant 0 : index
    %97 = vector.load %arg6[%c0_40, %c0_41] : memref<24x18xf32, #tpu.memory_space<vmem>>, vector<24x18xf32>
    %cst_42 = arith.constant dense<0.000000e+00> : vector<1x18xf32>
    %98 = tpu.matmul %96, %97, %cst_42 {dimension_numbers = #tpu.dot_dimension_numbers<[1], [0], [0], [1], [0, 0, 1, 1], [], []>} : vector<1x24xf32>, vector<24x18xf32>, vector<1x18xf32> -> vector<1x18xf32>
    %cst_43 = arith.constant 3.000000e+00 : f32
    %99 = vector.broadcast %cst_43 : f32 to vector<1x18xf32>
    %100 = arith.addf %98, %99 : vector<1x18xf32>
    %cst_44 = arith.constant 0.000000e+00 : f32
    %cst_45 = arith.constant 6.000000e+00 : f32
    %101 = vector.broadcast %cst_44 : f32 to vector<1x18xf32>
    %102 = arith.maximumf %101, %100 : vector<1x18xf32>
    %103 = vector.broadcast %cst_45 : f32 to vector<1x18xf32>
    %104 = arith.minimumf %103, %102 : vector<1x18xf32>
    %cst_46 = arith.constant 0.166666672 : f32
    %105 = vector.broadcast %cst_46 : f32 to vector<1x18xf32>
    %106 = arith.mulf %104, %105 : vector<1x18xf32>
    %107 = arith.mulf %98, %106 : vector<1x18xf32>
    %c0_47 = arith.constant 0 : index
    %c0_48 = arith.constant 0 : index
    %108 = vector.load %arg7[%c0_47, %c0_48] : memref<18x6xf32, #tpu.memory_space<vmem>>, vector<18x6xf32>
    %cst_49 = arith.constant dense<0.000000e+00> : vector<1x6xf32>
    %109 = tpu.matmul %107, %108, %cst_49 {dimension_numbers = #tpu.dot_dimension_numbers<[1], [0], [0], [1], [0, 0, 1, 1], [], []>} : vector<1x18xf32>, vector<18x6xf32>, vector<1x6xf32> -> vector<1x6xf32>
    %c0_50 = arith.constant 0 : index
    %c0_51 = arith.constant 0 : index
    %c0_52 = arith.constant 0 : index
    %110 = vector.load %arg8[%c0_50, %c0_51, %c0_52] : memref<1x1x6xf32, #tpu.memory_space<vmem>>, vector<1x1x6xf32>
    %111 = vector.shape_cast %110 : vector<1x1x6xf32> to vector<1x6xf32>
    %112 = vector.shape_cast %109 : vector<1x6xf32> to vector<1x1x6xf32>
    tpu.vector_store %arg8[%c0_50, %c0_51, %c0_52], %112 {strides = array<i32>} : memref<1x1x6xf32, #tpu.memory_space<vmem>>, vector<1x1x6xf32>,
    return
  }
  func.func @transform_0(%arg0: i32) -> (i32, i32, i32) {
    %c0_i32 = arith.constant 0 : i32
    %c0_i32_0 = arith.constant 0 : i32
    %c0_i32_1 = arith.constant 0 : i32
    return %arg0, %c0_i32, %c0_i32_0 : i32, i32, i32
  }
  func.func @transform_1(%arg0: i32) -> (i32, i32, i32, i32) {
    %c0_i32 = arith.constant 0 : i32
    %c0_i32_0 = arith.constant 0 : i32
    %c0_i32_1 = arith.constant 0 : i32
    %c0_i32_2 = arith.constant 0 : i32
    return %arg0, %c0_i32, %c0_i32_0, %c0_i32_1 : i32, i32, i32, i32
  }
  func.func @transform_2(%arg0: i32) -> (i32, i32, i32) {
    %c0_i32 = arith.constant 0 : i32
    %c0_i32_0 = arith.constant 0 : i32
    %c0_i32_1 = arith.constant 0 : i32
    %c0_i32_2 = arith.constant 0 : i32
    return %c0_i32, %c0_i32_0, %c0_i32_1 : i32, i32, i32
  }
  func.func @transform_3(%arg0: i32) -> (i32, i32) {
    %c0_i32 = arith.constant 0 : i32
    %c0_i32_0 = arith.constant 0 : i32
    %c0_i32_1 = arith.constant 0 : i32
    return %c0_i32, %c0_i32_0 : i32, i32
  }
  func.func @transform_4(%arg0: i32) -> (i32, i32) {
    %c0_i32 = arith.constant 0 : i32
    %c0_i32_0 = arith.constant 0 : i32
    %c0_i32_1 = arith.constant 0 : i32
    return %c0_i32, %c0_i32_0 : i32, i32
  }
  func.func @transform_5(%arg0: i32) -> (i32, i32) {
    %c0_i32 = arith.constant 0 : i32
    %c0_i32_0 = arith.constant 0 : i32
    %c0_i32_1 = arith.constant 0 : i32
    return %c0_i32, %c0_i32_0 : i32, i32
  }
  func.func @transform_6(%arg0: i32) -> (i32, i32) {
    %c0_i32 = arith.constant 0 : i32
    %c0_i32_0 = arith.constant 0 : i32
    %c0_i32_1 = arith.constant 0 : i32
    return %c0_i32, %c0_i32_0 : i32, i32
  }
  func.func @transform_7(%arg0: i32) -> (i32, i32, i32) {
    %c0_i32 = arith.constant 0 : i32
    %c0_i32_0 = arith.constant 0 : i32
    %c0_i32_1 = arith.constant 0 : i32
    return %arg0, %c0_i32, %c0_i32_0 : i32, i32, i32
  }
}

</mosaic_0001>

<llo_original>
// kernel: gcanet_forward.3
$region0: #{gcanet_forward.3}
  #allocation0 [shape = 'u32[]', space=smem, size = 0x4, offset = 0x4, fixed_abs, tag = 'smem constant byte address 0x4 - core index']
  #allocation1 [shape = 'u32[144,128]{1,0:T(1,128)}', space=vmem, size = 0x12000, scoped, tag = 'internal scratch']
  %s0 = inlined_call_operand.vmem [shape: f32[2,12,96], index: 0, kind: input, shape index: {}]
  %s1 = inlined_call_operand.vmem [shape: f32[2,2,12,16], index: 1, kind: input, shape index: {}]
  %s2 = inlined_call_operand.vmem [shape: f32[2,16,24], index: 2, kind: input, shape index: {}]
  %s3 = inlined_call_operand.vmem [shape: f32[1,24], index: 3, kind: input, shape index: {}]
  %s4 = inlined_call_operand.vmem [shape: f32[24,24], index: 4, kind: input, shape index: {}]
  %s5 = inlined_call_operand.vmem [shape: f32[24,18], index: 5, kind: input, shape index: {}]
  %s6 = inlined_call_operand.vmem [shape: f32[18,6], index: 6, kind: input, shape index: {}]
  %s7 = inlined_call_operand.hbm [shape: f32[2,1,6], index: 7, kind: output, shape index: {}]
  %s8 = sld [smem:[#allocation0]]
  $region61: #{gcanet_forward.3} parent=0
    _
  %s10 = ssub.s32 1, %s8
  %s11 = scalar_select 0, %s10, %s8
  $region1: #{gcanet_forward.3} parent=0
    #allocation2 [shape = 'u8[1024]{0}', space=vmem, size = 0x400, scoped, tag = 'output window, operand 0']
    #allocation3 [shape = 's32[2]{0}', space=sflag, size = 0x8, scoped, tag = 'scoped memory for gcanet_forward.3']
    %12 = vsyncpa [#allocation3], 0
    %s13 = scalar_lea.sflag [#allocation3], 1
    %14 = vsyncpa %s13, 0
    loop: start=0, step=1, limit=4
    $region2: #{gcanet_forward.3} parent=1 // loop_pre_header
      _
    $region3: #{gcanet_forward.3} parent=1 // loop_header
      %s16 = sphi 0, %s20
      %p17 = scmp.ge.s32.totalorder %s16, 4
      %s26 = sphi 0, %s28
      %s29 = sphi 0, %s26
      %s30 = sphi 0, %s29
      %s46 = sphi 0, %s30
      %s52 = sphi 0, %s54
      %s55 = sphi 0, %s52
      %s56 = sphi 0, %s55
      %s72 = sphi 0, %s56
      %s76 = sphi 0, %s76
      %s78 = sphi 0, %s76
      %s79 = sphi 0, %s78
      %s93 = sphi 0, %s79
      %s97 = sphi 0, %s97
      %s99 = sphi 0, %s97
      %s100 = sphi 0, %s99
      %s114 = sphi 0, %s100
      %s118 = sphi 0, %s118
      %s120 = sphi 0, %s118
      %s121 = sphi 0, %s120
      %s135 = sphi 0, %s121
      %s139 = sphi 0, %s139
      %s141 = sphi 0, %s139
      %s142 = sphi 0, %s141
      %s156 = sphi 0, %s142
      %s160 = sphi 0, %s160
      %s162 = sphi 0, %s160
      %s163 = sphi 0, %s162
      %s177 = sphi 0, %s163
      %s183 = sphi 0, %s185
      %s186 = sphi 0, %s183
      %s187 = sphi 0, %s186
      %s203 = sphi 0, %s187
    $region4: #{gcanet_forward.3} parent=1 // loop_header_branch
      %19 = sbr.rel (%p17) target = $region8
    $region5: #{gcanet_forward.3} parent=1 // loop_body
      %s21 = ssub.s32 %s16, 1
      %s22 = ssub.s32 %s16, 2
      %s23 = sadd.s32 %s16, 1
      %s24 = ssub.s32 %s16, %s23
      %p25 = scmp.eq.s32.totalorder %s24, 0
      %s27 = sadd.s32 %s26, 1
      %s28 = scalar_select %p25, %s26, %s27
      %p31 = pneg %p25
      %p32 = scmp.eq.s32.totalorder %s16, 1
      %p33 = por %p31, %p32
      %p34 = scmp.ne.s32.totalorder %s26, %s29
      %p35 = scmp.eq.s32.totalorder %s16, 0
      %p36 = por %p34, %p35
      %p37 = scmp.ne.s32.totalorder %s26, %s29
      %p38 = scmp.eq.s32.totalorder %s21, 1
      %p39 = por %p37, %p38
      %p40 = scmp.ne.s32.totalorder %s29, %s30
      %p41 = scmp.eq.s32.totalorder %s21, 0
      %p42 = por %p40, %p41
      %p43 = scmp.ne.s32.totalorder %s29, %s30
      %p44 = scmp.eq.s32.totalorder %s22, 1
      %p45 = por %p43, %p44
      %p47 = scmp.ne.s32.totalorder %s30, %s46
      %p48 = scmp.eq.s32.totalorder %s22, 0
      %p49 = por %p47, %p48
      %s50 = ssub.s32 %s16, %s23
      %p51 = scmp.eq.s32.totalorder %s50, 0
      %s53 = sadd.s32 %s52, 1
      %s54 = scalar_select %p51, %s52, %s53
      %p57 = pneg %p51
      %p58 = scmp.eq.s32.totalorder %s16, 1
      %p59 = por %p57, %p58
      %p60 = scmp.ne.s32.totalorder %s52, %s55
      %p61 = scmp.eq.s32.totalorder %s16, 0
      %p62 = por %p60, %p61
      %p63 = scmp.ne.s32.totalorder %s52, %s55
      %p64 = scmp.eq.s32.totalorder %s21, 1
      %p65 = por %p63, %p64
      %p66 = scmp.ne.s32.totalorder %s55, %s56
      %p67 = scmp.eq.s32.totalorder %s21, 0
      %p68 = por %p66, %p67
      %p69 = scmp.ne.s32.totalorder %s55, %s56
      %p70 = scmp.eq.s32.totalorder %s22, 1
      %p71 = por %p69, %p70
      %p73 = scmp.ne.s32.totalorder %s56, %s72
      %p74 = scmp.eq.s32.totalorder %s22, 0
      %p75 = por %p73, %p74
      %s77 = sadd.s32 %s76, 1
      %p80 = scmp.eq.s32.totalorder %s16, 1
      %p81 = scmp.ne.s32.totalorder %s76, %s78
      %p82 = scmp.eq.s32.totalorder %s16, 0
      %p83 = por %p81, %p82
      %p84 = scmp.ne.s32.totalorder %s76, %s78
      %p85 = scmp.eq.s32.totalorder %s21, 1
      %p86 = por %p84, %p85
      %p87 = scmp.ne.s32.totalorder %s78, %s79
      %p88 = scmp.eq.s32.totalorder %s21, 0
      %p89 = por %p87, %p88
      %p90 = scmp.ne.s32.totalorder %s78, %s79
      %p91 = scmp.eq.s32.totalorder %s22, 1
      %p92 = por %p90, %p91
      %p94 = scmp.ne.s32.totalorder %s79, %s93
      %p95 = scmp.eq.s32.totalorder %s22, 0
      %p96 = por %p94, %p95
      %s98 = sadd.s32 %s97, 1
      %p101 = scmp.eq.s32.totalorder %s16, 1
      %p102 = scmp.ne.s32.totalorder %s97, %s99
      %p103 = scmp.eq.s32.totalorder %s16, 0
      %p104 = por %p102, %p103
      %p105 = scmp.ne.s32.totalorder %s97, %s99
      %p106 = scmp.eq.s32.totalorder %s21, 1
      %p107 = por %p105, %p106
      %p108 = scmp.ne.s32.totalorder %s99, %s100
      %p109 = scmp.eq.s32.totalorder %s21, 0
      %p110 = por %p108, %p109
      %p111 = scmp.ne.s32.totalorder %s99, %s100
      %p112 = scmp.eq.s32.totalorder %s22, 1
      %p113 = por %p111, %p112
      %p115 = scmp.ne.s32.totalorder %s100, %s114
      %p116 = scmp.eq.s32.totalorder %s22, 0
      %p117 = por %p115, %p116
      %s119 = sadd.s32 %s118, 1
      %p122 = scmp.eq.s32.totalorder %s16, 1
      %p123 = scmp.ne.s32.totalorder %s118, %s120
      %p124 = scmp.eq.s32.totalorder %s16, 0
      %p125 = por %p123, %p124
      %p126 = scmp.ne.s32.totalorder %s118, %s120
      %p127 = scmp.eq.s32.totalorder %s21, 1
      %p128 = por %p126, %p127
      %p129 = scmp.ne.s32.totalorder %s120, %s121
      %p130 = scmp.eq.s32.totalorder %s21, 0
      %p131 = por %p129, %p130
      %p132 = scmp.ne.s32.totalorder %s120, %s121
      %p133 = scmp.eq.s32.totalorder %s22, 1
      %p134 = por %p132, %p133
      %p136 = scmp.ne.s32.totalorder %s121, %s135
      %p137 = scmp.eq.s32.totalorder %s22, 0
      %p138 = por %p136, %p137
      %s140 = sadd.s32 %s139, 1
      %p143 = scmp.eq.s32.totalorder %s16, 1
      %p144 = scmp.ne.s32.totalorder %s139, %s141
      %p145 = scmp.eq.s32.totalorder %s16, 0
      %p146 = por %p144, %p145
      %p147 = scmp.ne.s32.totalorder %s139, %s141
      %p148 = scmp.eq.s32.totalorder %s21, 1
      %p149 = por %p147, %p148
      %p150 = scmp.ne.s32.totalorder %s141, %s142
      %p151 = scmp.eq.s32.totalorder %s21, 0
      %p152 = por %p150, %p151
      %p153 = scmp.ne.s32.totalorder %s141, %s142
      %p154 = scmp.eq.s32.totalorder %s22, 1
      %p155 = por %p153, %p154
      %p157 = scmp.ne.s32.totalorder %s142, %s156
      %p158 = scmp.eq.s32.totalorder %s22, 0
      %p159 = por %p157, %p158
      %s161 = sadd.s32 %s160, 1
      %p164 = scmp.eq.s32.totalorder %s16, 1
      %p165 = scmp.ne.s32.totalorder %s160, %s162
      %p166 = scmp.eq.s32.totalorder %s16, 0
      %p167 = por %p165, %p166
      %p168 = scmp.ne.s32.totalorder %s160, %s162
      %p169 = scmp.eq.s32.totalorder %s21, 1
      %p170 = por %p168, %p169
      %p171 = scmp.ne.s32.totalorder %s162, %s163
      %p172 = scmp.eq.s32.totalorder %s21, 0
      %p173 = por %p171, %p172
      %p174 = scmp.ne.s32.totalorder %s162, %s163
      %p175 = scmp.eq.s32.totalorder %s22, 1
      %p176 = por %p174, %p175
      %p178 = scmp.ne.s32.totalorder %s163, %s177
      %p179 = scmp.eq.s32.totalorder %s22, 0
      %p180 = por %p178, %p179
      %s181 = ssub.s32 %s16, %s23
      %p182 = scmp.eq.s32.totalorder %s181, 0
      %s184 = sadd.s32 %s183, 1
      %s185 = scalar_select %p182, %s183, %s184
      %p188 = pneg %p182
      %p189 = scmp.eq.s32.totalorder %s16, 1
      %p190 = por %p188, %p189
      %p191 = scmp.ne.s32.totalorder %s183, %s186
      %p192 = scmp.eq.s32.totalorder %s16, 0
      %p193 = por %p191, %p192
      %p194 = scmp.ne.s32.totalorder %s183, %s186
      %p195 = scmp.eq.s32.totalorder %s21, 1
      %p196 = por %p194, %p195
      %p197 = scmp.ne.s32.totalorder %s186, %s187
      %p198 = scmp.eq.s32.totalorder %s21, 0
      %p199 = por %p197, %p198
      %p200 = scmp.ne.s32.totalorder %s186, %s187
      %p201 = scmp.eq.s32.totalorder %s22, 1
      %p202 = por %p200, %p201
      %p204 = scmp.ne.s32.totalorder %s187, %s203
      %p205 = scmp.eq.s32.totalorder %s22, 0
      %p206 = por %p204, %p205
      %p207 = scmp.le.s32.totalorder 1, %s16
      %p208 = scmp.lt.s32.totalorder %s16, 3
      %p209 = pnand %p207, %p208
      %p210 = pneg %p209
      // Predicated region
      $region9: #{gcanet_forward.3} parent=5 // pred_check
        _
      $region10: #{gcanet_forward.3} parent=5 // pred_check_branch
        %212 = sbr.rel (%p209) target = $region12
      $region11: #{gcanet_forward.3} parent=5 // pred_region
        %s213 = ssub.s32 %s16, 1
        // Predicated region
        $region13: #{gcanet_forward.3} parent=11 // pred_check
          %p214 = pneg %p89
        $region14: #{gcanet_forward.3} parent=11 // pred_check_branch
          %216 = sbr.rel (%p214) target = $region16
        $region15: #{gcanet_forward.3} parent=11 // pred_region
          _
        $region16: #{gcanet_forward.3} parent=11 // pred_fallthru
          _
        // Predicated region
        $region17: #{gcanet_forward.3} parent=11 // pred_check
          %p217 = pneg %p110
        $region18: #{gcanet_forward.3} parent=11 // pred_check_branch
          %219 = sbr.rel (%p217) target = $region20
        $region19: #{gcanet_forward.3} parent=11 // pred_region
          _
        $region20: #{gcanet_forward.3} parent=11 // pred_fallthru
          _
        // Predicated region
        $region21: #{gcanet_forward.3} parent=11 // pred_check
          %p220 = pneg %p131
        $region22: #{gcanet_forward.3} parent=11 // pred_check_branch
          %222 = sbr.rel (%p220) target = $region24
        $region23: #{gcanet_forward.3} parent=11 // pred_region
          _
        $region24: #{gcanet_forward.3} parent=11 // pred_fallthru
          _
        // Predicated region
        $region25: #{gcanet_forward.3} parent=11 // pred_check
          %p223 = pneg %p152
        $region26: #{gcanet_forward.3} parent=11 // pred_check_branch
          %225 = sbr.rel (%p223) target = $region28
        $region27: #{gcanet_forward.3} parent=11 // pred_region
          _
        $region28: #{gcanet_forward.3} parent=11 // pred_fallthru
          _
        // Predicated region
        $region29: #{gcanet_forward.3} parent=11 // pred_check
          %p226 = pneg %p173
        $region30: #{gcanet_forward.3} parent=11 // pred_check_branch
          %228 = sbr.rel (%p226) target = $region32
        $region31: #{gcanet_forward.3} parent=11 // pred_region
          _
        $region32: #{gcanet_forward.3} parent=11 // pred_fallthru
          _
      $region12: #{gcanet_forward.3} parent=5 // pred_fallthru
        _
      %p229 = scmp.lt.s32.totalorder %s16, 2
      // Predicated region
      $region33: #{gcanet_forward.3} parent=5 // pred_check
        %p230 = pneg %p229
      $region34: #{gcanet_forward.3} parent=5 // pred_check_branch
        %232 = sbr.rel (%p230) target = $region36
      $region35: #{gcanet_forward.3} parent=5 // pred_region
        // Predicated region
        $region37: #{gcanet_forward.3} parent=35 // pred_check
          %p233 = pneg %p36
        $region38: #{gcanet_forward.3} parent=35 // pred_check_branch
          %235 = sbr.rel (%p233) target = $region40
        $region39: #{gcanet_forward.3} parent=35 // pred_region
          %p236 = scmp.lt.s32.totalorder %s16, 1
          %s237 = scalar_select %p236, %s16, 1
          %s238 = smul.addr %s237, 2
          %s239 = smul.addr %s238, 8
          %s240 = scalar_lea.vmem %s0, %s239
        $region40: #{gcanet_forward.3} parent=35 // pred_fallthru
          _
        // Predicated region
        $region41: #{gcanet_forward.3} parent=35 // pred_check
          %p241 = pneg %p62
        $region42: #{gcanet_forward.3} parent=35 // pred_check_branch
          %243 = sbr.rel (%p241) target = $region44
        $region43: #{gcanet_forward.3} parent=35 // pred_region
          %p244 = scmp.lt.s32.totalorder %s16, 1
          %s245 = scalar_select %p244, %s16, 1
          %s246 = smul.addr %s245, 4
          %s247 = smul.addr %s246, 8
          %s248 = scalar_lea.vmem %s1, %s247
        $region44: #{gcanet_forward.3} parent=35 // pred_fallthru
          _
      $region36: #{gcanet_forward.3} parent=5 // pred_fallthru
        _
      %p249 = scmp.le.s32.totalorder 1, %s16
      %p250 = scmp.lt.s32.totalorder %s16, 3
      %p251 = pnand %p249, %p250
      %p252 = pneg %p251
      // Predicated region
      $region45: #{gcanet_forward.3} parent=5 // pred_check
        _
      $region46: #{gcanet_forward.3} parent=5 // pred_check_branch
        %254 = sbr.rel (%p251) target = $region48
      $region47: #{gcanet_forward.3} parent=5 // pred_region
        %s255 = ssub.s32 %s16, 1
        %p256 = scmp.lt.s32.totalorder %s21, 1
        %s257 = scalar_select %p256, %s21, 1
        %s258 = smul.addr %s257, 2
        %s259 = smul.addr %s258, 8
        %s260 = scalar_lea.vmem %s0, %s259
        %p261 = pneg %p42
        %p262 = pneg %p39
        %p263 = scmp.lt.s32.totalorder %s21, 1
        %s264 = scalar_select %p263, %s21, 1
        %s265 = smul.addr %s264, 4
        %s266 = smul.addr %s265, 8
        %s267 = scalar_lea.vmem %s1, %s266
        %p268 = pneg %p68
        %p269 = pneg %p65
        %p270 = pneg %p89
        %p271 = pneg %p86
        %p272 = pneg %p110
        %p273 = pneg %p107
        %p274 = pneg %p131
        %p275 = pneg %p128
        %p276 = pneg %p152
        %p277 = pneg %p149
        %p278 = pneg %p173
        %p279 = pneg %p170
        %p280 = pneg %p199
        %p281 = pneg %p196
        %s282 = sand.u32 %s186, 1
        %s283 = scalar_lea.sflag [#allocation3], %s282
        %s284 = sand.u32 %s186, 1
        %s285 = scalar_lea.vmem [#allocation2], %s284
        %p286 = scmp.lt.s32.totalorder %s21, 1
        %s287 = scalar_select %p286, %s21, 1
        %s288 = smul.addr %s287, 2
        %s289 = smul.addr %s288, 8
        %s290 = scalar_lea.vmem %s0, %s289
        %p291 = scmp.lt.s32.totalorder %s21, 1
        %s292 = scalar_select %p291, %s21, 1
        %s293 = smul.addr %s292, 4
        %s294 = smul.addr %s293, 8
        %s295 = scalar_lea.vmem %s1, %s294
        %v296 = vld [vmem:[%s290] sm:$0xff]
        %v297 = vld [vmem:[%s290 + $0x8] sm:$0xf]
        %299 = vrot.lane.b32.xlu0 %v296, 96
        %v300 = vpop.permute.xlu0 %299
        %v302 = vmul.f32 %v296, %v300
        %vm303 = vcmask 259072
        %v304 = vsel %vm303, %v302, 0.0
        %305 = vadd.xlane.f32.xlu0 %v304
        %v306 = vpop.xlane.xlu0 %305
        %vm307 = vcmask 1045504
        %v308 = vsel %vm307, %v306, 0.0
        %v309 = vrot.slane %v308, 4
        %v310 = vadd.f32 %v308, %v309
        %v311 = vrot.slane %v310, 2
        %v312 = vadd.f32 %v310, %v311
        %v313 = vrot.slane %v312, 1
        %v314 = vadd.f32 %v312, %v313
        %v315 = vmul.f32 %v314, 0.07216878
        %vm317 = vcmask 1041408
        %v318 = vrot.slane %v296, 6
        %v319 = vrot.slane %v297, 6
        %v320 = vsel %vm317, %v318, %v319
        %321 = vrot.lane.b32.xlu0 %v320, 96
        %v322 = vpop.permute.xlu0 %321
        %v324 = vmul.f32 %v296, %v322
        %v325 = vsel %vm303, %v324, 0.0
        %326 = vadd.xlane.f32.xlu0 %v325
        %v327 = vpop.xlane.xlu0 %326
        %v328 = vsel %vm307, %v327, 0.0
        %v329 = vrot.slane %v328, 4
        %v330 = vadd.f32 %v328, %v329
        %v331 = vrot.slane %v330, 2
        %v332 = vadd.f32 %v330, %v331
        %v333 = vrot.slane %v332, 1
        %v334 = vadd.f32 %v332, %v333
        %v335 = vmul.f32 %v334, 0.07216878
        %v336 = vrot.slane %v296, 2
        %337 = vrot.lane.b32.xlu0 %v336, 96
        %v338 = vpop.permute.xlu0 %337
        %v340 = vmul.f32 %v296, %v338
        %v341 = vmul.f32 %v297, %v338
        %vm342 = vcmask 261126
        %v343 = vsel %vm342, %v340, 0.0
        %344 = vadd.xlane.f32.xlu0 %v343
        %v345 = vpop.xlane.xlu0 %344
        %vm346 = vcmask 257024
        %v347 = vsel %vm346, %v341, 0.0
        %348 = vadd.xlane.f32.xlu0 %v347
        %v349 = vpop.xlane.xlu0 %348
        %v352 = vrot.slane %v345, 6
        %v353 = vrot.slane %v349, 6
        %v354 = vsel %vm317, %v352, %v353
        %v356 = vsel %vm307, %v354, 0.0
        %v357 = vrot.slane %v356, 4
        %v358 = vadd.f32 %v356, %v357
        %v359 = vrot.slane %v358, 2
        %v360 = vadd.f32 %v358, %v359
        %v361 = vrot.slane %v360, 1
        %v362 = vadd.f32 %v360, %v361
        %v363 = vmul.f32 %v362, 0.07216878
        %364 = vrot.lane.b32.xlu0 %v297, 96
        %v365 = vpop.permute.xlu0 %364
        %v367 = vmul.f32 %v297, %v365
        %v368 = vsel %vm342, %v302, 0.0
        %369 = vadd.xlane.f32.xlu0 %v368
        %v370 = vpop.xlane.xlu0 %369
        %v371 = vsel %vm346, %v367, 0.0
        %372 = vadd.xlane.f32.xlu0 %v371
        %v373 = vpop.xlane.xlu0 %372
        %v376 = vrot.slane %v370, 6
        %v377 = vrot.slane %v373, 6
        %v378 = vsel %vm317, %v376, %v377
        %v380 = vsel %vm307, %v378, 0.0
        %v381 = vrot.slane %v380, 4
        %v382 = vadd.f32 %v380, %v381
        %v383 = vrot.slane %v382, 2
        %v384 = vadd.f32 %v382, %v383
        %v385 = vrot.slane %v384, 1
        %v386 = vadd.f32 %v384, %v385
        %v387 = vmul.f32 %v386, 0.07216878
        %v388 = vmax.f32 %v315, %v335
        %v389 = vmax.f32 %v363, %v387
        %v390 = vsub.f32 %v315, %v388
        %v391 = vmul.f32 %v390, 1.442695
        %v392 = vpow.pop %v391
        %v393 = vsub.f32 %v335, %v388
        %v394 = vmul.f32 %v393, 1.442695
        %v395 = vpow.pop %v394
        %v396 = vsub.f32 %v363, %v389
        %v397 = vmul.f32 %v396, 1.442695
        %v398 = vpow.pop %v397
        %v399 = vsub.f32 %v387, %v389
        %v400 = vmul.f32 %v399, 1.442695
        %v401 = vpow.pop %v400
        %v402 = vadd.f32 %v392, %v395
        %v403 = vadd.f32 %v398, %v401
        %v404 = vrcp.pop %v402
        %v405 = vmul.f32 %v392, %v404
        %v406 = vmul.f32 %v395, %v404
        %v407 = vrcp.pop %v403
        %v408 = vmul.f32 %v398, %v407
        %v409 = vmul.f32 %v401, %v407
        %v410 = vld [vmem:[%s295] sm:$0xff]
        %v411 = vld [vmem:[%s295 + $0x8] sm:$0xf]
        %s412 = scalar_lea.vmem %s295, 16
        %v413 = vld [vmem:[%s412] sm:$0xff]
        %v414 = vld [vmem:[%s412 + $0x8] sm:$0xf]
        %v415 = vmul.f32 %v405, %v410
        %v416 = vmul.f32 %v405, %v411
        %v417 = vmul.f32 %v406, %v413
        %v418 = vmul.f32 %v406, %v414
        %v419 = vadd.f32 %v415, %v417
        %v420 = vadd.f32 %v416, %v418
        %v421 = vmul.f32 %v408, %v410
        %v422 = vmul.f32 %v408, %v411
        %v423 = vmul.f32 %v409, %v413
        %v424 = vmul.f32 %v409, %v414
        %v425 = vadd.f32 %v421, %v423
        %v426 = vadd.f32 %v422, %v424
        %v427 = vld [vmem:[%s2] sm:$0xff]
        %v428 = vld [vmem:[%s2 + $0x8] sm:$0xff]
        %s429 = scalar_lea.vmem %s2, 16
        %v430 = vld [vmem:[%s429] sm:$0xff]
        %v431 = vld [vmem:[%s429 + $0x8] sm:$0xff]
        %vm432 = vcmask 130048
        %v434 = vsel %vm432, %v425, 0
        %v437 = vsel %vm432, %v426, 0
        %439 = vmatprep.subr.mxu0 0.0
        %440 = vmatpush1.msra.mxu0 %v430
        %441 = vmatprep.subr.mxu0 0.0
        %442 = vmatpush1.msra.mxu0 %v431
        %443 = vmatprep.subr.mxu0 0.0
        %444 = vmatpush1.msra.mxu0 0.0
        %445 = vmatprep.subr.mxu0 0.0
        %446 = vmatpush1.msra.mxu0 0.0
        %447 = vmatprep.subr.mxu0 0.0
        %448 = vmatpush1.msra.mxu0 0.0
        %449 = vmatprep.subr.mxu0 0.0
        %450 = vmatpush1.msra.mxu0 0.0
        %451 = vmatprep.subr.mxu0 0.0
        %452 = vmatpush1.msra.mxu0 0.0
        %453 = vmatprep.subr.mxu0 0.0
        %454 = vmatpush1.msra.mxu0 0.0
        %455 = vmatprep.subr.mxu0 0.0
        %456 = vmatpush1.msra.mxu0 0.0
        %457 = vmatprep.subr.mxu0 0.0
        %458 = vmatpush1.msra.mxu0 0.0
        %459 = vmatprep.subr.mxu0 0.0
        %460 = vmatpush1.msra.mxu0 0.0
        %461 = vmatprep.subr.mxu0 0.0
        %462 = vmatpush1.msra.mxu0 0.0
        %463 = vmatprep.subr.mxu0 0.0
        %464 = vmatpush1.msra.mxu0 0.0
        %465 = vmatprep.subr.mxu0 0.0
        %466 = vmatpush1.msra.mxu0 0.0
        %467 = vmatprep.subr.mxu0 0.0
        %468 = vmatpush1.msra.mxu0 0.0
        %469 = vmatprep.subr.mxu0 0.0
        %470 = vmatpush1.msra.mxu0 0.0
        %471 = vmatprep.subr.mxu0 0.0
        %472 = vmatpush1.msra.mxu0 0.0
        %473 = vmatprep.subr.mxu0 0.0
        %474 = vmatpush1.msra.mxu0 0.0
        %475 = vmatprep.subr.mxu0 0.0
        %476 = vmatpush1.msra.mxu0 0.0
        %477 = vmatprep.subr.mxu0 0.0
        %478 = vmatpush1.msra.mxu0 0.0
        %479 = vmatprep.subr.mxu0 0.0
        %480 = vmatpush1.msra.mxu0 0.0
        %481 = vmatprep.subr.mxu0 0.0
        %482 = vmatpush1.msra.mxu0 0.0
        %483 = vmatprep.subr.mxu0 0.0
        %484 = vmatpush1.msra.mxu0 0.0
        %485 = vmatprep.subr.mxu0 0.0
        %486 = vmatpush1.msra.mxu0 0.0
        %487 = vmatprep.subr.mxu0 0.0
        %488 = vmatpush1.msra.mxu0 0.0
        %489 = vmatprep.subr.mxu0 0.0
        %490 = vmatpush1.msra.mxu0 0.0
        %491 = vmatprep.subr.mxu0 0.0
        %492 = vmatpush1.msra.mxu0 0.0
        %493 = vmatprep.subr.mxu0 0.0
        %494 = vmatpush1.msra.mxu0 0.0
        %495 = vmatprep.subr.mxu0 0.0
        %496 = vmatpush1.msra.mxu0 0.0
        %497 = vmatprep.subr.mxu0 0.0
        %498 = vmatpush1.msra.mxu0 0.0
        %499 = vmatprep.subr.mxu0 0.0
        %500 = vmatpush1.msra.mxu0 0.0
        %501 = vmatprep.subr.mxu0 0.0
        %502 = vmatpush1.msra.mxu0 0.0
        %503 = vmatprep.mubr.f32.mxu0 0.0
        %504 = vmatmul.mubr.f32.gmra.mrb[0].mxu0 %v434
        %v505 = vpop.f32.mrb[0].mxu0
        %v506 = vadd.f32 0.0, %v505
        %v507 = vpop.f32.mrb[0].mxu0
        %508 = vmatprep.mubr.f32.mxu0 0.0
        %509 = vmatmul.mubr.f32.gmra.mrb[0].mxu0 %v437
        %v510 = vpop.f32.mrb[0].mxu0
        %v511 = vadd.f32 0.0, %v510
        %v512 = vpop.f32.mrb[0].mxu0
        %513 = vdwg.mxu0
        %v515 = vsel %vm432, %v419, 0
        %v518 = vsel %vm432, %v420, 0
        %520 = vmatprep.subr.mxu0 0.0
        %521 = vmatpush1.msra.mxu0 %v427
        %522 = vmatprep.subr.mxu0 0.0
        %523 = vmatpush1.msra.mxu0 %v428
        %524 = vmatprep.subr.mxu0 0.0
        %525 = vmatpush1.msra.mxu0 0.0
        %526 = vmatprep.subr.mxu0 0.0
        %527 = vmatpush1.msra.mxu0 0.0
        %528 = vmatprep.subr.mxu0 0.0
        %529 = vmatpush1.msra.mxu0 0.0
        %530 = vmatprep.subr.mxu0 0.0
        %531 = vmatpush1.msra.mxu0 0.0
        %532 = vmatprep.subr.mxu0 0.0
        %533 = vmatpush1.msra.mxu0 0.0
        %534 = vmatprep.subr.mxu0 0.0
        %535 = vmatpush1.msra.mxu0 0.0
        %536 = vmatprep.subr.mxu0 0.0
        %537 = vmatpush1.msra.mxu0 0.0
        %538 = vmatprep.subr.mxu0 0.0
        %539 = vmatpush1.msra.mxu0 0.0
        %540 = vmatprep.subr.mxu0 0.0
        %541 = vmatpush1.msra.mxu0 0.0
        %542 = vmatprep.subr.mxu0 0.0
        %543 = vmatpush1.msra.mxu0 0.0
        %544 = vmatprep.subr.mxu0 0.0
        %545 = vmatpush1.msra.mxu0 0.0
        %546 = vmatprep.subr.mxu0 0.0
        %547 = vmatpush1.msra.mxu0 0.0
        %548 = vmatprep.subr.mxu0 0.0
        %549 = vmatpush1.msra.mxu0 0.0
        %550 = vmatprep.subr.mxu0 0.0
        %551 = vmatpush1.msra.mxu0 0.0
        %552 = vmatprep.subr.mxu0 0.0
        %553 = vmatpush1.msra.mxu0 0.0
        %554 = vmatprep.subr.mxu0 0.0
        %555 = vmatpush1.msra.mxu0 0.0
        %556 = vmatprep.subr.mxu0 0.0
        %557 = vmatpush1.msra.mxu0 0.0
        %558 = vmatprep.subr.mxu0 0.0
        %559 = vmatpush1.msra.mxu0 0.0
        %560 = vmatprep.subr.mxu0 0.0
        %561 = vmatpush1.msra.mxu0 0.0
        %562 = vmatprep.subr.mxu0 0.0
        %563 = vmatpush1.msra.mxu0 0.0
        %564 = vmatprep.subr.mxu0 0.0
        %565 = vmatpush1.msra.mxu0 0.0
        %566 = vmatprep.subr.mxu0 0.0
        %567 = vmatpush1.msra.mxu0 0.0
        %568 = vmatprep.subr.mxu0 0.0
        %569 = vmatpush1.msra.mxu0 0.0
        %570 = vmatprep.subr.mxu0 0.0
        %571 = vmatpush1.msra.mxu0 0.0
        %572 = vmatprep.subr.mxu0 0.0
        %573 = vmatpush1.msra.mxu0 0.0
        %574 = vmatprep.subr.mxu0 0.0
        %575 = vmatpush1.msra.mxu0 0.0
        %576 = vmatprep.subr.mxu0 0.0
        %577 = vmatpush1.msra.mxu0 0.0
        %578 = vmatprep.subr.mxu0 0.0
        %579 = vmatpush1.msra.mxu0 0.0
        %580 = vmatprep.subr.mxu0 0.0
        %581 = vmatpush1.msra.mxu0 0.0
        %582 = vmatprep.subr.mxu0 0.0
        %583 = vmatpush1.msra.mxu0 0.0
        %584 = vmatprep.mubr.f32.mxu0 0.0
        %585 = vmatmul.mubr.f32.gmra.mrb[0].mxu0 %v515
        %v586 = vpop.f32.mrb[0].mxu0
        %v587 = vadd.f32 %v506, %v586
        %v588 = vpop.f32.mrb[0].mxu0
        %589 = vmatprep.mubr.f32.mxu0 0.0
        %590 = vmatmul.mubr.f32.gmra.mrb[0].mxu0 %v518
        %v591 = vpop.f32.mrb[0].mxu0
        %v592 = vadd.f32 %v511, %v591
        %v593 = vpop.f32.mrb[0].mxu0
        %594 = vdwg.mxu0
        %v595 = vld [vmem:[%s3] sm:$0x1]
        %v597 = vlaneseq
        %v598 = vshrl.u32 %v597, 7
        %v599 = vsub.s32 0, %v598
        %v600 = vrot.slane %v595, %v599
        %v602 = vadd.f32 %v587, %v600
        %v603 = vadd.f32 %v592, %v600
        %v604 = vadd.f32 %v602, 3.0
        %v605 = vadd.f32 %v603, 3.0
        %v606 = vmax.f32 %v604, 0.0
        %v607 = vmax.f32 %v605, 0.0
        %v608 = vmin.f32 %v606, 6.0
        %v609 = vmin.f32 %v607, 6.0
        %v610 = vmul.f32 %v608, 0.16666667
        %v611 = vmul.f32 %v609, 0.16666667
        %v612 = vmul.f32 %v602, %v610
        %v613 = vmul.f32 %v603, %v611
        %v614 = vld [vmem:[%s4] sm:$0xff]
        %v615 = vld [vmem:[%s4 + $0x8] sm:$0xff]
        %v616 = vld [vmem:[%s4 + $0x10] sm:$0xff]
        %vm617 = vcmask 195584
        %v619 = vsel %vm617, %v612, 0
        %v622 = vsel %vm617, %v613, 0
        %624 = vmatprep.subr.mxu0 0.0
        %625 = vmatpush1.msra.mxu0 %v614
        %626 = vmatprep.subr.mxu0 0.0
        %627 = vmatpush1.msra.mxu0 %v615
        %628 = vmatprep.subr.mxu0 0.0
        %629 = vmatpush1.msra.mxu0 %v616
        %630 = vmatprep.subr.mxu0 0.0
        %631 = vmatpush1.msra.mxu0 0.0
        %632 = vmatprep.subr.mxu0 0.0
        %633 = vmatpush1.msra.mxu0 0.0
        %634 = vmatprep.subr.mxu0 0.0
        %635 = vmatpush1.msra.mxu0 0.0
        %636 = vmatprep.subr.mxu0 0.0
        %637 = vmatpush1.msra.mxu0 0.0
        %638 = vmatprep.subr.mxu0 0.0
        %639 = vmatpush1.msra.mxu0 0.0
        %640 = vmatprep.subr.mxu0 0.0
        %641 = vmatpush1.msra.mxu0 0.0
        %642 = vmatprep.subr.mxu0 0.0
        %643 = vmatpush1.msra.mxu0 0.0
        %644 = vmatprep.subr.mxu0 0.0
        %645 = vmatpush1.msra.mxu0 0.0
        %646 = vmatprep.subr.mxu0 0.0
        %647 = vmatpush1.msra.mxu0 0.0
        %648 = vmatprep.subr.mxu0 0.0
        %649 = vmatpush1.msra.mxu0 0.0
        %650 = vmatprep.subr.mxu0 0.0
        %651 = vmatpush1.msra.mxu0 0.0
        %652 = vmatprep.subr.mxu0 0.0
        %653 = vmatpush1.msra.mxu0 0.0
        %654 = vmatprep.subr.mxu0 0.0
        %655 = vmatpush1.msra.mxu0 0.0
        %656 = vmatprep.subr.mxu0 0.0
        %657 = vmatpush1.msra.mxu0 0.0
        %658 = vmatprep.subr.mxu0 0.0
        %659 = vmatpush1.msra.mxu0 0.0
        %660 = vmatprep.subr.mxu0 0.0
        %661 = vmatpush1.msra.mxu0 0.0
        %662 = vmatprep.subr.mxu0 0.0
        %663 = vmatpush1.msra.mxu0 0.0
        %664 = vmatprep.subr.mxu0 0.0
        %665 = vmatpush1.msra.mxu0 0.0
        %666 = vmatprep.subr.mxu0 0.0
        %667 = vmatpush1.msra.mxu0 0.0
        %668 = vmatprep.subr.mxu0 0.0
        %669 = vmatpush1.msra.mxu0 0.0
        %670 = vmatprep.subr.mxu0 0.0
        %671 = vmatpush1.msra.mxu0 0.0
        %672 = vmatprep.subr.mxu0 0.0
        %673 = vmatpush1.msra.mxu0 0.0
        %674 = vmatprep.subr.mxu0 0.0
        %675 = vmatpush1.msra.mxu0 0.0
        %676 = vmatprep.subr.mxu0 0.0
        %677 = vmatpush1.msra.mxu0 0.0
        %678 = vmatprep.subr.mxu0 0.0
        %679 = vmatpush1.msra.mxu0 0.0
        %680 = vmatprep.subr.mxu0 0.0
        %681 = vmatpush1.msra.mxu0 0.0
        %682 = vmatprep.subr.mxu0 0.0
        %683 = vmatpush1.msra.mxu0 0.0
        %684 = vmatprep.subr.mxu0 0.0
        %685 = vmatpush1.msra.mxu0 0.0
        %686 = vmatprep.subr.mxu0 0.0
        %687 = vmatpush1.msra.mxu0 0.0
        %688 = vmatprep.mubr.f32.mxu0 0.0
        %689 = vmatmul.mubr.f32.gmra.mrb[0].mxu0 %v619
        %v690 = vpop.f32.mrb[0].mxu0
        %v691 = vadd.f32 0.0, %v690
        %v692 = vpop.f32.mrb[0].mxu0
        %693 = vmatprep.mubr.f32.mxu0 0.0
        %694 = vmatmul.mubr.f32.gmra.mrb[0].mxu0 %v622
        %v695 = vpop.f32.mrb[0].mxu0
        %v696 = vadd.f32 0.0, %v695
        %v697 = vpop.f32.mrb[0].mxu0
        %698 = vdwg.mxu0
        %v699 = vmax.f32 %v691, 0.0
        %v700 = vmax.f32 %v696, 0.0
        %v701 = vsel %vm617, %v699, 0.0
        %vm702 = vcmask 191488
        %v703 = vsel %vm702, %v700, 0.0
        %v704 = vadd.f32 %v701, %v703
        %v705 = vrot.slane %v704, 4
        %v706 = vadd.f32 %v704, %v705
        %v707 = vrot.slane %v706, 2
        %v708 = vadd.f32 %v706, %v707
        %v709 = vrot.slane %v708, 1
        %v710 = vadd.f32 %v708, %v709
        %v711 = vrcp.pop 12.0
        %v712 = vmul.f32 %v710, %v711
        %v713 = vld [vmem:[%s5] sm:$0xff]
        %v714 = vld [vmem:[%s5 + $0x8] sm:$0xff]
        %v715 = vld [vmem:[%s5 + $0x10] sm:$0xff]
        %v717 = vsel %vm617, %v712, 0
        %719 = vmatprep.subr.mxu0 0.0
        %720 = vmatpush1.msra.mxu0 %v713
        %721 = vmatprep.subr.mxu0 0.0
        %722 = vmatpush1.msra.mxu0 %v714
        %723 = vmatprep.subr.mxu0 0.0
        %724 = vmatpush1.msra.mxu0 %v715
        %725 = vmatprep.subr.mxu0 0.0
        %726 = vmatpush1.msra.mxu0 0.0
        %727 = vmatprep.subr.mxu0 0.0
        %728 = vmatpush1.msra.mxu0 0.0
        %729 = vmatprep.subr.mxu0 0.0
        %730 = vmatpush1.msra.mxu0 0.0
        %731 = vmatprep.subr.mxu0 0.0
        %732 = vmatpush1.msra.mxu0 0.0
        %733 = vmatprep.subr.mxu0 0.0
        %734 = vmatpush1.msra.mxu0 0.0
        %735 = vmatprep.subr.mxu0 0.0
        %736 = vmatpush1.msra.mxu0 0.0
        %737 = vmatprep.subr.mxu0 0.0
        %738 = vmatpush1.msra.mxu0 0.0
        %739 = vmatprep.subr.mxu0 0.0
        %740 = vmatpush1.msra.mxu0 0.0
        %741 = vmatprep.subr.mxu0 0.0
        %742 = vmatpush1.msra.mxu0 0.0
        %743 = vmatprep.subr.mxu0 0.0
        %744 = vmatpush1.msra.mxu0 0.0
        %745 = vmatprep.subr.mxu0 0.0
        %746 = vmatpush1.msra.mxu0 0.0
        %747 = vmatprep.subr.mxu0 0.0
        %748 = vmatpush1.msra.mxu0 0.0
        %749 = vmatprep.subr.mxu0 0.0
        %750 = vmatpush1.msra.mxu0 0.0
        %751 = vmatprep.subr.mxu0 0.0
        %752 = vmatpush1.msra.mxu0 0.0
        %753 = vmatprep.subr.mxu0 0.0
        %754 = vmatpush1.msra.mxu0 0.0
        %755 = vmatprep.subr.mxu0 0.0
        %756 = vmatpush1.msra.mxu0 0.0
        %757 = vmatprep.subr.mxu0 0.0
        %758 = vmatpush1.msra.mxu0 0.0
        %759 = vmatprep.subr.mxu0 0.0
        %760 = vmatpush1.msra.mxu0 0.0
        %761 = vmatprep.subr.mxu0 0.0
        %762 = vmatpush1.msra.mxu0 0.0
        %763 = vmatprep.subr.mxu0 0.0
        %764 = vmatpush1.msra.mxu0 0.0
        %765 = vmatprep.subr.mxu0 0.0
        %766 = vmatpush1.msra.mxu0 0.0
        %767 = vmatprep.subr.mxu0 0.0
        %768 = vmatpush1.msra.mxu0 0.0
        %769 = vmatprep.subr.mxu0 0.0
        %770 = vmatpush1.msra.mxu0 0.0
        %771 = vmatprep.subr.mxu0 0.0
        %772 = vmatpush1.msra.mxu0 0.0
        %773 = vmatprep.subr.mxu0 0.0
        %774 = vmatpush1.msra.mxu0 0.0
        %775 = vmatprep.subr.mxu0 0.0
        %776 = vmatpush1.msra.mxu0 0.0
        %777 = vmatprep.subr.mxu0 0.0
        %778 = vmatpush1.msra.mxu0 0.0
        %779 = vmatprep.subr.mxu0 0.0
        %780 = vmatpush1.msra.mxu0 0.0
        %781 = vmatprep.subr.mxu0 0.0
        %782 = vmatpush1.msra.mxu0 0.0
        %783 = vmatprep.mubr.f32.mxu0 0.0
        %784 = vmatmul.mubr.f32.gmra.mrb[0].mxu0 %v717
        %v785 = vpop.f32.mrb[0].mxu0
        %v786 = vadd.f32 0.0, %v785
        %v787 = vpop.f32.mrb[0].mxu0
        %788 = vdwg.mxu0
        %v789 = vadd.f32 %v786, 3.0
        %v790 = vmax.f32 %v789, 0.0
        %v791 = vmin.f32 %v790, 6.0
        %v792 = vmul.f32 %v791, 0.16666667
        %v793 = vmul.f32 %v786, %v792
        %v794 = vld [vmem:[%s6] sm:$0xff]
        %v795 = vld [vmem:[%s6 + $0x8] sm:$0xff]
        %v796 = vld [vmem:[%s6 + $0x10] sm:$0x3]
        %vm797 = vcmask 146432
        %v799 = vsel %vm797, %v793, 0
        %v802 = vsel %vm317, %v796, 0
        %804 = vmatprep.subr.mxu0 0.0
        %805 = vmatpush1.msra.mxu0 %v794
        %806 = vmatprep.subr.mxu0 0.0
        %807 = vmatpush1.msra.mxu0 %v795
        %808 = vmatprep.subr.mxu0 0.0
        %809 = vmatpush1.msra.mxu0 %v802
        %810 = vmatprep.subr.mxu0 0.0
        %811 = vmatpush1.msra.mxu0 0.0
        %812 = vmatprep.subr.mxu0 0.0
        %813 = vmatpush1.msra.mxu0 0.0
        %814 = vmatprep.subr.mxu0 0.0
        %815 = vmatpush1.msra.mxu0 0.0
        %816 = vmatprep.subr.mxu0 0.0
        %817 = vmatpush1.msra.mxu0 0.0
        %818 = vmatprep.subr.mxu0 0.0
        %819 = vmatpush1.msra.mxu0 0.0
        %820 = vmatprep.subr.mxu0 0.0
        %821 = vmatpush1.msra.mxu0 0.0
        %822 = vmatprep.subr.mxu0 0.0
        %823 = vmatpush1.msra.mxu0 0.0
        %824 = vmatprep.subr.mxu0 0.0
        %825 = vmatpush1.msra.mxu0 0.0
        %826 = vmatprep.subr.mxu0 0.0
        %827 = vmatpush1.msra.mxu0 0.0
        %828 = vmatprep.subr.mxu0 0.0
        %829 = vmatpush1.msra.mxu0 0.0
        %830 = vmatprep.subr.mxu0 0.0
        %831 = vmatpush1.msra.mxu0 0.0
        %832 = vmatprep.subr.mxu0 0.0
        %833 = vmatpush1.msra.mxu0 0.0
        %834 = vmatprep.subr.mxu0 0.0
        %835 = vmatpush1.msra.mxu0 0.0
        %836 = vmatprep.subr.mxu0 0.0
        %837 = vmatpush1.msra.mxu0 0.0
        %838 = vmatprep.subr.mxu0 0.0
        %839 = vmatpush1.msra.mxu0 0.0
        %840 = vmatprep.subr.mxu0 0.0
        %841 = vmatpush1.msra.mxu0 0.0
        %842 = vmatprep.subr.mxu0 0.0
        %843 = vmatpush1.msra.mxu0 0.0
        %844 = vmatprep.subr.mxu0 0.0
        %845 = vmatpush1.msra.mxu0 0.0
        %846 = vmatprep.subr.mxu0 0.0
        %847 = vmatpush1.msra.mxu0 0.0
        %848 = vmatprep.subr.mxu0 0.0
        %849 = vmatpush1.msra.mxu0 0.0
        %850 = vmatprep.subr.mxu0 0.0
        %851 = vmatpush1.msra.mxu0 0.0
        %852 = vmatprep.subr.mxu0 0.0
        %853 = vmatpush1.msra.mxu0 0.0
        %854 = vmatprep.subr.mxu0 0.0
        %855 = vmatpush1.msra.mxu0 0.0
        %856 = vmatprep.subr.mxu0 0.0
        %857 = vmatpush1.msra.mxu0 0.0
        %858 = vmatprep.subr.mxu0 0.0
        %859 = vmatpush1.msra.mxu0 0.0
        %860 = vmatprep.subr.mxu0 0.0
        %861 = vmatpush1.msra.mxu0 0.0
        %862 = vmatprep.subr.mxu0 0.0
        %863 = vmatpush1.msra.mxu0 0.0
        %864 = vmatprep.subr.mxu0 0.0
        %865 = vmatpush1.msra.mxu0 0.0
        %866 = vmatprep.subr.mxu0 0.0
        %867 = vmatpush1.msra.mxu0 0.0
        %868 = vmatprep.mubr.f32.mxu0 0.0
        %869 = vmatmul.mubr.f32.gmra.mrb[0].mxu0 %v799
        %v870 = vpop.f32.mrb[0].mxu0
        %v871 = vadd.f32 0.0, %v870
        %v872 = vpop.f32.mrb[0].mxu0
        %873 = vdwg.mxu0
        %vm874 = vcmask 40960
        %875 = vst.msk [vmem:[%s285] sm:$0x1] %vm874, %v871
        %s876 = sand.u32 %s186, 1
        %s877 = scalar_lea.sflag [#allocation3], %s876
        %s878 = sand.u32 %s186, 1
        %s879 = scalar_lea.vmem [#allocation2], %s878
        // Predicated region
        $region49: #{gcanet_forward.3} parent=47 // pred_check
          %p880 = pneg %p196
        $region50: #{gcanet_forward.3} parent=47 // pred_check_branch
          %882 = sbr.rel (%p880) target = $region52
        $region51: #{gcanet_forward.3} parent=47 // pred_region
          %s884 = ssub.s32 16, 16
          %885 = vsyncadd %s877, %s884
          %s886 = smul.addr %s21, 16
          %s887 = scalar_lea.hbm %s7, %s886
          %s889 = sshll.u32 %s879, 4
          %s890 = int_to_ptr.vmem [resolvable:$true] %s889
          %892 = dma.vmem_to_hbm [thread:$0]  %s890, 16, %s887, %s877
        $region52: #{gcanet_forward.3} parent=47 // pred_fallthru
          _
      $region48: #{gcanet_forward.3} parent=5 // pred_fallthru
        _
      %p893 = scmp.le.s32.totalorder 2, %s16
      // Predicated region
      $region53: #{gcanet_forward.3} parent=5 // pred_check
        %p894 = pneg %p893
      $region54: #{gcanet_forward.3} parent=5 // pred_check_branch
        %896 = sbr.rel (%p894) target = $region56
      $region55: #{gcanet_forward.3} parent=5 // pred_region
        %s897 = ssub.s32 %s16, 2
        // Predicated region
        $region57: #{gcanet_forward.3} parent=55 // pred_check
          %p898 = pneg %p202
        $region58: #{gcanet_forward.3} parent=55 // pred_check_branch
          %900 = sbr.rel (%p898) target = $region60
        $region59: #{gcanet_forward.3} parent=55 // pred_region
          %s901 = sand.u32 %s187, 1
          %s902 = scalar_lea.sflag [#allocation3], %s901
          %s903 = sand.u32 %s187, 1
          %s904 = scalar_lea.vmem [#allocation2], %s903
          %905 = dma.done %s902, 16
        $region60: #{gcanet_forward.3} parent=55 // pred_fallthru
          _
      $region56: #{gcanet_forward.3} parent=5 // pred_fallthru
        _
    $region6: #{gcanet_forward.3} parent=1 // loop_footer
      %s20 = sadd.s32 1, %s16
    $region7: #{gcanet_forward.3} parent=1 // loop_footer_branch
      %15 = sbr.rel target = $region3
    $region8: #{gcanet_forward.3} parent=1 // loop_exit
      _
    %906 = vsyncpa [#allocation3], 1
    %s907 = scalar_lea.sflag [#allocation3], 1
    %908 = vsyncpa %s907, 1

// kernel: gcanet_forward.2
$region0: #{gcanet_forward.2}
  #allocation0 [shape = 'u32[]', space=smem, size = 0x4, offset = 0x4, fixed_abs, tag = 'smem constant byte address 0x4 - core index']
  #allocation1 [shape = 'u32[144,128]{1,0:T(1,128)}', space=vmem, size = 0x12000, scoped, tag = 'internal scratch']
  %s0 = inlined_call_operand.vmem [shape: f32[2,46,20], index: 0, kind: input, shape index: {}]
  %s1 = inlined_call_operand.vmem [shape: f32[20,16], index: 1, kind: input, shape index: {}]
  %s2 = inlined_call_operand.vmem [shape: f32[48,46], index: 2, kind: input, shape index: {}]
  %s3 = inlined_call_operand.vmem [shape: f32[48,46], index: 3, kind: input, shape index: {}]
  %s4 = inlined_call_operand.vmem [shape: f32[8,48], index: 4, kind: input, shape index: {}]
  %s5 = inlined_call_operand.vmem [shape: f32[8,1], index: 5, kind: input, shape index: {}]
  %s6 = inlined_call_operand.vmem [shape: f32[24,8], index: 6, kind: input, shape index: {}]
  %s7 = inlined_call_operand.vmem [shape: f32[24,1], index: 7, kind: input, shape index: {}]
  %s8 = inlined_call_operand.vmem [shape: f32[16,10], index: 8, kind: input, shape index: {}]
  %s9 = inlined_call_operand.vmem [shape: f32[10,24], index: 9, kind: input, shape index: {}]
  %s10 = inlined_call_operand.vmem [shape: f32[15,12,24], index: 10, kind: input, shape index: {}]
  %s11 = inlined_call_operand.vmem [shape: f32[15,24], index: 11, kind: input, shape index: {}]
  %s12 = inlined_call_operand.vmem [shape: f32[24,96], index: 12, kind: input, shape index: {}]
  %s13 = inlined_call_operand.vmem [shape: f32[96,96], index: 13, kind: input, shape index: {}]
  %s14 = inlined_call_operand.vmem [shape: f32[2,12,96], index: 14, kind: output, shape index: {}]
  %s15 = sld [smem:[#allocation0]]
  $region89: #{gcanet_forward.2} parent=0
    _
  %s17 = ssub.s32 1, %s15
  %s18 = scalar_select 0, %s17, %s15
  loop: start=0, step=1, limit=4
  $region2: #{gcanet_forward.2} parent=0 // loop_pre_header
    _
  $region3: #{gcanet_forward.2} parent=0 // loop_header
    %s20 = sphi 0, %s24
    %p21 = scmp.ge.s32.totalorder %s20, 4
    %s30 = sphi 0, %s32
    %s33 = sphi 0, %s30
    %s34 = sphi 0, %s33
    %s50 = sphi 0, %s34
    %s54 = sphi 0, %s54
    %s56 = sphi 0, %s54
    %s57 = sphi 0, %s56
    %s71 = sphi 0, %s57
    %s75 = sphi 0, %s75
    %s77 = sphi 0, %s75
    %s78 = sphi 0, %s77
    %s92 = sphi 0, %s78
    %s96 = sphi 0, %s96
    %s98 = sphi 0, %s96
    %s99 = sphi 0, %s98
    %s113 = sphi 0, %s99
    %s117 = sphi 0, %s117
    %s119 = sphi 0, %s117
    %s120 = sphi 0, %s119
    %s134 = sphi 0, %s120
    %s138 = sphi 0, %s138
    %s140 = sphi 0, %s138
    %s141 = sphi 0, %s140
    %s155 = sphi 0, %s141
    %s159 = sphi 0, %s159
    %s161 = sphi 0, %s159
    %s162 = sphi 0, %s161
    %s176 = sphi 0, %s162
    %s180 = sphi 0, %s180
    %s182 = sphi 0, %s180
    %s183 = sphi 0, %s182
    %s197 = sphi 0, %s183
    %s201 = sphi 0, %s201
    %s203 = sphi 0, %s201
    %s204 = sphi 0, %s203
    %s218 = sphi 0, %s204
    %s222 = sphi 0, %s222
    %s224 = sphi 0, %s222
    %s225 = sphi 0, %s224
    %s239 = sphi 0, %s225
    %s243 = sphi 0, %s243
    %s245 = sphi 0, %s243
    %s246 = sphi 0, %s245
    %s260 = sphi 0, %s246
    %s264 = sphi 0, %s264
    %s266 = sphi 0, %s264
    %s267 = sphi 0, %s266
    %s281 = sphi 0, %s267
    %s285 = sphi 0, %s285
    %s287 = sphi 0, %s285
    %s288 = sphi 0, %s287
    %s302 = sphi 0, %s288
    %s306 = sphi 0, %s306
    %s308 = sphi 0, %s306
    %s309 = sphi 0, %s308
    %s323 = sphi 0, %s309
    %s329 = sphi 0, %s331
    %s332 = sphi 0, %s329
    %s333 = sphi 0, %s332
    %s349 = sphi 0, %s333
  $region4: #{gcanet_forward.2} parent=0 // loop_header_branch
    %23 = sbr.rel (%p21) target = $region8
  $region5: #{gcanet_forward.2} parent=0 // loop_body
    %s25 = ssub.s32 %s20, 1
    %s26 = ssub.s32 %s20, 2
    %s27 = sadd.s32 %s20, 1
    %s28 = ssub.s32 %s20, %s27
    %p29 = scmp.eq.s32.totalorder %s28, 0
    %s31 = sadd.s32 %s30, 1
    %s32 = scalar_select %p29, %s30, %s31
    %p35 = pneg %p29
    %p36 = scmp.eq.s32.totalorder %s20, 1
    %p37 = por %p35, %p36
    %p38 = scmp.ne.s32.totalorder %s30, %s33
    %p39 = scmp.eq.s32.totalorder %s20, 0
    %p40 = por %p38, %p39
    %p41 = scmp.ne.s32.totalorder %s30, %s33
    %p42 = scmp.eq.s32.totalorder %s25, 1
    %p43 = por %p41, %p42
    %p44 = scmp.ne.s32.totalorder %s33, %s34
    %p45 = scmp.eq.s32.totalorder %s25, 0
    %p46 = por %p44, %p45
    %p47 = scmp.ne.s32.totalorder %s33, %s34
    %p48 = scmp.eq.s32.totalorder %s26, 1
    %p49 = por %p47, %p48
    %p51 = scmp.ne.s32.totalorder %s34, %s50
    %p52 = scmp.eq.s32.totalorder %s26, 0
    %p53 = por %p51, %p52
    %s55 = sadd.s32 %s54, 1
    %p58 = scmp.eq.s32.totalorder %s20, 1
    %p59 = scmp.ne.s32.totalorder %s54, %s56
    %p60 = scmp.eq.s32.totalorder %s20, 0
    %p61 = por %p59, %p60
    %p62 = scmp.ne.s32.totalorder %s54, %s56
    %p63 = scmp.eq.s32.totalorder %s25, 1
    %p64 = por %p62, %p63
    %p65 = scmp.ne.s32.totalorder %s56, %s57
    %p66 = scmp.eq.s32.totalorder %s25, 0
    %p67 = por %p65, %p66
    %p68 = scmp.ne.s32.totalorder %s56, %s57
    %p69 = scmp.eq.s32.totalorder %s26, 1
    %p70 = por %p68, %p69
    %p72 = scmp.ne.s32.totalorder %s57, %s71
    %p73 = scmp.eq.s32.totalorder %s26, 0
    %p74 = por %p72, %p73
    %s76 = sadd.s32 %s75, 1
    %p79 = scmp.eq.s32.totalorder %s20, 1
    %p80 = scmp.ne.s32.totalorder %s75, %s77
    %p81 = scmp.eq.s32.totalorder %s20, 0
    %p82 = por %p80, %p81
    %p83 = scmp.ne.s32.totalorder %s75, %s77
    %p84 = scmp.eq.s32.totalorder %s25, 1
    %p85 = por %p83, %p84
    %p86 = scmp.ne.s32.totalorder %s77, %s78
    %p87 = scmp.eq.s32.totalorder %s25, 0
    %p88 = por %p86, %p87
    %p89 = scmp.ne.s32.totalorder %s77, %s78
    %p90 = scmp.eq.s32.totalorder %s26, 1
    %p91 = por %p89, %p90
    %p93 = scmp.ne.s32.totalorder %s78, %s92
    %p94 = scmp.eq.s32.totalorder %s26, 0
    %p95 = por %p93, %p94
    %s97 = sadd.s32 %s96, 1
    %p100 = scmp.eq.s32.totalorder %s20, 1
    %p101 = scmp.ne.s32.totalorder %s96, %s98
    %p102 = scmp.eq.s32.totalorder %s20, 0
    %p103 = por %p101, %p102
    %p104 = scmp.ne.s32.totalorder %s96, %s98
    %p105 = scmp.eq.s32.totalorder %s25, 1
    %p106 = por %p104, %p105
    %p107 = scmp.ne.s32.totalorder %s98, %s99
    %p108 = scmp.eq.s32.totalorder %s25, 0
    %p109 = por %p107, %p108
    %p110 = scmp.ne.s32.totalorder %s98, %s99
    %p111 = scmp.eq.s32.totalorder %s26, 1
    %p112 = por %p110, %p111
    %p114 = scmp.ne.s32.totalorder %s99, %s113
    %p115 = scmp.eq.s32.totalorder %s26, 0
    %p116 = por %p114, %p115
    %s118 = sadd.s32 %s117, 1
    %p121 = scmp.eq.s32.totalorder %s20, 1
    %p122 = scmp.ne.s32.totalorder %s117, %s119
    %p123 = scmp.eq.s32.totalorder %s20, 0
    %p124 = por %p122, %p123
    %p125 = scmp.ne.s32.totalorder %s117, %s119
    %p126 = scmp.eq.s32.totalorder %s25, 1
    %p127 = por %p125, %p126
    %p128 = scmp.ne.s32.totalorder %s119, %s120
    %p129 = scmp.eq.s32.totalorder %s25, 0
    %p130 = por %p128, %p129
    %p131 = scmp.ne.s32.totalorder %s119, %s120
    %p132 = scmp.eq.s32.totalorder %s26, 1
    %p133 = por %p131, %p132
    %p135 = scmp.ne.s32.totalorder %s120, %s134
    %p136 = scmp.eq.s32.totalorder %s26, 0
    %p137 = por %p135, %p136
    %s139 = sadd.s32 %s138, 1
    %p142 = scmp.eq.s32.totalorder %s20, 1
    %p143 = scmp.ne.s32.totalorder %s138, %s140
    %p144 = scmp.eq.s32.totalorder %s20, 0
    %p145 = por %p143, %p144
    %p146 = scmp.ne.s32.totalorder %s138, %s140
    %p147 = scmp.eq.s32.totalorder %s25, 1
    %p148 = por %p146, %p147
    %p149 = scmp.ne.s32.totalorder %s140, %s141
    %p150 = scmp.eq.s32.totalorder %s25, 0
    %p151 = por %p149, %p150
    %p152 = scmp.ne.s32.totalorder %s140, %s141
    %p153 = scmp.eq.s32.totalorder %s26, 1
    %p154 = por %p152, %p153
    %p156 = scmp.ne.s32.totalorder %s141, %s155
    %p157 = scmp.eq.s32.totalorder %s26, 0
    %p158 = por %p156, %p157
    %s160 = sadd.s32 %s159, 1
    %p163 = scmp.eq.s32.totalorder %s20, 1
    %p164 = scmp.ne.s32.totalorder %s159, %s161
    %p165 = scmp.eq.s32.totalorder %s20, 0
    %p166 = por %p164, %p165
    %p167 = scmp.ne.s32.totalorder %s159, %s161
    %p168 = scmp.eq.s32.totalorder %s25, 1
    %p169 = por %p167, %p168
    %p170 = scmp.ne.s32.totalorder %s161, %s162
    %p171 = scmp.eq.s32.totalorder %s25, 0
    %p172 = por %p170, %p171
    %p173 = scmp.ne.s32.totalorder %s161, %s162
    %p174 = scmp.eq.s32.totalorder %s26, 1
    %p175 = por %p173, %p174
    %p177 = scmp.ne.s32.totalorder %s162, %s176
    %p178 = scmp.eq.s32.totalorder %s26, 0
    %p179 = por %p177, %p178
    %s181 = sadd.s32 %s180, 1
    %p184 = scmp.eq.s32.totalorder %s20, 1
    %p185 = scmp.ne.s32.totalorder %s180, %s182
    %p186 = scmp.eq.s32.totalorder %s20, 0
    %p187 = por %p185, %p186
    %p188 = scmp.ne.s32.totalorder %s180, %s182
    %p189 = scmp.eq.s32.totalorder %s25, 1
    %p190 = por %p188, %p189
    %p191 = scmp.ne.s32.totalorder %s182, %s183
    %p192 = scmp.eq.s32.totalorder %s25, 0
    %p193 = por %p191, %p192
    %p194 = scmp.ne.s32.totalorder %s182, %s183
    %p195 = scmp.eq.s32.totalorder %s26, 1
    %p196 = por %p194, %p195
    %p198 = scmp.ne.s32.totalorder %s183, %s197
    %p199 = scmp.eq.s32.totalorder %s26, 0
    %p200 = por %p198, %p199
    %s202 = sadd.s32 %s201, 1
    %p205 = scmp.eq.s32.totalorder %s20, 1
    %p206 = scmp.ne.s32.totalorder %s201, %s203
    %p207 = scmp.eq.s32.totalorder %s20, 0
    %p208 = por %p206, %p207
    %p209 = scmp.ne.s32.totalorder %s201, %s203
    %p210 = scmp.eq.s32.totalorder %s25, 1
    %p211 = por %p209, %p210
    %p212 = scmp.ne.s32.totalorder %s203, %s204
    %p213 = scmp.eq.s32.totalorder %s25, 0
    %p214 = por %p212, %p213
    %p215 = scmp.ne.s32.totalorder %s203, %s204
    %p216 = scmp.eq.s32.totalorder %s26, 1
    %p217 = por %p215, %p216
    %p219 = scmp.ne.s32.totalorder %s204, %s218
    %p220 = scmp.eq.s32.totalorder %s26, 0
    %p221 = por %p219, %p220
    %s223 = sadd.s32 %s222, 1
    %p226 = scmp.eq.s32.totalorder %s20, 1
    %p227 = scmp.ne.s32.totalorder %s222, %s224
    %p228 = scmp.eq.s32.totalorder %s20, 0
    %p229 = por %p227, %p228
    %p230 = scmp.ne.s32.totalorder %s222, %s224
    %p231 = scmp.eq.s32.totalorder %s25, 1
    %p232 = por %p230, %p231
    %p233 = scmp.ne.s32.totalorder %s224, %s225
    %p234 = scmp.eq.s32.totalorder %s25, 0
    %p235 = por %p233, %p234
    %p236 = scmp.ne.s32.totalorder %s224, %s225
    %p237 = scmp.eq.s32.totalorder %s26, 1
    %p238 = por %p236, %p237
    %p240 = scmp.ne.s32.totalorder %s225, %s239
    %p241 = scmp.eq.s32.totalorder %s26, 0
    %p242 = por %p240, %p241
    %s244 = sadd.s32 %s243, 1
    %p247 = scmp.eq.s32.totalorder %s20, 1
    %p248 = scmp.ne.s32.totalorder %s243, %s245
    %p249 = scmp.eq.s32.totalorder %s20, 0
    %p250 = por %p248, %p249
    %p251 = scmp.ne.s32.totalorder %s243, %s245
    %p252 = scmp.eq.s32.totalorder %s25, 1
    %p253 = por %p251, %p252
    %p254 = scmp.ne.s32.totalorder %s245, %s246
    %p255 = scmp.eq.s32.totalorder %s25, 0
    %p256 = por %p254, %p255
    %p257 = scmp.ne.s32.totalorder %s245, %s246
    %p258 = scmp.eq.s32.totalorder %s26, 1
    %p259 = por %p257, %p258
    %p261 = scmp.ne.s32.totalorder %s246, %s260
    %p262 = scmp.eq.s32.totalorder %s26, 0
    %p263 = por %p261, %p262
    %s265 = sadd.s32 %s264, 1
    %p268 = scmp.eq.s32.totalorder %s20, 1
    %p269 = scmp.ne.s32.totalorder %s264, %s266
    %p270 = scmp.eq.s32.totalorder %s20, 0
    %p271 = por %p269, %p270
    %p272 = scmp.ne.s32.totalorder %s264, %s266
    %p273 = scmp.eq.s32.totalorder %s25, 1
    %p274 = por %p272, %p273
    %p275 = scmp.ne.s32.totalorder %s266, %s267
    %p276 = scmp.eq.s32.totalorder %s25, 0
    %p277 = por %p275, %p276
    %p278 = scmp.ne.s32.totalorder %s266, %s267
    %p279 = scmp.eq.s32.totalorder %s26, 1
    %p280 = por %p278, %p279
    %p282 = scmp.ne.s32.totalorder %s267, %s281
    %p283 = scmp.eq.s32.totalorder %s26, 0
    %p284 = por %p282, %p283
    %s286 = sadd.s32 %s285, 1
    %p289 = scmp.eq.s32.totalorder %s20, 1
    %p290 = scmp.ne.s32.totalorder %s285, %s287
    %p291 = scmp.eq.s32.totalorder %s20, 0
    %p292 = por %p290, %p291
    %p293 = scmp.ne.s32.totalorder %s285, %s287
    %p294 = scmp.eq.s32.totalorder %s25, 1
    %p295 = por %p293, %p294
    %p296 = scmp.ne.s32.totalorder %s287, %s288
    %p297 = scmp.eq.s32.totalorder %s25, 0
    %p298 = por %p296, %p297
    %p299 = scmp.ne.s32.totalorder %s287, %s288
    %p300 = scmp.eq.s32.totalorder %s26, 1
    %p301 = por %p299, %p300
    %p303 = scmp.ne.s32.totalorder %s288, %s302
    %p304 = scmp.eq.s32.totalorder %s26, 0
    %p305 = por %p303, %p304
    %s307 = sadd.s32 %s306, 1
    %p310 = scmp.eq.s32.totalorder %s20, 1
    %p311 = scmp.ne.s32.totalorder %s306, %s308
    %p312 = scmp.eq.s32.totalorder %s20, 0
    %p313 = por %p311, %p312
    %p314 = scmp.ne.s32.totalorder %s306, %s308
    %p315 = scmp.eq.s32.totalorder %s25, 1
    %p316 = por %p314, %p315
    %p317 = scmp.ne.s32.totalorder %s308, %s309
    %p318 = scmp.eq.s32.totalorder %s25, 0
    %p319 = por %p317, %p318
    %p320 = scmp.ne.s32.totalorder %s308, %s309
    %p321 = scmp.eq.s32.totalorder %s26, 1
    %p322 = por %p320, %p321
    %p324 = scmp.ne.s32.totalorder %s309, %s323
    %p325 = scmp.eq.s32.totalorder %s26, 0
    %p326 = por %p324, %p325
    %s327 = ssub.s32 %s20, %s27
    %p328 = scmp.eq.s32.totalorder %s327, 0
    %s330 = sadd.s32 %s329, 1
    %s331 = scalar_select %p328, %s329, %s330
    %p334 = pneg %p328
    %p335 = scmp.eq.s32.totalorder %s20, 1
    %p336 = por %p334, %p335
    %p337 = scmp.ne.s32.totalorder %s329, %s332
    %p338 = scmp.eq.s32.totalorder %s20, 0
    %p339 = por %p337, %p338
    %p340 = scmp.ne.s32.totalorder %s329, %s332
    %p341 = scmp.eq.s32.totalorder %s25, 1
    %p342 = por %p340, %p341
    %p343 = scmp.ne.s32.totalorder %s332, %s333
    %p344 = scmp.eq.s32.totalorder %s25, 0
    %p345 = por %p343, %p344
    %p346 = scmp.ne.s32.totalorder %s332, %s333
    %p347 = scmp.eq.s32.totalorder %s26, 1
    %p348 = por %p346, %p347
    %p350 = scmp.ne.s32.totalorder %s333, %s349
    %p351 = scmp.eq.s32.totalorder %s26, 0
    %p352 = por %p350, %p351
    %p353 = scmp.le.s32.totalorder 1, %s20
    %p354 = scmp.lt.s32.totalorder %s20, 3
    %p355 = pnand %p353, %p354
    %p356 = pneg %p355
    // Predicated region
    $region9: #{gcanet_forward.2} parent=5 // pred_check
      _
    $region10: #{gcanet_forward.2} parent=5 // pred_check_branch
      %358 = sbr.rel (%p355) target = $region12
    $region11: #{gcanet_forward.2} parent=5 // pred_region
      %s359 = ssub.s32 %s20, 1
      // Predicated region
      $region13: #{gcanet_forward.2} parent=11 // pred_check
        %p360 = pneg %p67
      $region14: #{gcanet_forward.2} parent=11 // pred_check_branch
        %362 = sbr.rel (%p360) target = $region16
      $region15: #{gcanet_forward.2} parent=11 // pred_region
        _
      $region16: #{gcanet_forward.2} parent=11 // pred_fallthru
        _
      // Predicated region
      $region17: #{gcanet_forward.2} parent=11 // pred_check
        %p363 = pneg %p88
      $region18: #{gcanet_forward.2} parent=11 // pred_check_branch
        %365 = sbr.rel (%p363) target = $region20
      $region19: #{gcanet_forward.2} parent=11 // pred_region
        _
      $region20: #{gcanet_forward.2} parent=11 // pred_fallthru
        _
      // Predicated region
      $region21: #{gcanet_forward.2} parent=11 // pred_check
        %p366 = pneg %p109
      $region22: #{gcanet_forward.2} parent=11 // pred_check_branch
        %368 = sbr.rel (%p366) target = $region24
      $region23: #{gcanet_forward.2} parent=11 // pred_region
        _
      $region24: #{gcanet_forward.2} parent=11 // pred_fallthru
        _
      // Predicated region
      $region25: #{gcanet_forward.2} parent=11 // pred_check
        %p369 = pneg %p130
      $region26: #{gcanet_forward.2} parent=11 // pred_check_branch
        %371 = sbr.rel (%p369) target = $region28
      $region27: #{gcanet_forward.2} parent=11 // pred_region
        _
      $region28: #{gcanet_forward.2} parent=11 // pred_fallthru
        _
      // Predicated region
      $region29: #{gcanet_forward.2} parent=11 // pred_check
        %p372 = pneg %p151
      $region30: #{gcanet_forward.2} parent=11 // pred_check_branch
        %374 = sbr.rel (%p372) target = $region32
      $region31: #{gcanet_forward.2} parent=11 // pred_region
        _
      $region32: #{gcanet_forward.2} parent=11 // pred_fallthru
        _
      // Predicated region
      $region33: #{gcanet_forward.2} parent=11 // pred_check
        %p375 = pneg %p172
      $region34: #{gcanet_forward.2} parent=11 // pred_check_branch
        %377 = sbr.rel (%p375) target = $region36
      $region35: #{gcanet_forward.2} parent=11 // pred_region
        _
      $region36: #{gcanet_forward.2} parent=11 // pred_fallthru
        _
      // Predicated region
      $region37: #{gcanet_forward.2} parent=11 // pred_check
        %p378 = pneg %p193
      $region38: #{gcanet_forward.2} parent=11 // pred_check_branch
        %380 = sbr.rel (%p378) target = $region40
      $region39: #{gcanet_forward.2} parent=11 // pred_region
        _
      $region40: #{gcanet_forward.2} parent=11 // pred_fallthru
        _
      // Predicated region
      $region41: #{gcanet_forward.2} parent=11 // pred_check
        %p381 = pneg %p214
      $region42: #{gcanet_forward.2} parent=11 // pred_check_branch
        %383 = sbr.rel (%p381) target = $region44
      $region43: #{gcanet_forward.2} parent=11 // pred_region
        _
      $region44: #{gcanet_forward.2} parent=11 // pred_fallthru
        _
      // Predicated region
      $region45: #{gcanet_forward.2} parent=11 // pred_check
        %p384 = pneg %p235
      $region46: #{gcanet_forward.2} parent=11 // pred_check_branch
        %386 = sbr.rel (%p384) target = $region48
      $region47: #{gcanet_forward.2} parent=11 // pred_region
        _
      $region48: #{gcanet_forward.2} parent=11 // pred_fallthru
        _
      // Predicated region
      $region49: #{gcanet_forward.2} parent=11 // pred_check
        %p387 = pneg %p256
      $region50: #{gcanet_forward.2} parent=11 // pred_check_branch
        %389 = sbr.rel (%p387) target = $region52
      $region51: #{gcanet_forward.2} parent=11 // pred_region
        _
      $region52: #{gcanet_forward.2} parent=11 // pred_fallthru
        _
      // Predicated region
      $region53: #{gcanet_forward.2} parent=11 // pred_check
        %p390 = pneg %p277
      $region54: #{gcanet_forward.2} parent=11 // pred_check_branch
        %392 = sbr.rel (%p390) target = $region56
      $region55: #{gcanet_forward.2} parent=11 // pred_region
        _
      $region56: #{gcanet_forward.2} parent=11 // pred_fallthru
        _
      // Predicated region
      $region57: #{gcanet_forward.2} parent=11 // pred_check
        %p393 = pneg %p298
      $region58: #{gcanet_forward.2} parent=11 // pred_check_branch
        %395 = sbr.rel (%p393) target = $region60
      $region59: #{gcanet_forward.2} parent=11 // pred_region
        _
      $region60: #{gcanet_forward.2} parent=11 // pred_fallthru
        _
      // Predicated region
      $region61: #{gcanet_forward.2} parent=11 // pred_check
        %p396 = pneg %p319
      $region62: #{gcanet_forward.2} parent=11 // pred_check_branch
        %398 = sbr.rel (%p396) target = $region64
      $region63: #{gcanet_forward.2} parent=11 // pred_region
        _
      $region64: #{gcanet_forward.2} parent=11 // pred_fallthru
        _
    $region12: #{gcanet_forward.2} parent=5 // pred_fallthru
      _
    %p399 = scmp.lt.s32.totalorder %s20, 2
    // Predicated region
    $region65: #{gcanet_forward.2} parent=5 // pred_check
      %p400 = pneg %p399
    $region66: #{gcanet_forward.2} parent=5 // pred_check_branch
      %402 = sbr.rel (%p400) target = $region68
    $region67: #{gcanet_forward.2} parent=5 // pred_region
      // Predicated region
      $region69: #{gcanet_forward.2} parent=67 // pred_check
        %p403 = pneg %p40
      $region70: #{gcanet_forward.2} parent=67 // pred_check_branch
        %405 = sbr.rel (%p403) target = $region72
      $region71: #{gcanet_forward.2} parent=67 // pred_region
        %p406 = scmp.lt.s32.totalorder %s20, 1
        %s407 = scalar_select %p406, %s20, 1
        %s408 = smul.addr %s407, 6
        %s409 = smul.addr %s408, 8
        %s410 = scalar_lea.vmem %s0, %s409
      $region72: #{gcanet_forward.2} parent=67 // pred_fallthru
        _
    $region68: #{gcanet_forward.2} parent=5 // pred_fallthru
      _
    %p411 = scmp.le.s32.totalorder 1, %s20
    %p412 = scmp.lt.s32.totalorder %s20, 3
    %p413 = pnand %p411, %p412
    %p414 = pneg %p413
    // Predicated region
    $region73: #{gcanet_forward.2} parent=5 // pred_check
      _
    $region74: #{gcanet_forward.2} parent=5 // pred_check_branch
      %416 = sbr.rel (%p413) target = $region76
    $region75: #{gcanet_forward.2} parent=5 // pred_region
      %s417 = ssub.s32 %s20, 1
      %p418 = scmp.lt.s32.totalorder %s25, 1
      %s419 = scalar_select %p418, %s25, 1
      %s420 = smul.addr %s419, 6
      %s421 = smul.addr %s420, 8
      %s422 = scalar_lea.vmem %s0, %s421
      %p423 = pneg %p46
      %p424 = pneg %p43
      %p425 = pneg %p67
      %p426 = pneg %p64
      %p427 = pneg %p88
      %p428 = pneg %p85
      %p429 = pneg %p109
      %p430 = pneg %p106
      %p431 = pneg %p130
      %p432 = pneg %p127
      %p433 = pneg %p151
      %p434 = pneg %p148
      %p435 = pneg %p172
      %p436 = pneg %p169
      %p437 = pneg %p193
      %p438 = pneg %p190
      %p439 = pneg %p214
      %p440 = pneg %p211
      %p441 = pneg %p235
      %p442 = pneg %p232
      %p443 = pneg %p256
      %p444 = pneg %p253
      %p445 = pneg %p277
      %p446 = pneg %p274
      %p447 = pneg %p298
      %p448 = pneg %p295
      %p449 = pneg %p319
      %p450 = pneg %p316
      %p451 = pneg %p345
      %p452 = pneg %p342
      %p453 = scmp.lt.s32.totalorder %s25, 1
      %s454 = scalar_select %p453, %s25, 1
      %s455 = smul.addr %s454, 2
      %s456 = smul.addr %s455, 8
      %s457 = scalar_lea.vmem %s14, %s456
      %p458 = scmp.lt.s32.totalorder %s25, 1
      %s459 = scalar_select %p458, %s25, 1
      %s460 = smul.addr %s459, 6
      %s461 = smul.addr %s460, 8
      %s462 = scalar_lea.vmem %s0, %s461
      %p463 = scmp.lt.s32.totalorder %s25, 1
      %s464 = scalar_select %p463, %s25, 1
      %s465 = smul.addr %s464, 2
      %s466 = smul.addr %s465, 8
      %s467 = scalar_lea.vmem %s14, %s466
      %v468 = vld [vmem:[%s462] sm:$0xff]
      %v469 = vld [vmem:[%s462 + $0x8] sm:$0xff]
      %v470 = vld [vmem:[%s462 + $0x10] sm:$0xff]
      %v471 = vld [vmem:[%s462 + $0x18] sm:$0xff]
      %v472 = vld [vmem:[%s462 + $0x20] sm:$0xff]
      %v473 = vld [vmem:[%s462 + $0x28] sm:$0x3f]
      %v474 = vld [vmem:[%s1] sm:$0xff]
      %v475 = vld [vmem:[%s1 + $0x8] sm:$0xff]
      %v476 = vld [vmem:[%s1 + $0x10] sm:$0xf]
      %vm477 = vcmask 162816
      %v479 = vsel %vm477, %v468, 0
      %v482 = vsel %vm477, %v469, 0
      %v485 = vsel %vm477, %v470, 0
      %v488 = vsel %vm477, %v471, 0
      %v491 = vsel %vm477, %v472, 0
      %v494 = vsel %vm477, %v473, 0
      %vm496 = vcmask 1043456
      %v498 = vsel %vm496, %v476, 0
      %500 = vmatprep.subr.mxu0 0.0
      %501 = vmatpush1.msra.mxu0 %v474
      %502 = vmatprep.subr.mxu0 0.0
      %503 = vmatpush1.msra.mxu0 %v475
      %504 = vmatprep.subr.mxu0 0.0
      %505 = vmatpush1.msra.mxu0 %v498
      %506 = vmatprep.subr.mxu0 0.0
      %507 = vmatpush1.msra.mxu0 0.0
      %508 = vmatprep.subr.mxu0 0.0
      %509 = vmatpush1.msra.mxu0 0.0
      %510 = vmatprep.subr.mxu0 0.0
      %511 = vmatpush1.msra.mxu0 0.0
      %512 = vmatprep.subr.mxu0 0.0
      %513 = vmatpush1.msra.mxu0 0.0
      %514 = vmatprep.subr.mxu0 0.0
      %515 = vmatpush1.msra.mxu0 0.0
      %516 = vmatprep.subr.mxu0 0.0
      %517 = vmatpush1.msra.mxu0 0.0
      %518 = vmatprep.subr.mxu0 0.0
      %519 = vmatpush1.msra.mxu0 0.0
      %520 = vmatprep.subr.mxu0 0.0
      %521 = vmatpush1.msra.mxu0 0.0
      %522 = vmatprep.subr.mxu0 0.0
      %523 = vmatpush1.msra.mxu0 0.0
      %524 = vmatprep.subr.mxu0 0.0
      %525 = vmatpush1.msra.mxu0 0.0
      %526 = vmatprep.subr.mxu0 0.0
      %527 = vmatpush1.msra.mxu0 0.0
      %528 = vmatprep.subr.mxu0 0.0
      %529 = vmatpush1.msra.mxu0 0.0
      %530 = vmatprep.subr.mxu0 0.0
      %531 = vmatpush1.msra.mxu0 0.0
      %532 = vmatprep.subr.mxu0 0.0
      %533 = vmatpush1.msra.mxu0 0.0
      %534 = vmatprep.subr.mxu0 0.0
      %535 = vmatpush1.msra.mxu0 0.0
      %536 = vmatprep.subr.mxu0 0.0
      %537 = vmatpush1.msra.mxu0 0.0
      %538 = vmatprep.subr.mxu0 0.0
      %539 = vmatpush1.msra.mxu0 0.0
      %540 = vmatprep.subr.mxu0 0.0
      %541 = vmatpush1.msra.mxu0 0.0
      %542 = vmatprep.subr.mxu0 0.0
      %543 = vmatpush1.msra.mxu0 0.0
      %544 = vmatprep.subr.mxu0 0.0
      %545 = vmatpush1.msra.mxu0 0.0
      %546 = vmatprep.subr.mxu0 0.0
      %547 = vmatpush1.msra.mxu0 0.0
      %548 = vmatprep.subr.mxu0 0.0
      %549 = vmatpush1.msra.mxu0 0.0
      %550 = vmatprep.subr.mxu0 0.0
      %551 = vmatpush1.msra.mxu0 0.0
      %552 = vmatprep.subr.mxu0 0.0
      %553 = vmatpush1.msra.mxu0 0.0
      %554 = vmatprep.subr.mxu0 0.0
      %555 = vmatpush1.msra.mxu0 0.0
      %556 = vmatprep.subr.mxu0 0.0
      %557 = vmatpush1.msra.mxu0 0.0
      %558 = vmatprep.subr.mxu0 0.0
      %559 = vmatpush1.msra.mxu0 0.0
      %560 = vmatprep.subr.mxu0 0.0
      %561 = vmatpush1.msra.mxu0 0.0
      %562 = vmatprep.subr.mxu0 0.0
      %563 = vmatpush1.msra.mxu0 0.0
      %564 = vmatprep.mubr.f32.mxu0 0.0
      %565 = vmatmul.mubr.f32.gmra.mrb[0].mxu0 %v479
      %v566 = vpop.f32.mrb[0].mxu0
      %v567 = vadd.f32 0.0, %v566
      %v568 = vpop.f32.mrb[0].mxu0
      %569 = vmatprep.mubr.f32.mxu0 0.0
      %570 = vmatmul.mubr.f32.gmra.mrb[0].mxu0 %v482
      %v571 = vpop.f32.mrb[0].mxu0
      %v572 = vadd.f32 0.0, %v571
      %v573 = vpop.f32.mrb[0].mxu0
      %574 = vmatprep.mubr.f32.mxu0 0.0
      %575 = vmatmul.mubr.f32.gmra.mrb[0].mxu0 %v485
      %v576 = vpop.f32.mrb[0].mxu0
      %v577 = vadd.f32 0.0, %v576
      %v578 = vpop.f32.mrb[0].mxu0
      %579 = vmatprep.mubr.f32.mxu0 0.0
      %580 = vmatmul.mubr.f32.gmra.mrb[0].mxu0 %v488
      %v581 = vpop.f32.mrb[0].mxu0
      %v582 = vadd.f32 0.0, %v581
      %v583 = vpop.f32.mrb[0].mxu0
      %584 = vmatprep.mubr.f32.mxu0 0.0
      %585 = vmatmul.mubr.f32.gmra.mrb[0].mxu0 %v491
      %v586 = vpop.f32.mrb[0].mxu0
      %v587 = vadd.f32 0.0, %v586
      %v588 = vpop.f32.mrb[0].mxu0
      %589 = vmatprep.mubr.f32.mxu0 0.0
      %590 = vmatmul.mubr.f32.gmra.mrb[0].mxu0 %v494
      %v591 = vpop.f32.mrb[0].mxu0
      %v592 = vadd.f32 0.0, %v591
      %v593 = vpop.f32.mrb[0].mxu0
      %594 = vdwg.mxu0
      %v595 = vmax.f32 %v567, 0.0
      %v596 = vmax.f32 %v572, 0.0
      %v597 = vmax.f32 %v577, 0.0
      %v598 = vmax.f32 %v582, 0.0
      %v599 = vmax.f32 %v587, 0.0
      %v600 = vmax.f32 %v592, 0.0
      %v601 = vld [vmem:[%s2] sm:$0xff]
      %v602 = vld [vmem:[%s2 + $0x8] sm:$0xff]
      %v603 = vld [vmem:[%s2 + $0x10] sm:$0xff]
      %v604 = vld [vmem:[%s2 + $0x18] sm:$0xff]
      %v605 = vld [vmem:[%s2 + $0x20] sm:$0xff]
      %v606 = vld [vmem:[%s2 + $0x28] sm:$0xff]
      %vm607 = vcmask 375808
      %v609 = vsel %vm607, %v601, 0
      %v612 = vsel %vm607, %v602, 0
      %v615 = vsel %vm607, %v603, 0
      %v618 = vsel %vm607, %v604, 0
      %v621 = vsel %vm607, %v605, 0
      %v624 = vsel %vm607, %v606, 0
      %vm626 = vcmask 1045504
      %v628 = vsel %vm626, %v600, 0
      %630 = vmatprep.subr.mxu0 0.0
      %631 = vmatpush1.msra.mxu0 %v595
      %632 = vmatprep.subr.mxu0 0.0
      %633 = vmatpush1.msra.mxu0 %v596
      %634 = vmatprep.subr.mxu0 0.0
      %635 = vmatpush1.msra.mxu0 %v597
      %636 = vmatprep.subr.mxu0 0.0
      %637 = vmatpush1.msra.mxu0 %v598
      %638 = vmatprep.subr.mxu0 0.0
      %639 = vmatpush1.msra.mxu0 %v599
      %640 = vmatprep.subr.mxu0 0.0
      %641 = vmatpush1.msra.mxu0 %v628
      %642 = vmatprep.subr.mxu0 0.0
      %643 = vmatpush1.msra.mxu0 0.0
      %644 = vmatprep.subr.mxu0 0.0
      %645 = vmatpush1.msra.mxu0 0.0
      %646 = vmatprep.subr.mxu0 0.0
      %647 = vmatpush1.msra.mxu0 0.0
      %648 = vmatprep.subr.mxu0 0.0
      %649 = vmatpush1.msra.mxu0 0.0
      %650 = vmatprep.subr.mxu0 0.0
      %651 = vmatpush1.msra.mxu0 0.0
      %652 = vmatprep.subr.mxu0 0.0
      %653 = vmatpush1.msra.mxu0 0.0
      %654 = vmatprep.subr.mxu0 0.0
      %655 = vmatpush1.msra.mxu0 0.0
      %656 = vmatprep.subr.mxu0 0.0
      %657 = vmatpush1.msra.mxu0 0.0
      %658 = vmatprep.subr.mxu0 0.0
      %659 = vmatpush1.msra.mxu0 0.0
      %660 = vmatprep.subr.mxu0 0.0
      %661 = vmatpush1.msra.mxu0 0.0
      %662 = vmatprep.subr.mxu0 0.0
      %663 = vmatpush1.msra.mxu0 0.0
      %664 = vmatprep.subr.mxu0 0.0
      %665 = vmatpush1.msra.mxu0 0.0
      %666 = vmatprep.subr.mxu0 0.0
      %667 = vmatpush1.msra.mxu0 0.0
      %668 = vmatprep.subr.mxu0 0.0
      %669 = vmatpush1.msra.mxu0 0.0
      %670 = vmatprep.subr.mxu0 0.0
      %671 = vmatpush1.msra.mxu0 0.0
      %672 = vmatprep.subr.mxu0 0.0
      %673 = vmatpush1.msra.mxu0 0.0
      %674 = vmatprep.subr.mxu0 0.0
      %675 = vmatpush1.msra.mxu0 0.0
      %676 = vmatprep.subr.mxu0 0.0
      %677 = vmatpush1.msra.mxu0 0.0
      %678 = vmatprep.subr.mxu0 0.0
      %679 = vmatpush1.msra.mxu0 0.0
      %680 = vmatprep.subr.mxu0 0.0
      %681 = vmatpush1.msra.mxu0 0.0
      %682 = vmatprep.subr.mxu0 0.0
      %683 = vmatpush1.msra.mxu0 0.0
      %684 = vmatprep.subr.mxu0 0.0
      %685 = vmatpush1.msra.mxu0 0.0
      %686 = vmatprep.subr.mxu0 0.0
      %687 = vmatpush1.msra.mxu0 0.0
      %688 = vmatprep.subr.mxu0 0.0
      %689 = vmatpush1.msra.mxu0 0.0
      %690 = vmatprep.subr.mxu0 0.0
      %691 = vmatpush1.msra.mxu0 0.0
      %692 = vmatprep.subr.mxu0 0.0
      %693 = vmatpush1.msra.mxu0 0.0
      %694 = vmatprep.mubr.f32.mxu0 0.0
      %695 = vmatmul.mubr.f32.gmra.mrb[0].mxu0 %v609
      %v696 = vpop.f32.mrb[0].mxu0
      %v697 = vadd.f32 0.0, %v696
      %v698 = vpop.f32.mrb[0].mxu0
      %699 = vmatprep.mubr.f32.mxu0 0.0
      %700 = vmatmul.mubr.f32.gmra.mrb[0].mxu0 %v612
      %v701 = vpop.f32.mrb[0].mxu0
      %v702 = vadd.f32 0.0, %v701
      %v703 = vpop.f32.mrb[0].mxu0
      %704 = vmatprep.mubr.f32.mxu0 0.0
      %705 = vmatmul.mubr.f32.gmra.mrb[0].mxu0 %v615
      %v706 = vpop.f32.mrb[0].mxu0
      %v707 = vadd.f32 0.0, %v706
      %v708 = vpop.f32.mrb[0].mxu0
      %709 = vmatprep.mubr.f32.mxu0 0.0
      %710 = vmatmul.mubr.f32.gmra.mrb[0].mxu0 %v618
      %v711 = vpop.f32.mrb[0].mxu0
      %v712 = vadd.f32 0.0, %v711
      %v713 = vpop.f32.mrb[0].mxu0
      %714 = vmatprep.mubr.f32.mxu0 0.0
      %715 = vmatmul.mubr.f32.gmra.mrb[0].mxu0 %v621
      %v716 = vpop.f32.mrb[0].mxu0
      %v717 = vadd.f32 0.0, %v716
      %v718 = vpop.f32.mrb[0].mxu0
      %719 = vmatprep.mubr.f32.mxu0 0.0
      %720 = vmatmul.mubr.f32.gmra.mrb[0].mxu0 %v624
      %v721 = vpop.f32.mrb[0].mxu0
      %v722 = vadd.f32 0.0, %v721
      %v723 = vpop.f32.mrb[0].mxu0
      %724 = vdwg.mxu0
      %v725 = vld [vmem:[%s3] sm:$0xff]
      %v726 = vld [vmem:[%s3 + $0x8] sm:$0xff]
      %v727 = vld [vmem:[%s3 + $0x10] sm:$0xff]
      %v728 = vld [vmem:[%s3 + $0x18] sm:$0xff]
      %v729 = vld [vmem:[%s3 + $0x20] sm:$0xff]
      %v730 = vld [vmem:[%s3 + $0x28] sm:$0xff]
      %v732 = vsel %vm607, %v725, 0
      %v735 = vsel %vm607, %v726, 0
      %v738 = vsel %vm607, %v727, 0
      %v741 = vsel %vm607, %v728, 0
      %v744 = vsel %vm607, %v729, 0
      %v747 = vsel %vm607, %v730, 0
      %749 = vmatprep.subr.mxu0 0.0
      %750 = vmatpush1.msra.mxu0 %v595
      %751 = vmatprep.subr.mxu0 0.0
      %752 = vmatpush1.msra.mxu0 %v596
      %753 = vmatprep.subr.mxu0 0.0
      %754 = vmatpush1.msra.mxu0 %v597
      %755 = vmatprep.subr.mxu0 0.0
      %756 = vmatpush1.msra.mxu0 %v598
      %757 = vmatprep.subr.mxu0 0.0
      %758 = vmatpush1.msra.mxu0 %v599
      %759 = vmatprep.subr.mxu0 0.0
      %760 = vmatpush1.msra.mxu0 %v628
      %761 = vmatprep.subr.mxu0 0.0
      %762 = vmatpush1.msra.mxu0 0.0
      %763 = vmatprep.subr.mxu0 0.0
      %764 = vmatpush1.msra.mxu0 0.0
      %765 = vmatprep.subr.mxu0 0.0
      %766 = vmatpush1.msra.mxu0 0.0
      %767 = vmatprep.subr.mxu0 0.0
      %768 = vmatpush1.msra.mxu0 0.0
      %769 = vmatprep.subr.mxu0 0.0
      %770 = vmatpush1.msra.mxu0 0.0
      %771 = vmatprep.subr.mxu0 0.0
      %772 = vmatpush1.msra.mxu0 0.0
      %773 = vmatprep.subr.mxu0 0.0
      %774 = vmatpush1.msra.mxu0 0.0
      %775 = vmatprep.subr.mxu0 0.0
      %776 = vmatpush1.msra.mxu0 0.0
      %777 = vmatprep.subr.mxu0 0.0
      %778 = vmatpush1.msra.mxu0 0.0
      %779 = vmatprep.subr.mxu0 0.0
      %780 = vmatpush1.msra.mxu0 0.0
      %781 = vmatprep.subr.mxu0 0.0
      %782 = vmatpush1.msra.mxu0 0.0
      %783 = vmatprep.subr.mxu0 0.0
      %784 = vmatpush1.msra.mxu0 0.0
      %785 = vmatprep.subr.mxu0 0.0
      %786 = vmatpush1.msra.mxu0 0.0
      %787 = vmatprep.subr.mxu0 0.0
      %788 = vmatpush1.msra.mxu0 0.0
      %789 = vmatprep.subr.mxu0 0.0
      %790 = vmatpush1.msra.mxu0 0.0
      %791 = vmatprep.subr.mxu0 0.0
      %792 = vmatpush1.msra.mxu0 0.0
      %793 = vmatprep.subr.mxu0 0.0
      %794 = vmatpush1.msra.mxu0 0.0
      %795 = vmatprep.subr.mxu0 0.0
      %796 = vmatpush1.msra.mxu0 0.0
      %797 = vmatprep.subr.mxu0 0.0
      %798 = vmatpush1.msra.mxu0 0.0
      %799 = vmatprep.subr.mxu0 0.0
      %800 = vmatpush1.msra.mxu0 0.0
      %801 = vmatprep.subr.mxu0 0.0
      %802 = vmatpush1.msra.mxu0 0.0
      %803 = vmatprep.subr.mxu0 0.0
      %804 = vmatpush1.msra.mxu0 0.0
      %805 = vmatprep.subr.mxu0 0.0
      %806 = vmatpush1.msra.mxu0 0.0
      %807 = vmatprep.subr.mxu0 0.0
      %808 = vmatpush1.msra.mxu0 0.0
      %809 = vmatprep.subr.mxu0 0.0
      %810 = vmatpush1.msra.mxu0 0.0
      %811 = vmatprep.subr.mxu0 0.0
      %812 = vmatpush1.msra.mxu0 0.0
      %813 = vmatprep.mubr.f32.mxu0 0.0
      %814 = vmatmul.mubr.f32.gmra.mrb[0].mxu0 %v732
      %v815 = vpop.f32.mrb[0].mxu0
      %v816 = vadd.f32 0.0, %v815
      %v817 = vpop.f32.mrb[0].mxu0
      %818 = vmatprep.mubr.f32.mxu0 0.0
      %819 = vmatmul.mubr.f32.gmra.mrb[0].mxu0 %v735
      %v820 = vpop.f32.mrb[0].mxu0
      %v821 = vadd.f32 0.0, %v820
      %v822 = vpop.f32.mrb[0].mxu0
      %823 = vmatprep.mubr.f32.mxu0 0.0
      %824 = vmatmul.mubr.f32.gmra.mrb[0].mxu0 %v738
      %v825 = vpop.f32.mrb[0].mxu0
      %v826 = vadd.f32 0.0, %v825
      %v827 = vpop.f32.mrb[0].mxu0
      %828 = vmatprep.mubr.f32.mxu0 0.0
      %829 = vmatmul.mubr.f32.gmra.mrb[0].mxu0 %v741
      %v830 = vpop.f32.mrb[0].mxu0
      %v831 = vadd.f32 0.0, %v830
      %v832 = vpop.f32.mrb[0].mxu0
      %833 = vmatprep.mubr.f32.mxu0 0.0
      %834 = vmatmul.mubr.f32.gmra.mrb[0].mxu0 %v744
      %v835 = vpop.f32.mrb[0].mxu0
      %v836 = vadd.f32 0.0, %v835
      %v837 = vpop.f32.mrb[0].mxu0
      %838 = vmatprep.mubr.f32.mxu0 0.0
      %839 = vmatmul.mubr.f32.gmra.mrb[0].mxu0 %v747
      %v840 = vpop.f32.mrb[0].mxu0
      %v841 = vadd.f32 0.0, %v840
      %v842 = vpop.f32.mrb[0].mxu0
      %843 = vdwg.mxu0
      %v844 = vmax.f32 %v697, %v816
      %v845 = vmax.f32 %v702, %v821
      %v846 = vmax.f32 %v707, %v826
      %v847 = vmax.f32 %v712, %v831
      %v848 = vmax.f32 %v717, %v836
      %v849 = vmax.f32 %v722, %v841
      %v850 = vld [vmem:[%s4] sm:$0xff]
      %v851 = vld [vmem:[%s5] sm:$0xff]
      %853 = vset.pattern.permute.xlu0 0
      %854 = vperm.xlu0 %853, %v851
      %v855 = vpop.permute.xlu0 %854
      %vm857 = vcmask 392192
      %v859 = vsel %vm857, %v850, 0
      %861 = vmatprep.subr.mxu0 0.0
      %862 = vmatpush1.msra.mxu0 %v844
      %863 = vmatprep.subr.mxu0 0.0
      %864 = vmatpush1.msra.mxu0 %v845
      %865 = vmatprep.subr.mxu0 0.0
      %866 = vmatpush1.msra.mxu0 %v846
      %867 = vmatprep.subr.mxu0 0.0
      %868 = vmatpush1.msra.mxu0 %v847
      %869 = vmatprep.subr.mxu0 0.0
      %870 = vmatpush1.msra.mxu0 %v848
      %871 = vmatprep.subr.mxu0 0.0
      %872 = vmatpush1.msra.mxu0 %v849
      %873 = vmatprep.subr.mxu0 0.0
      %874 = vmatpush1.msra.mxu0 0.0
      %875 = vmatprep.subr.mxu0 0.0
      %876 = vmatpush1.msra.mxu0 0.0
      %877 = vmatprep.subr.mxu0 0.0
      %878 = vmatpush1.msra.mxu0 0.0
      %879 = vmatprep.subr.mxu0 0.0
      %880 = vmatpush1.msra.mxu0 0.0
      %881 = vmatprep.subr.mxu0 0.0
      %882 = vmatpush1.msra.mxu0 0.0
      %883 = vmatprep.subr.mxu0 0.0
      %884 = vmatpush1.msra.mxu0 0.0
      %885 = vmatprep.subr.mxu0 0.0
      %886 = vmatpush1.msra.mxu0 0.0
      %887 = vmatprep.subr.mxu0 0.0
      %888 = vmatpush1.msra.mxu0 0.0
      %889 = vmatprep.subr.mxu0 0.0
      %890 = vmatpush1.msra.mxu0 0.0
      %891 = vmatprep.subr.mxu0 0.0
      %892 = vmatpush1.msra.mxu0 0.0
      %893 = vmatprep.subr.mxu0 0.0
      %894 = vmatpush1.msra.mxu0 0.0
      %895 = vmatprep.subr.mxu0 0.0
      %896 = vmatpush1.msra.mxu0 0.0
      %897 = vmatprep.subr.mxu0 0.0
      %898 = vmatpush1.msra.mxu0 0.0
      %899 = vmatprep.subr.mxu0 0.0
      %900 = vmatpush1.msra.mxu0 0.0
      %901 = vmatprep.subr.mxu0 0.0
      %902 = vmatpush1.msra.mxu0 0.0
      %903 = vmatprep.subr.mxu0 0.0
      %904 = vmatpush1.msra.mxu0 0.0
      %905 = vmatprep.subr.mxu0 0.0
      %906 = vmatpush1.msra.mxu0 0.0
      %907 = vmatprep.subr.mxu0 0.0
      %908 = vmatpush1.msra.mxu0 0.0
      %909 = vmatprep.subr.mxu0 0.0
      %910 = vmatpush1.msra.mxu0 0.0
      %911 = vmatprep.subr.mxu0 0.0
      %912 = vmatpush1.msra.mxu0 0.0
      %913 = vmatprep.subr.mxu0 0.0
      %914 = vmatpush1.msra.mxu0 0.0
      %915 = vmatprep.subr.mxu0 0.0
      %916 = vmatpush1.msra.mxu0 0.0
      %917 = vmatprep.subr.mxu0 0.0
      %918 = vmatpush1.msra.mxu0 0.0
      %919 = vmatprep.subr.mxu0 0.0
      %920 = vmatpush1.msra.mxu0 0.0
      %921 = vmatprep.subr.mxu0 0.0
      %922 = vmatpush1.msra.mxu0 0.0
      %923 = vmatprep.subr.mxu0 0.0
      %924 = vmatpush1.msra.mxu0 0.0
      %925 = vmatprep.mubr.f32.mxu0 0.0
      %926 = vmatmul.mubr.f32.gmra.mrb[0].mxu0 %v859
      %v927 = vpop.f32.mrb[0].mxu0
      %v928 = vadd.f32 %v855, %v927
      %v929 = vpop.f32.mrb[0].mxu0
      %930 = vdwg.mxu0
      %v931 = vmax.f32 %v928, 0.0
      %v932 = vld [vmem:[%s6] sm:$0xff]
      %v933 = vld [vmem:[%s6 + $0x8] sm:$0xff]
      %v934 = vld [vmem:[%s6 + $0x10] sm:$0xff]
      %v935 = vld [vmem:[%s7] sm:$0xff]
      %v936 = vld [vmem:[%s7 + $0x8] sm:$0xff]
      %v937 = vld [vmem:[%s7 + $0x10] sm:$0xff]
      %939 = vset.pattern.permute.xlu0 0
      %940 = vperm.xlu0 %939, %v935
      %v941 = vpop.permute.xlu0 %940
      %944 = vset.pattern.permute.xlu0 0
      %945 = vperm.xlu0 %944, %v936
      %v946 = vpop.permute.xlu0 %945
      %949 = vset.pattern.permute.xlu0 0
      %950 = vperm.xlu0 %949, %v937
      %v951 = vpop.permute.xlu0 %950
      %vm953 = vcmask 64512
      %v955 = vsel %vm953, %v932, 0
      %v958 = vsel %vm953, %v933, 0
      %v961 = vsel %vm953, %v934, 0
      %963 = vmatprep.subr.mxu0 0.0
      %964 = vmatpush1.msra.mxu0 %v931
      %965 = vmatprep.subr.mxu0 0.0
      %966 = vmatpush1.msra.mxu0 0.0
      %967 = vmatprep.subr.mxu0 0.0
      %968 = vmatpush1.msra.mxu0 0.0
      %969 = vmatprep.subr.mxu0 0.0
      %970 = vmatpush1.msra.mxu0 0.0
      %971 = vmatprep.subr.mxu0 0.0
      %972 = vmatpush1.msra.mxu0 0.0
      %973 = vmatprep.subr.mxu0 0.0
      %974 = vmatpush1.msra.mxu0 0.0
      %975 = vmatprep.subr.mxu0 0.0
      %976 = vmatpush1.msra.mxu0 0.0
      %977 = vmatprep.subr.mxu0 0.0
      %978 = vmatpush1.msra.mxu0 0.0
      %979 = vmatprep.subr.mxu0 0.0
      %980 = vmatpush1.msra.mxu0 0.0
      %981 = vmatprep.subr.mxu0 0.0
      %982 = vmatpush1.msra.mxu0 0.0
      %983 = vmatprep.subr.mxu0 0.0
      %984 = vmatpush1.msra.mxu0 0.0
      %985 = vmatprep.subr.mxu0 0.0
      %986 = vmatpush1.msra.mxu0 0.0
      %987 = vmatprep.subr.mxu0 0.0
      %988 = vmatpush1.msra.mxu0 0.0
      %989 = vmatprep.subr.mxu0 0.0
      %990 = vmatpush1.msra.mxu0 0.0
      %991 = vmatprep.subr.mxu0 0.0
      %992 = vmatpush1.msra.mxu0 0.0
      %993 = vmatprep.subr.mxu0 0.0
      %994 = vmatpush1.msra.mxu0 0.0
      %995 = vmatprep.subr.mxu0 0.0
      %996 = vmatpush1.msra.mxu0 0.0
      %997 = vmatprep.subr.mxu0 0.0
      %998 = vmatpush1.msra.mxu0 0.0
      %999 = vmatprep.subr.mxu0 0.0
      %1000 = vmatpush1.msra.mxu0 0.0
      %1001 = vmatprep.subr.mxu0 0.0
      %1002 = vmatpush1.msra.mxu0 0.0
      %1003 = vmatprep.subr.mxu0 0.0
      %1004 = vmatpush1.msra.mxu0 0.0
      %1005 = vmatprep.subr.mxu0 0.0
      %1006 = vmatpush1.msra.mxu0 0.0
      %1007 = vmatprep.subr.mxu0 0.0
      %1008 = vmatpush1.msra.mxu0 0.0
      %1009 = vmatprep.subr.mxu0 0.0
      %1010 = vmatpush1.msra.mxu0 0.0
      %1011 = vmatprep.subr.mxu0 0.0
      %1012 = vmatpush1.msra.mxu0 0.0
      %1013 = vmatprep.subr.mxu0 0.0
      %1014 = vmatpush1.msra.mxu0 0.0
      %1015 = vmatprep.subr.mxu0 0.0
      %1016 = vmatpush1.msra.mxu0 0.0
      %1017 = vmatprep.subr.mxu0 0.0
      %1018 = vmatpush1.msra.mxu0 0.0
      %1019 = vmatprep.subr.mxu0 0.0
      %1020 = vmatpush1.msra.mxu0 0.0
      %1021 = vmatprep.subr.mxu0 0.0
      %1022 = vmatpush1.msra.mxu0 0.0
      %1023 = vmatprep.subr.mxu0 0.0
      %1024 = vmatpush1.msra.mxu0 0.0
      %1025 = vmatprep.subr.mxu0 0.0
      %1026 = vmatpush1.msra.mxu0 0.0
      %1027 = vmatprep.mubr.f32.mxu0 0.0
      %1028 = vmatmul.mubr.f32.gmra.mrb[0].mxu0 %v955
      %v1029 = vpop.f32.mrb[0].mxu0
      %v1030 = vadd.f32 %v941, %v1029
      %v1031 = vpop.f32.mrb[0].mxu0
      %1032 = vmatprep.mubr.f32.mxu0 0.0
      %1033 = vmatmul.mubr.f32.gmra.mrb[0].mxu0 %v958
      %v1034 = vpop.f32.mrb[0].mxu0
      %v1035 = vadd.f32 %v946, %v1034
      %v1036 = vpop.f32.mrb[0].mxu0
      %1037 = vmatprep.mubr.f32.mxu0 0.0
      %1038 = vmatmul.mubr.f32.gmra.mrb[0].mxu0 %v961
      %v1039 = vpop.f32.mrb[0].mxu0
      %v1040 = vadd.f32 %v951, %v1039
      %v1041 = vpop.f32.mrb[0].mxu0
      %1042 = vdwg.mxu0
      %v1043 = vadd.f32 %v1030, 3.0
      %v1044 = vadd.f32 %v1035, 3.0
      %v1045 = vadd.f32 %v1040, 3.0
      %v1046 = vmax.f32 %v1043, 0.0
      %v1047 = vmax.f32 %v1044, 0.0
      %v1048 = vmax.f32 %v1045, 0.0
      %v1049 = vmin.f32 %v1046, 6.0
      %v1050 = vmin.f32 %v1047, 6.0
      %v1051 = vmin.f32 %v1048, 6.0
      %v1052 = vmul.f32 %v1049, 0.16666667
      %v1053 = vmul.f32 %v1050, 0.16666667
      %v1054 = vmul.f32 %v1051, 0.16666667
      %v1055 = vld [vmem:[%s8] sm:$0xff]
      %v1056 = vld [vmem:[%s8 + $0x8] sm:$0xff]
      %vm1057 = vcmask 130048
      %v1059 = vsel %vm1057, %v1052, 0
      %v1062 = vsel %vm1057, %v1053, 0
      %v1065 = vsel %vm1057, %v1054, 0
      %1067 = vmatprep.subr.mxu0 0.0
      %1068 = vmatpush1.msra.mxu0 %v1055
      %1069 = vmatprep.subr.mxu0 0.0
      %1070 = vmatpush1.msra.mxu0 %v1056
      %1071 = vmatprep.subr.mxu0 0.0
      %1072 = vmatpush1.msra.mxu0 0.0
      %1073 = vmatprep.subr.mxu0 0.0
      %1074 = vmatpush1.msra.mxu0 0.0
      %1075 = vmatprep.subr.mxu0 0.0
      %1076 = vmatpush1.msra.mxu0 0.0
      %1077 = vmatprep.subr.mxu0 0.0
      %1078 = vmatpush1.msra.mxu0 0.0
      %1079 = vmatprep.subr.mxu0 0.0
      %1080 = vmatpush1.msra.mxu0 0.0
      %1081 = vmatprep.subr.mxu0 0.0
      %1082 = vmatpush1.msra.mxu0 0.0
      %1083 = vmatprep.subr.mxu0 0.0
      %1084 = vmatpush1.msra.mxu0 0.0
      %1085 = vmatprep.subr.mxu0 0.0
      %1086 = vmatpush1.msra.mxu0 0.0
      %1087 = vmatprep.subr.mxu0 0.0
      %1088 = vmatpush1.msra.mxu0 0.0
      %1089 = vmatprep.subr.mxu0 0.0
      %1090 = vmatpush1.msra.mxu0 0.0
      %1091 = vmatprep.subr.mxu0 0.0
      %1092 = vmatpush1.msra.mxu0 0.0
      %1093 = vmatprep.subr.mxu0 0.0
      %1094 = vmatpush1.msra.mxu0 0.0
      %1095 = vmatprep.subr.mxu0 0.0
      %1096 = vmatpush1.msra.mxu0 0.0
      %1097 = vmatprep.subr.mxu0 0.0
      %1098 = vmatpush1.msra.mxu0 0.0
      %1099 = vmatprep.subr.mxu0 0.0
      %1100 = vmatpush1.msra.mxu0 0.0
      %1101 = vmatprep.subr.mxu0 0.0
      %1102 = vmatpush1.msra.mxu0 0.0
      %1103 = vmatprep.subr.mxu0 0.0
      %1104 = vmatpush1.msra.mxu0 0.0
      %1105 = vmatprep.subr.mxu0 0.0
      %1106 = vmatpush1.msra.mxu0 0.0
      %1107 = vmatprep.subr.mxu0 0.0
      %1108 = vmatpush1.msra.mxu0 0.0
      %1109 = vmatprep.subr.mxu0 0.0
      %1110 = vmatpush1.msra.mxu0 0.0
      %1111 = vmatprep.subr.mxu0 0.0
      %1112 = vmatpush1.msra.mxu0 0.0
      %1113 = vmatprep.subr.mxu0 0.0
      %1114 = vmatpush1.msra.mxu0 0.0
      %1115 = vmatprep.subr.mxu0 0.0
      %1116 = vmatpush1.msra.mxu0 0.0
      %1117 = vmatprep.subr.mxu0 0.0
      %1118 = vmatpush1.msra.mxu0 0.0
      %1119 = vmatprep.subr.mxu0 0.0
      %1120 = vmatpush1.msra.mxu0 0.0
      %1121 = vmatprep.subr.mxu0 0.0
      %1122 = vmatpush1.msra.mxu0 0.0
      %1123 = vmatprep.subr.mxu0 0.0
      %1124 = vmatpush1.msra.mxu0 0.0
      %1125 = vmatprep.subr.mxu0 0.0
      %1126 = vmatpush1.msra.mxu0 0.0
      %1127 = vmatprep.subr.mxu0 0.0
      %1128 = vmatpush1.msra.mxu0 0.0
      %1129 = vmatprep.subr.mxu0 0.0
      %1130 = vmatpush1.msra.mxu0 0.0
      %1131 = vmatprep.mubr.f32.mxu0 0.0
      %1132 = vmatmul.mubr.f32.gmra.mrb[0].mxu0 %v1059
      %v1133 = vpop.f32.mrb[0].mxu0
      %v1134 = vadd.f32 0.0, %v1133
      %v1135 = vpop.f32.mrb[0].mxu0
      %1136 = vmatprep.mubr.f32.mxu0 0.0
      %1137 = vmatmul.mubr.f32.gmra.mrb[0].mxu0 %v1062
      %v1138 = vpop.f32.mrb[0].mxu0
      %v1139 = vadd.f32 0.0, %v1138
      %v1140 = vpop.f32.mrb[0].mxu0
      %1141 = vmatprep.mubr.f32.mxu0 0.0
      %1142 = vmatmul.mubr.f32.gmra.mrb[0].mxu0 %v1065
      %v1143 = vpop.f32.mrb[0].mxu0
      %v1144 = vadd.f32 0.0, %v1143
      %v1145 = vpop.f32.mrb[0].mxu0
      %1146 = vdwg.mxu0
      %v1147 = vadd.f32 %v1134, 3.0
      %v1148 = vadd.f32 %v1139, 3.0
      %v1149 = vadd.f32 %v1144, 3.0
      %v1150 = vmax.f32 %v1147, 0.0
      %v1151 = vmax.f32 %v1148, 0.0
      %v1152 = vmax.f32 %v1149, 0.0
      %v1153 = vmin.f32 %v1150, 6.0
      %v1154 = vmin.f32 %v1151, 6.0
      %v1155 = vmin.f32 %v1152, 6.0
      %v1156 = vmul.f32 %v1153, 0.16666667
      %v1157 = vmul.f32 %v1154, 0.16666667
      %v1158 = vmul.f32 %v1155, 0.16666667
      %v1159 = vmul.f32 %v1134, %v1156
      %v1160 = vmul.f32 %v1139, %v1157
      %v1161 = vmul.f32 %v1144, %v1158
      %v1162 = vld [vmem:[%s9] sm:$0xff]
      %v1163 = vld [vmem:[%s9 + $0x8] sm:$0x3]
      %vm1164 = vcmask 80896
      %v1166 = vsel %vm1164, %v1159, 0
      %v1169 = vsel %vm1164, %v1160, 0
      %v1172 = vsel %vm1164, %v1161, 0
      %vm1174 = vcmask 1041408
      %v1176 = vsel %vm1174, %v1163, 0
      %1178 = vmatprep.subr.mxu0 0.0
      %1179 = vmatpush1.msra.mxu0 %v1162
      %1180 = vmatprep.subr.mxu0 0.0
      %1181 = vmatpush1.msra.mxu0 %v1176
      %1182 = vmatprep.subr.mxu0 0.0
      %1183 = vmatpush1.msra.mxu0 0.0
      %1184 = vmatprep.subr.mxu0 0.0
      %1185 = vmatpush1.msra.mxu0 0.0
      %1186 = vmatprep.subr.mxu0 0.0
      %1187 = vmatpush1.msra.mxu0 0.0
      %1188 = vmatprep.subr.mxu0 0.0
      %1189 = vmatpush1.msra.mxu0 0.0
      %1190 = vmatprep.subr.mxu0 0.0
      %1191 = vmatpush1.msra.mxu0 0.0
      %1192 = vmatprep.subr.mxu0 0.0
      %1193 = vmatpush1.msra.mxu0 0.0
      %1194 = vmatprep.subr.mxu0 0.0
      %1195 = vmatpush1.msra.mxu0 0.0
      %1196 = vmatprep.subr.mxu0 0.0
      %1197 = vmatpush1.msra.mxu0 0.0
      %1198 = vmatprep.subr.mxu0 0.0
      %1199 = vmatpush1.msra.mxu0 0.0
      %1200 = vmatprep.subr.mxu0 0.0
      %1201 = vmatpush1.msra.mxu0 0.0
      %1202 = vmatprep.subr.mxu0 0.0
      %1203 = vmatpush1.msra.mxu0 0.0
      %1204 = vmatprep.subr.mxu0 0.0
      %1205 = vmatpush1.msra.mxu0 0.0
      %1206 = vmatprep.subr.mxu0 0.0
      %1207 = vmatpush1.msra.mxu0 0.0
      %1208 = vmatprep.subr.mxu0 0.0
      %1209 = vmatpush1.msra.mxu0 0.0
      %1210 = vmatprep.subr.mxu0 0.0
      %1211 = vmatpush1.msra.mxu0 0.0
      %1212 = vmatprep.subr.mxu0 0.0
      %1213 = vmatpush1.msra.mxu0 0.0
      %1214 = vmatprep.subr.mxu0 0.0
      %1215 = vmatpush1.msra.mxu0 0.0
      %1216 = vmatprep.subr.mxu0 0.0
      %1217 = vmatpush1.msra.mxu0 0.0
      %1218 = vmatprep.subr.mxu0 0.0
      %1219 = vmatpush1.msra.mxu0 0.0
      %1220 = vmatprep.subr.mxu0 0.0
      %1221 = vmatpush1.msra.mxu0 0.0
      %1222 = vmatprep.subr.mxu0 0.0
      %1223 = vmatpush1.msra.mxu0 0.0
      %1224 = vmatprep.subr.mxu0 0.0
      %1225 = vmatpush1.msra.mxu0 0.0
      %1226 = vmatprep.subr.mxu0 0.0
      %1227 = vmatpush1.msra.mxu0 0.0
      %1228 = vmatprep.subr.mxu0 0.0
      %1229 = vmatpush1.msra.mxu0 0.0
      %1230 = vmatprep.subr.mxu0 0.0
      %1231 = vmatpush1.msra.mxu0 0.0
      %1232 = vmatprep.subr.mxu0 0.0
      %1233 = vmatpush1.msra.mxu0 0.0
      %1234 = vmatprep.subr.mxu0 0.0
      %1235 = vmatpush1.msra.mxu0 0.0
      %1236 = vmatprep.subr.mxu0 0.0
      %1237 = vmatpush1.msra.mxu0 0.0
      %1238 = vmatprep.subr.mxu0 0.0
      %1239 = vmatpush1.msra.mxu0 0.0
      %1240 = vmatprep.subr.mxu0 0.0
      %1241 = vmatpush1.msra.mxu0 0.0
      %1242 = vmatprep.mubr.f32.mxu0 0.0
      %1243 = vmatmul.mubr.f32.gmra.mrb[0].mxu0 %v1166
      %v1244 = vpop.f32.mrb[0].mxu0
      %v1245 = vadd.f32 0.0, %v1244
      %v1246 = vpop.f32.mrb[0].mxu0
      %1247 = vmatprep.mubr.f32.mxu0 0.0
      %1248 = vmatmul.mubr.f32.gmra.mrb[0].mxu0 %v1169
      %v1249 = vpop.f32.mrb[0].mxu0
      %v1250 = vadd.f32 0.0, %v1249
      %v1251 = vpop.f32.mrb[0].mxu0
      %1252 = vmatprep.mubr.f32.mxu0 0.0
      %1253 = vmatmul.mubr.f32.gmra.mrb[0].mxu0 %v1172
      %v1254 = vpop.f32.mrb[0].mxu0
      %v1255 = vadd.f32 0.0, %v1254
      %v1256 = vpop.f32.mrb[0].mxu0
      %1257 = vdwg.mxu0
      %v1258 = vmax.f32 %v1245, 0.0
      %v1259 = vmax.f32 %v1250, 0.0
      %v1260 = vmax.f32 %v1255, 0.0
      %v1261 = vld [vmem:[%s11] sm:$0xff]
      %v1262 = vld [vmem:[%s11 + $0x8] sm:$0x7f]
      %v1263 = vld [vmem:[%s10] sm:$0xff]
      %v1264 = vld [vmem:[%s10 + $0x8] sm:$0xf]
      %vm1265 = vcmask 195584
      %v1267 = vsel %vm1265, %v1263, 0
      %v1270 = vsel %vm1265, %v1264, 0
      %1272 = vmatprep.subr.mxu0 0.0
      %1273 = vmatpush1.msra.mxu0 %v1258
      %1274 = vmatprep.subr.mxu0 0.0
      %1275 = vmatpush1.msra.mxu0 %v1259
      %1276 = vmatprep.subr.mxu0 0.0
      %1277 = vmatpush1.msra.mxu0 %v1260
      %1278 = vmatprep.subr.mxu0 0.0
      %1279 = vmatpush1.msra.mxu0 0.0
      %1280 = vmatprep.subr.mxu0 0.0
      %1281 = vmatpush1.msra.mxu0 0.0
      %1282 = vmatprep.subr.mxu0 0.0
      %1283 = vmatpush1.msra.mxu0 0.0
      %1284 = vmatprep.subr.mxu0 0.0
      %1285 = vmatpush1.msra.mxu0 0.0
      %1286 = vmatprep.subr.mxu0 0.0
      %1287 = vmatpush1.msra.mxu0 0.0
      %1288 = vmatprep.subr.mxu0 0.0
      %1289 = vmatpush1.msra.mxu0 0.0
      %1290 = vmatprep.subr.mxu0 0.0
      %1291 = vmatpush1.msra.mxu0 0.0
      %1292 = vmatprep.subr.mxu0 0.0
      %1293 = vmatpush1.msra.mxu0 0.0
      %1294 = vmatprep.subr.mxu0 0.0
      %1295 = vmatpush1.msra.mxu0 0.0
      %1296 = vmatprep.subr.mxu0 0.0
      %1297 = vmatpush1.msra.mxu0 0.0
      %1298 = vmatprep.subr.mxu0 0.0
      %1299 = vmatpush1.msra.mxu0 0.0
      %1300 = vmatprep.subr.mxu0 0.0
      %1301 = vmatpush1.msra.mxu0 0.0
      %1302 = vmatprep.subr.mxu0 0.0
      %1303 = vmatpush1.msra.mxu0 0.0
      %1304 = vmatprep.subr.mxu0 0.0
      %1305 = vmatpush1.msra.mxu0 0.0
      %1306 = vmatprep.subr.mxu0 0.0
      %1307 = vmatpush1.msra.mxu0 0.0
      %1308 = vmatprep.subr.mxu0 0.0
      %1309 = vmatpush1.msra.mxu0 0.0
      %1310 = vmatprep.subr.mxu0 0.0
      %1311 = vmatpush1.msra.mxu0 0.0
      %1312 = vmatprep.subr.mxu0 0.0
      %1313 = vmatpush1.msra.mxu0 0.0
      %1314 = vmatprep.subr.mxu0 0.0
      %1315 = vmatpush1.msra.mxu0 0.0
      %1316 = vmatprep.subr.mxu0 0.0
      %1317 = vmatpush1.msra.mxu0 0.0
      %1318 = vmatprep.subr.mxu0 0.0
      %1319 = vmatpush1.msra.mxu0 0.0
      %1320 = vmatprep.subr.mxu0 0.0
      %1321 = vmatpush1.msra.mxu0 0.0
      %1322 = vmatprep.subr.mxu0 0.0
      %1323 = vmatpush1.msra.mxu0 0.0
      %1324 = vmatprep.subr.mxu0 0.0
      %1325 = vmatpush1.msra.mxu0 0.0
      %1326 = vmatprep.subr.mxu0 0.0
      %1327 = vmatpush1.msra.mxu0 0.0
      %1328 = vmatprep.subr.mxu0 0.0
      %1329 = vmatpush1.msra.mxu0 0.0
      %1330 = vmatprep.subr.mxu0 0.0
      %1331 = vmatpush1.msra.mxu0 0.0
      %1332 = vmatprep.subr.mxu0 0.0
      %1333 = vmatpush1.msra.mxu0 0.0
      %1334 = vmatprep.subr.mxu0 0.0
      %1335 = vmatpush1.msra.mxu0 0.0
      %1336 = vmatprep.mubr.f32.mxu0 0.0
      %1337 = vmatmul.mubr.f32.gmra.mrb[0].mxu0 %v1267
      %v1338 = vpop.f32.mrb[0].mxu0
      %v1339 = vadd.f32 0.0, %v1338
      %v1340 = vpop.f32.mrb[0].mxu0
      %1341 = vmatprep.mubr.f32.mxu0 0.0
      %1342 = vmatmul.mubr.f32.gmra.mrb[0].mxu0 %v1270
      %v1343 = vpop.f32.mrb[0].mxu0
      %v1344 = vadd.f32 0.0, %v1343
      %v1345 = vpop.f32.mrb[0].mxu0
      %1346 = vdwg.mxu0
      %v1347 = vlaneseq
      %v1348 = vshrl.u32 %v1347, 7
      %v1349 = vsub.s32 0, %v1348
      %v1350 = vrot.slane %v1261, %v1349
      %v1351 = vmul.f32 %v1339, %v1350
      %v1352 = vmul.f32 %v1344, %v1350
      %v1353 = vadd.f32 %v1351, 0.0
      %v1354 = vadd.f32 %v1352, 0.0
      %s1355 = scalar_lea.vmem %s10, 16
      %v1356 = vld [vmem:[%s1355] sm:$0xff]
      %v1357 = vld [vmem:[%s1355 + $0x8] sm:$0xf]
      %v1359 = vsel %vm1265, %v1356, 0
      %v1362 = vsel %vm1265, %v1357, 0
      %1364 = vmatprep.subr.mxu0 0.0
      %1365 = vmatpush1.msra.mxu0 %v1258
      %1366 = vmatprep.subr.mxu0 0.0
      %1367 = vmatpush1.msra.mxu0 %v1259
      %1368 = vmatprep.subr.mxu0 0.0
      %1369 = vmatpush1.msra.mxu0 %v1260
      %1370 = vmatprep.subr.mxu0 0.0
      %1371 = vmatpush1.msra.mxu0 0.0
      %1372 = vmatprep.subr.mxu0 0.0
      %1373 = vmatpush1.msra.mxu0 0.0
      %1374 = vmatprep.subr.mxu0 0.0
      %1375 = vmatpush1.msra.mxu0 0.0
      %1376 = vmatprep.subr.mxu0 0.0
      %1377 = vmatpush1.msra.mxu0 0.0
      %1378 = vmatprep.subr.mxu0 0.0
      %1379 = vmatpush1.msra.mxu0 0.0
      %1380 = vmatprep.subr.mxu0 0.0
      %1381 = vmatpush1.msra.mxu0 0.0
      %1382 = vmatprep.subr.mxu0 0.0
      %1383 = vmatpush1.msra.mxu0 0.0
      %1384 = vmatprep.subr.mxu0 0.0
      %1385 = vmatpush1.msra.mxu0 0.0
      %1386 = vmatprep.subr.mxu0 0.0
      %1387 = vmatpush1.msra.mxu0 0.0
      %1388 = vmatprep.subr.mxu0 0.0
      %1389 = vmatpush1.msra.mxu0 0.0
      %1390 = vmatprep.subr.mxu0 0.0
      %1391 = vmatpush1.msra.mxu0 0.0
      %1392 = vmatprep.subr.mxu0 0.0
      %1393 = vmatpush1.msra.mxu0 0.0
      %1394 = vmatprep.subr.mxu0 0.0
      %1395 = vmatpush1.msra.mxu0 0.0
      %1396 = vmatprep.subr.mxu0 0.0
      %1397 = vmatpush1.msra.mxu0 0.0
      %1398 = vmatprep.subr.mxu0 0.0
      %1399 = vmatpush1.msra.mxu0 0.0
      %1400 = vmatprep.subr.mxu0 0.0
      %1401 = vmatpush1.msra.mxu0 0.0
      %1402 = vmatprep.subr.mxu0 0.0
      %1403 = vmatpush1.msra.mxu0 0.0
      %1404 = vmatprep.subr.mxu0 0.0
      %1405 = vmatpush1.msra.mxu0 0.0
      %1406 = vmatprep.subr.mxu0 0.0
      %1407 = vmatpush1.msra.mxu0 0.0
      %1408 = vmatprep.subr.mxu0 0.0
      %1409 = vmatpush1.msra.mxu0 0.0
      %1410 = vmatprep.subr.mxu0 0.0
      %1411 = vmatpush1.msra.mxu0 0.0
      %1412 = vmatprep.subr.mxu0 0.0
      %1413 = vmatpush1.msra.mxu0 0.0
      %1414 = vmatprep.subr.mxu0 0.0
      %1415 = vmatpush1.msra.mxu0 0.0
      %1416 = vmatprep.subr.mxu0 0.0
      %1417 = vmatpush1.msra.mxu0 0.0
      %1418 = vmatprep.subr.mxu0 0.0
      %1419 = vmatpush1.msra.mxu0 0.0
      %1420 = vmatprep.subr.mxu0 0.0
      %1421 = vmatpush1.msra.mxu0 0.0
      %1422 = vmatprep.subr.mxu0 0.0
      %1423 = vmatpush1.msra.mxu0 0.0
      %1424 = vmatprep.subr.mxu0 0.0
      %1425 = vmatpush1.msra.mxu0 0.0
      %1426 = vmatprep.subr.mxu0 0.0
      %1427 = vmatpush1.msra.mxu0 0.0
      %1428 = vmatprep.mubr.f32.mxu0 0.0
      %1429 = vmatmul.mubr.f32.gmra.mrb[0].mxu0 %v1359
      %v1430 = vpop.f32.mrb[0].mxu0
      %v1431 = vadd.f32 0.0, %v1430
      %v1432 = vpop.f32.mrb[0].mxu0
      %1433 = vmatprep.mubr.f32.mxu0 0.0
      %1434 = vmatmul.mubr.f32.gmra.mrb[0].mxu0 %v1362
      %v1435 = vpop.f32.mrb[0].mxu0
      %v1436 = vadd.f32 0.0, %v1435
      %v1437 = vpop.f32.mrb[0].mxu0
      %1438 = vdwg.mxu0
      %v1439 = vlaneseq
      %v1440 = vshrl.u32 %v1439, 7
      %v1441 = vsub.s32 1, %v1440
      %v1442 = vrot.slane %v1261, %v1441
      %v1443 = vmul.f32 %v1431, %v1442
      %v1444 = vmul.f32 %v1436, %v1442
      %v1445 = vadd.f32 %v1353, %v1443
      %v1446 = vadd.f32 %v1354, %v1444
      %s1447 = scalar_lea.vmem %s10, 32
      %v1448 = vld [vmem:[%s1447] sm:$0xff]
      %v1449 = vld [vmem:[%s1447 + $0x8] sm:$0xf]
      %v1451 = vsel %vm1265, %v1448, 0
      %v1454 = vsel %vm1265, %v1449, 0
      %1456 = vmatprep.subr.mxu0 0.0
      %1457 = vmatpush1.msra.mxu0 %v1258
      %1458 = vmatprep.subr.mxu0 0.0
      %1459 = vmatpush1.msra.mxu0 %v1259
      %1460 = vmatprep.subr.mxu0 0.0
      %1461 = vmatpush1.msra.mxu0 %v1260
      %1462 = vmatprep.subr.mxu0 0.0
      %1463 = vmatpush1.msra.mxu0 0.0
      %1464 = vmatprep.subr.mxu0 0.0
      %1465 = vmatpush1.msra.mxu0 0.0
      %1466 = vmatprep.subr.mxu0 0.0
      %1467 = vmatpush1.msra.mxu0 0.0
      %1468 = vmatprep.subr.mxu0 0.0
      %1469 = vmatpush1.msra.mxu0 0.0
      %1470 = vmatprep.subr.mxu0 0.0
      %1471 = vmatpush1.msra.mxu0 0.0
      %1472 = vmatprep.subr.mxu0 0.0
      %1473 = vmatpush1.msra.mxu0 0.0
      %1474 = vmatprep.subr.mxu0 0.0
      %1475 = vmatpush1.msra.mxu0 0.0
      %1476 = vmatprep.subr.mxu0 0.0
      %1477 = vmatpush1.msra.mxu0 0.0
      %1478 = vmatprep.subr.mxu0 0.0
      %1479 = vmatpush1.msra.mxu0 0.0
      %1480 = vmatprep.subr.mxu0 0.0
      %1481 = vmatpush1.msra.mxu0 0.0
      %1482 = vmatprep.subr.mxu0 0.0
      %1483 = vmatpush1.msra.mxu0 0.0
      %1484 = vmatprep.subr.mxu0 0.0
      %1485 = vmatpush1.msra.mxu0 0.0
      %1486 = vmatprep.subr.mxu0 0.0
      %1487 = vmatpush1.msra.mxu0 0.0
      %1488 = vmatprep.subr.mxu0 0.0
      %1489 = vmatpush1.msra.mxu0 0.0
      %1490 = vmatprep.subr.mxu0 0.0
      %1491 = vmatpush1.msra.mxu0 0.0
      %1492 = vmatprep.subr.mxu0 0.0
      %1493 = vmatpush1.msra.mxu0 0.0
      %1494 = vmatprep.subr.mxu0 0.0
      %1495 = vmatpush1.msra.mxu0 0.0
      %1496 = vmatprep.subr.mxu0 0.0
      %1497 = vmatpush1.msra.mxu0 0.0
      %1498 = vmatprep.subr.mxu0 0.0
      %1499 = vmatpush1.msra.mxu0 0.0
      %1500 = vmatprep.subr.mxu0 0.0
      %1501 = vmatpush1.msra.mxu0 0.0
      %1502 = vmatprep.subr.mxu0 0.0
      %1503 = vmatpush1.msra.mxu0 0.0
      %1504 = vmatprep.subr.mxu0 0.0
      %1505 = vmatpush1.msra.mxu0 0.0
      %1506 = vmatprep.subr.mxu0 0.0
      %1507 = vmatpush1.msra.mxu0 0.0
      %1508 = vmatprep.subr.mxu0 0.0
      %1509 = vmatpush1.msra.mxu0 0.0
      %1510 = vmatprep.subr.mxu0 0.0
      %1511 = vmatpush1.msra.mxu0 0.0
      %1512 = vmatprep.subr.mxu0 0.0
      %1513 = vmatpush1.msra.mxu0 0.0
      %1514 = vmatprep.subr.mxu0 0.0
      %1515 = vmatpush1.msra.mxu0 0.0
      %1516 = vmatprep.subr.mxu0 0.0
      %1517 = vmatpush1.msra.mxu0 0.0
      %1518 = vmatprep.subr.mxu0 0.0
      %1519 = vmatpush1.msra.mxu0 0.0
      %1520 = vmatprep.mubr.f32.mxu0 0.0
      %1521 = vmatmul.mubr.f32.gmra.mrb[0].mxu0 %v1451
      %v1522 = vpop.f32.mrb[0].mxu0
      %v1523 = vadd.f32 0.0, %v1522
      %v1524 = vpop.f32.mrb[0].mxu0
      %1525 = vmatprep.mubr.f32.mxu0 0.0
      %1526 = vmatmul.mubr.f32.gmra.mrb[0].mxu0 %v1454
      %v1527 = vpop.f32.mrb[0].mxu0
      %v1528 = vadd.f32 0.0, %v1527
      %v1529 = vpop.f32.mrb[0].mxu0
      %1530 = vdwg.mxu0
      %v1531 = vlaneseq
      %v1532 = vshrl.u32 %v1531, 7
      %v1533 = vsub.s32 2, %v1532
      %v1534 = vrot.slane %v1261, %v1533
      %v1535 = vmul.f32 %v1523, %v1534
      %v1536 = vmul.f32 %v1528, %v1534
      %v1537 = vadd.f32 %v1445, %v1535
      %v1538 = vadd.f32 %v1446, %v1536
      %s1539 = scalar_lea.vmem %s10, 48
      %v1540 = vld [vmem:[%s1539] sm:$0xff]
      %v1541 = vld [vmem:[%s1539 + $0x8] sm:$0xf]
      %v1543 = vsel %vm1265, %v1540, 0
      %v1546 = vsel %vm1265, %v1541, 0
      %1548 = vmatprep.subr.mxu0 0.0
      %1549 = vmatpush1.msra.mxu0 %v1258
      %1550 = vmatprep.subr.mxu0 0.0
      %1551 = vmatpush1.msra.mxu0 %v1259
      %1552 = vmatprep.subr.mxu0 0.0
      %1553 = vmatpush1.msra.mxu0 %v1260
      %1554 = vmatprep.subr.mxu0 0.0
      %1555 = vmatpush1.msra.mxu0 0.0
      %1556 = vmatprep.subr.mxu0 0.0
      %1557 = vmatpush1.msra.mxu0 0.0
      %1558 = vmatprep.subr.mxu0 0.0
      %1559 = vmatpush1.msra.mxu0 0.0
      %1560 = vmatprep.subr.mxu0 0.0
      %1561 = vmatpush1.msra.mxu0 0.0
      %1562 = vmatprep.subr.mxu0 0.0
      %1563 = vmatpush1.msra.mxu0 0.0
      %1564 = vmatprep.subr.mxu0 0.0
      %1565 = vmatpush1.msra.mxu0 0.0
      %1566 = vmatprep.subr.mxu0 0.0
      %1567 = vmatpush1.msra.mxu0 0.0
      %1568 = vmatprep.subr.mxu0 0.0
      %1569 = vmatpush1.msra.mxu0 0.0
      %1570 = vmatprep.subr.mxu0 0.0
      %1571 = vmatpush1.msra.mxu0 0.0
      %1572 = vmatprep.subr.mxu0 0.0
      %1573 = vmatpush1.msra.mxu0 0.0
      %1574 = vmatprep.subr.mxu0 0.0
      %1575 = vmatpush1.msra.mxu0 0.0
      %1576 = vmatprep.subr.mxu0 0.0
      %1577 = vmatpush1.msra.mxu0 0.0
      %1578 = vmatprep.subr.mxu0 0.0
      %1579 = vmatpush1.msra.mxu0 0.0
      %1580 = vmatprep.subr.mxu0 0.0
      %1581 = vmatpush1.msra.mxu0 0.0
      %1582 = vmatprep.subr.mxu0 0.0
      %1583 = vmatpush1.msra.mxu0 0.0
      %1584 = vmatprep.subr.mxu0 0.0
      %1585 = vmatpush1.msra.mxu0 0.0
      %1586 = vmatprep.subr.mxu0 0.0
      %1587 = vmatpush1.msra.mxu0 0.0
      %1588 = vmatprep.subr.mxu0 0.0
      %1589 = vmatpush1.msra.mxu0 0.0
      %1590 = vmatprep.subr.mxu0 0.0
      %1591 = vmatpush1.msra.mxu0 0.0
      %1592 = vmatprep.subr.mxu0 0.0
      %1593 = vmatpush1.msra.mxu0 0.0
      %1594 = vmatprep.subr.mxu0 0.0
      %1595 = vmatpush1.msra.mxu0 0.0
      %1596 = vmatprep.subr.mxu0 0.0
      %1597 = vmatpush1.msra.mxu0 0.0
      %1598 = vmatprep.subr.mxu0 0.0
      %1599 = vmatpush1.msra.mxu0 0.0
      %1600 = vmatprep.subr.mxu0 0.0
      %1601 = vmatpush1.msra.mxu0 0.0
      %1602 = vmatprep.subr.mxu0 0.0
      %1603 = vmatpush1.msra.mxu0 0.0
      %1604 = vmatprep.subr.mxu0 0.0
      %1605 = vmatpush1.msra.mxu0 0.0
      %1606 = vmatprep.subr.mxu0 0.0
      %1607 = vmatpush1.msra.mxu0 0.0
      %1608 = vmatprep.subr.mxu0 0.0
      %1609 = vmatpush1.msra.mxu0 0.0
      %1610 = vmatprep.subr.mxu0 0.0
      %1611 = vmatpush1.msra.mxu0 0.0
      %1612 = vmatprep.mubr.f32.mxu0 0.0
      %1613 = vmatmul.mubr.f32.gmra.mrb[0].mxu0 %v1543
      %v1614 = vpop.f32.mrb[0].mxu0
      %v1615 = vadd.f32 0.0, %v1614
      %v1616 = vpop.f32.mrb[0].mxu0
      %1617 = vmatprep.mubr.f32.mxu0 0.0
      %1618 = vmatmul.mubr.f32.gmra.mrb[0].mxu0 %v1546
      %v1619 = vpop.f32.mrb[0].mxu0
      %v1620 = vadd.f32 0.0, %v1619
      %v1621 = vpop.f32.mrb[0].mxu0
      %1622 = vdwg.mxu0
      %v1623 = vlaneseq
      %v1624 = vshrl.u32 %v1623, 7
      %v1625 = vsub.s32 3, %v1624
      %v1626 = vrot.slane %v1261, %v1625
      %v1627 = vmul.f32 %v1615, %v1626
      %v1628 = vmul.f32 %v1620, %v1626
      %v1629 = vadd.f32 %v1537, %v1627
      %v1630 = vadd.f32 %v1538, %v1628
      %s1631 = scalar_lea.vmem %s10, 64
      %v1632 = vld [vmem:[%s1631] sm:$0xff]
      %v1633 = vld [vmem:[%s1631 + $0x8] sm:$0xf]
      %v1635 = vsel %vm1265, %v1632, 0
      %v1638 = vsel %vm1265, %v1633, 0
      %1640 = vmatprep.subr.mxu0 0.0
      %1641 = vmatpush1.msra.mxu0 %v1258
      %1642 = vmatprep.subr.mxu0 0.0
      %1643 = vmatpush1.msra.mxu0 %v1259
      %1644 = vmatprep.subr.mxu0 0.0
      %1645 = vmatpush1.msra.mxu0 %v1260
      %1646 = vmatprep.subr.mxu0 0.0
      %1647 = vmatpush1.msra.mxu0 0.0
      %1648 = vmatprep.subr.mxu0 0.0
      %1649 = vmatpush1.msra.mxu0 0.0
      %1650 = vmatprep.subr.mxu0 0.0
      %1651 = vmatpush1.msra.mxu0 0.0
      %1652 = vmatprep.subr.mxu0 0.0
      %1653 = vmatpush1.msra.mxu0 0.0
      %1654 = vmatprep.subr.mxu0 0.0
      %1655 = vmatpush1.msra.mxu0 0.0
      %1656 = vmatprep.subr.mxu0 0.0
      %1657 = vmatpush1.msra.mxu0 0.0
      %1658 = vmatprep.subr.mxu0 0.0
      %1659 = vmatpush1.msra.mxu0 0.0
      %1660 = vmatprep.subr.mxu0 0.0
      %1661 = vmatpush1.msra.mxu0 0.0
      %1662 = vmatprep.subr.mxu0 0.0
      %1663 = vmatpush1.msra.mxu0 0.0
      %1664 = vmatprep.subr.mxu0 0.0
      %1665 = vmatpush1.msra.mxu0 0.0
      %1666 = vmatprep.subr.mxu0 0.0
      %1667 = vmatpush1.msra.mxu0 0.0
      %1668 = vmatprep.subr.mxu0 0.0
      %1669 = vmatpush1.msra.mxu0 0.0
      %1670 = vmatprep.subr.mxu0 0.0
      %1671 = vmatpush1.msra.mxu0 0.0
      %1672 = vmatprep.subr.mxu0 0.0
      %1673 = vmatpush1.msra.mxu0 0.0
      %1674 = vmatprep.subr.mxu0 0.0
      %1675 = vmatpush1.msra.mxu0 0.0
      %1676 = vmatprep.subr.mxu0 0.0
      %1677 = vmatpush1.msra.mxu0 0.0
      %1678 = vmatprep.subr.mxu0 0.0
      %1679 = vmatpush1.msra.mxu0 0.0
      %1680 = vmatprep.subr.mxu0 0.0
      %1681 = vmatpush1.msra.mxu0 0.0
      %1682 = vmatprep.subr.mxu0 0.0
      %1683 = vmatpush1.msra.mxu0 0.0
      %1684 = vmatprep.subr.mxu0 0.0
      %1685 = vmatpush1.msra.mxu0 0.0
      %1686 = vmatprep.subr.mxu0 0.0
      %1687 = vmatpush1.msra.mxu0 0.0
      %1688 = vmatprep.subr.mxu0 0.0
      %1689 = vmatpush1.msra.mxu0 0.0
      %1690 = vmatprep.subr.mxu0 0.0
      %1691 = vmatpush1.msra.mxu0 0.0
      %1692 = vmatprep.subr.mxu0 0.0
      %1693 = vmatpush1.msra.mxu0 0.0
      %1694 = vmatprep.subr.mxu0 0.0
      %1695 = vmatpush1.msra.mxu0 0.0
      %1696 = vmatprep.subr.mxu0 0.0
      %1697 = vmatpush1.msra.mxu0 0.0
      %1698 = vmatprep.subr.mxu0 0.0
      %1699 = vmatpush1.msra.mxu0 0.0
      %1700 = vmatprep.subr.mxu0 0.0
      %1701 = vmatpush1.msra.mxu0 0.0
      %1702 = vmatprep.subr.mxu0 0.0
      %1703 = vmatpush1.msra.mxu0 0.0
      %1704 = vmatprep.mubr.f32.mxu0 0.0
      %1705 = vmatmul.mubr.f32.gmra.mrb[0].mxu0 %v1635
      %v1706 = vpop.f32.mrb[0].mxu0
      %v1707 = vadd.f32 0.0, %v1706
      %v1708 = vpop.f32.mrb[0].mxu0
      %1709 = vmatprep.mubr.f32.mxu0 0.0
      %1710 = vmatmul.mubr.f32.gmra.mrb[0].mxu0 %v1638
      %v1711 = vpop.f32.mrb[0].mxu0
      %v1712 = vadd.f32 0.0, %v1711
      %v1713 = vpop.f32.mrb[0].mxu0
      %1714 = vdwg.mxu0
      %v1715 = vlaneseq
      %v1716 = vshrl.u32 %v1715, 7
      %v1717 = vsub.s32 4, %v1716
      %v1718 = vrot.slane %v1261, %v1717
      %v1719 = vmul.f32 %v1707, %v1718
      %v1720 = vmul.f32 %v1712, %v1718
      %v1721 = vadd.f32 %v1629, %v1719
      %v1722 = vadd.f32 %v1630, %v1720
      %s1723 = scalar_lea.vmem %s10, 80
      %v1724 = vld [vmem:[%s1723] sm:$0xff]
      %v1725 = vld [vmem:[%s1723 + $0x8] sm:$0xf]
      %v1727 = vsel %vm1265, %v1724, 0
      %v1730 = vsel %vm1265, %v1725, 0
      %1732 = vmatprep.subr.mxu0 0.0
      %1733 = vmatpush1.msra.mxu0 %v1258
      %1734 = vmatprep.subr.mxu0 0.0
      %1735 = vmatpush1.msra.mxu0 %v1259
      %1736 = vmatprep.subr.mxu0 0.0
      %1737 = vmatpush1.msra.mxu0 %v1260
      %1738 = vmatprep.subr.mxu0 0.0
      %1739 = vmatpush1.msra.mxu0 0.0
      %1740 = vmatprep.subr.mxu0 0.0
      %1741 = vmatpush1.msra.mxu0 0.0
      %1742 = vmatprep.subr.mxu0 0.0
      %1743 = vmatpush1.msra.mxu0 0.0
      %1744 = vmatprep.subr.mxu0 0.0
      %1745 = vmatpush1.msra.mxu0 0.0
      %1746 = vmatprep.subr.mxu0 0.0
      %1747 = vmatpush1.msra.mxu0 0.0
      %1748 = vmatprep.subr.mxu0 0.0
      %1749 = vmatpush1.msra.mxu0 0.0
      %1750 = vmatprep.subr.mxu0 0.0
      %1751 = vmatpush1.msra.mxu0 0.0
      %1752 = vmatprep.subr.mxu0 0.0
      %1753 = vmatpush1.msra.mxu0 0.0
      %1754 = vmatprep.subr.mxu0 0.0
      %1755 = vmatpush1.msra.mxu0 0.0
      %1756 = vmatprep.subr.mxu0 0.0
      %1757 = vmatpush1.msra.mxu0 0.0
      %1758 = vmatprep.subr.mxu0 0.0
      %1759 = vmatpush1.msra.mxu0 0.0
      %1760 = vmatprep.subr.mxu0 0.0
      %1761 = vmatpush1.msra.mxu0 0.0
      %1762 = vmatprep.subr.mxu0 0.0
      %1763 = vmatpush1.msra.mxu0 0.0
      %1764 = vmatprep.subr.mxu0 0.0
      %1765 = vmatpush1.msra.mxu0 0.0
      %1766 = vmatprep.subr.mxu0 0.0
      %1767 = vmatpush1.msra.mxu0 0.0
      %1768 = vmatprep.subr.mxu0 0.0
      %1769 = vmatpush1.msra.mxu0 0.0
      %1770 = vmatprep.subr.mxu0 0.0
      %1771 = vmatpush1.msra.mxu0 0.0
      %1772 = vmatprep.subr.mxu0 0.0
      %1773 = vmatpush1.msra.mxu0 0.0
      %1774 = vmatprep.subr.mxu0 0.0
      %1775 = vmatpush1.msra.mxu0 0.0
      %1776 = vmatprep.subr.mxu0 0.0
      %1777 = vmatpush1.msra.mxu0 0.0
      %1778 = vmatprep.subr.mxu0 0.0
      %1779 = vmatpush1.msra.mxu0 0.0
      %1780 = vmatprep.subr.mxu0 0.0
      %1781 = vmatpush1.msra.mxu0 0.0
      %1782 = vmatprep.subr.mxu0 0.0
      %1783 = vmatpush1.msra.mxu0 0.0
      %1784 = vmatprep.subr.mxu0 0.0
      %1785 = vmatpush1.msra.mxu0 0.0
      %1786 = vmatprep.subr.mxu0 0.0
      %1787 = vmatpush1.msra.mxu0 0.0
      %1788 = vmatprep.subr.mxu0 0.0
      %1789 = vmatpush1.msra.mxu0 0.0
      %1790 = vmatprep.subr.mxu0 0.0
      %1791 = vmatpush1.msra.mxu0 0.0
      %1792 = vmatprep.subr.mxu0 0.0
      %1793 = vmatpush1.msra.mxu0 0.0
      %1794 = vmatprep.subr.mxu0 0.0
      %1795 = vmatpush1.msra.mxu0 0.0
      %1796 = vmatprep.mubr.f32.mxu0 0.0
      %1797 = vmatmul.mubr.f32.gmra.mrb[0].mxu0 %v1727
      %v1798 = vpop.f32.mrb[0].mxu0
      %v1799 = vadd.f32 0.0, %v1798
      %v1800 = vpop.f32.mrb[0].mxu0
      %1801 = vmatprep.mubr.f32.mxu0 0.0
      %1802 = vmatmul.mubr.f32.gmra.mrb[0].mxu0 %v1730
      %v1803 = vpop.f32.mrb[0].mxu0
      %v1804 = vadd.f32 0.0, %v1803
      %v1805 = vpop.f32.mrb[0].mxu0
      %1806 = vdwg.mxu0
      %v1807 = vlaneseq
      %v1808 = vshrl.u32 %v1807, 7
      %v1809 = vsub.s32 5, %v1808
      %v1810 = vrot.slane %v1261, %v1809
      %v1811 = vmul.f32 %v1799, %v1810
      %v1812 = vmul.f32 %v1804, %v1810
      %v1813 = vadd.f32 %v1721, %v1811
      %v1814 = vadd.f32 %v1722, %v1812
      %s1815 = scalar_lea.vmem %s10, 96
      %v1816 = vld [vmem:[%s1815] sm:$0xff]
      %v1817 = vld [vmem:[%s1815 + $0x8] sm:$0xf]
      %v1819 = vsel %vm1265, %v1816, 0
      %v1822 = vsel %vm1265, %v1817, 0
      %1824 = vmatprep.subr.mxu0 0.0
      %1825 = vmatpush1.msra.mxu0 %v1258
      %1826 = vmatprep.subr.mxu0 0.0
      %1827 = vmatpush1.msra.mxu0 %v1259
      %1828 = vmatprep.subr.mxu0 0.0
      %1829 = vmatpush1.msra.mxu0 %v1260
      %1830 = vmatprep.subr.mxu0 0.0
      %1831 = vmatpush1.msra.mxu0 0.0
      %1832 = vmatprep.subr.mxu0 0.0
      %1833 = vmatpush1.msra.mxu0 0.0
      %1834 = vmatprep.subr.mxu0 0.0
      %1835 = vmatpush1.msra.mxu0 0.0
      %1836 = vmatprep.subr.mxu0 0.0
      %1837 = vmatpush1.msra.mxu0 0.0
      %1838 = vmatprep.subr.mxu0 0.0
      %1839 = vmatpush1.msra.mxu0 0.0
      %1840 = vmatprep.subr.mxu0 0.0
      %1841 = vmatpush1.msra.mxu0 0.0
      %1842 = vmatprep.subr.mxu0 0.0
      %1843 = vmatpush1.msra.mxu0 0.0
      %1844 = vmatprep.subr.mxu0 0.0
      %1845 = vmatpush1.msra.mxu0 0.0
      %1846 = vmatprep.subr.mxu0 0.0
      %1847 = vmatpush1.msra.mxu0 0.0
      %1848 = vmatprep.subr.mxu0 0.0
      %1849 = vmatpush1.msra.mxu0 0.0
      %1850 = vmatprep.subr.mxu0 0.0
      %1851 = vmatpush1.msra.mxu0 0.0
      %1852 = vmatprep.subr.mxu0 0.0
      %1853 = vmatpush1.msra.mxu0 0.0
      %1854 = vmatprep.subr.mxu0 0.0
      %1855 = vmatpush1.msra.mxu0 0.0
      %1856 = vmatprep.subr.mxu0 0.0
      %1857 = vmatpush1.msra.mxu0 0.0
      %1858 = vmatprep.subr.mxu0 0.0
      %1859 = vmatpush1.msra.mxu0 0.0
      %1860 = vmatprep.subr.mxu0 0.0
      %1861 = vmatpush1.msra.mxu0 0.0
      %1862 = vmatprep.subr.mxu0 0.0
      %1863 = vmatpush1.msra.mxu0 0.0
      %1864 = vmatprep.subr.mxu0 0.0
      %1865 = vmatpush1.msra.mxu0 0.0
      %1866 = vmatprep.subr.mxu0 0.0
      %1867 = vmatpush1.msra.mxu0 0.0
      %1868 = vmatprep.subr.mxu0 0.0
      %1869 = vmatpush1.msra.mxu0 0.0
      %1870 = vmatprep.subr.mxu0 0.0
      %1871 = vmatpush1.msra.mxu0 0.0
      %1872 = vmatprep.subr.mxu0 0.0
      %1873 = vmatpush1.msra.mxu0 0.0
      %1874 = vmatprep.subr.mxu0 0.0
      %1875 = vmatpush1.msra.mxu0 0.0
      %1876 = vmatprep.subr.mxu0 0.0
      %1877 = vmatpush1.msra.mxu0 0.0
      %1878 = vmatprep.subr.mxu0 0.0
      %1879 = vmatpush1.msra.mxu0 0.0
      %1880 = vmatprep.subr.mxu0 0.0
      %1881 = vmatpush1.msra.mxu0 0.0
      %1882 = vmatprep.subr.mxu0 0.0
      %1883 = vmatpush1.msra.mxu0 0.0
      %1884 = vmatprep.subr.mxu0 0.0
      %1885 = vmatpush1.msra.mxu0 0.0
      %1886 = vmatprep.subr.mxu0 0.0
      %1887 = vmatpush1.msra.mxu0 0.0
      %1888 = vmatprep.mubr.f32.mxu0 0.0
      %1889 = vmatmul.mubr.f32.gmra.mrb[0].mxu0 %v1819
      %v1890 = vpop.f32.mrb[0].mxu0
      %v1891 = vadd.f32 0.0, %v1890
      %v1892 = vpop.f32.mrb[0].mxu0
      %1893 = vmatprep.mubr.f32.mxu0 0.0
      %1894 = vmatmul.mubr.f32.gmra.mrb[0].mxu0 %v1822
      %v1895 = vpop.f32.mrb[0].mxu0
      %v1896 = vadd.f32 0.0, %v1895
      %v1897 = vpop.f32.mrb[0].mxu0
      %1898 = vdwg.mxu0
      %v1899 = vlaneseq
      %v1900 = vshrl.u32 %v1899, 7
      %v1901 = vsub.s32 6, %v1900
      %v1902 = vrot.slane %v1261, %v1901
      %v1903 = vmul.f32 %v1891, %v1902
      %v1904 = vmul.f32 %v1896, %v1902
      %v1905 = vadd.f32 %v1813, %v1903
      %v1906 = vadd.f32 %v1814, %v1904
      %s1907 = scalar_lea.vmem %s10, 112
      %v1908 = vld [vmem:[%s1907] sm:$0xff]
      %v1909 = vld [vmem:[%s1907 + $0x8] sm:$0xf]
      %v1911 = vsel %vm1265, %v1908, 0
      %v1914 = vsel %vm1265, %v1909, 0
      %1916 = vmatprep.subr.mxu0 0.0
      %1917 = vmatpush1.msra.mxu0 %v1258
      %1918 = vmatprep.subr.mxu0 0.0
      %1919 = vmatpush1.msra.mxu0 %v1259
      %1920 = vmatprep.subr.mxu0 0.0
      %1921 = vmatpush1.msra.mxu0 %v1260
      %1922 = vmatprep.subr.mxu0 0.0
      %1923 = vmatpush1.msra.mxu0 0.0
      %1924 = vmatprep.subr.mxu0 0.0
      %1925 = vmatpush1.msra.mxu0 0.0
      %1926 = vmatprep.subr.mxu0 0.0
      %1927 = vmatpush1.msra.mxu0 0.0
      %1928 = vmatprep.subr.mxu0 0.0
      %1929 = vmatpush1.msra.mxu0 0.0
      %1930 = vmatprep.subr.mxu0 0.0
      %1931 = vmatpush1.msra.mxu0 0.0
      %1932 = vmatprep.subr.mxu0 0.0
      %1933 = vmatpush1.msra.mxu0 0.0
      %1934 = vmatprep.subr.mxu0 0.0
      %1935 = vmatpush1.msra.mxu0 0.0
      %1936 = vmatprep.subr.mxu0 0.0
      %1937 = vmatpush1.msra.mxu0 0.0
      %1938 = vmatprep.subr.mxu0 0.0
      %1939 = vmatpush1.msra.mxu0 0.0
      %1940 = vmatprep.subr.mxu0 0.0
      %1941 = vmatpush1.msra.mxu0 0.0
      %1942 = vmatprep.subr.mxu0 0.0
      %1943 = vmatpush1.msra.mxu0 0.0
      %1944 = vmatprep.subr.mxu0 0.0
      %1945 = vmatpush1.msra.mxu0 0.0
      %1946 = vmatprep.subr.mxu0 0.0
      %1947 = vmatpush1.msra.mxu0 0.0
      %1948 = vmatprep.subr.mxu0 0.0
      %1949 = vmatpush1.msra.mxu0 0.0
      %1950 = vmatprep.subr.mxu0 0.0
      %1951 = vmatpush1.msra.mxu0 0.0
      %1952 = vmatprep.subr.mxu0 0.0
      %1953 = vmatpush1.msra.mxu0 0.0
      %1954 = vmatprep.subr.mxu0 0.0
      %1955 = vmatpush1.msra.mxu0 0.0
      %1956 = vmatprep.subr.mxu0 0.0
      %1957 = vmatpush1.msra.mxu0 0.0
      %1958 = vmatprep.subr.mxu0 0.0
      %1959 = vmatpush1.msra.mxu0 0.0
      %1960 = vmatprep.subr.mxu0 0.0
      %1961 = vmatpush1.msra.mxu0 0.0
      %1962 = vmatprep.subr.mxu0 0.0
      %1963 = vmatpush1.msra.mxu0 0.0
      %1964 = vmatprep.subr.mxu0 0.0
      %1965 = vmatpush1.msra.mxu0 0.0
      %1966 = vmatprep.subr.mxu0 0.0
      %1967 = vmatpush1.msra.mxu0 0.0
      %1968 = vmatprep.subr.mxu0 0.0
      %1969 = vmatpush1.msra.mxu0 0.0
      %1970 = vmatprep.subr.mxu0 0.0
      %1971 = vmatpush1.msra.mxu0 0.0
      %1972 = vmatprep.subr.mxu0 0.0
      %1973 = vmatpush1.msra.mxu0 0.0
      %1974 = vmatprep.subr.mxu0 0.0
      %1975 = vmatpush1.msra.mxu0 0.0
      %1976 = vmatprep.subr.mxu0 0.0
      %1977 = vmatpush1.msra.mxu0 0.0
      %1978 = vmatprep.subr.mxu0 0.0
      %1979 = vmatpush1.msra.mxu0 0.0
      %1980 = vmatprep.mubr.f32.mxu0 0.0
      %1981 = vmatmul.mubr.f32.gmra.mrb[0].mxu0 %v1911
      %v1982 = vpop.f32.mrb[0].mxu0
      %v1983 = vadd.f32 0.0, %v1982
      %v1984 = vpop.f32.mrb[0].mxu0
      %1985 = vmatprep.mubr.f32.mxu0 0.0
      %1986 = vmatmul.mubr.f32.gmra.mrb[0].mxu0 %v1914
      %v1987 = vpop.f32.mrb[0].mxu0
      %v1988 = vadd.f32 0.0, %v1987
      %v1989 = vpop.f32.mrb[0].mxu0
      %1990 = vdwg.mxu0
      %v1991 = vlaneseq
      %v1992 = vshrl.u32 %v1991, 7
      %v1993 = vsub.s32 7, %v1992
      %v1994 = vrot.slane %v1261, %v1993
      %v1995 = vmul.f32 %v1983, %v1994
      %v1996 = vmul.f32 %v1988, %v1994
      %v1997 = vadd.f32 %v1905, %v1995
      %v1998 = vadd.f32 %v1906, %v1996
      %s1999 = scalar_lea.vmem %s10, 128
      %v2000 = vld [vmem:[%s1999] sm:$0xff]
      %v2001 = vld [vmem:[%s1999 + $0x8] sm:$0xf]
      %v2003 = vsel %vm1265, %v2000, 0
      %v2006 = vsel %vm1265, %v2001, 0
      %2008 = vmatprep.subr.mxu0 0.0
      %2009 = vmatpush1.msra.mxu0 %v1258
      %2010 = vmatprep.subr.mxu0 0.0
      %2011 = vmatpush1.msra.mxu0 %v1259
      %2012 = vmatprep.subr.mxu0 0.0
      %2013 = vmatpush1.msra.mxu0 %v1260
      %2014 = vmatprep.subr.mxu0 0.0
      %2015 = vmatpush1.msra.mxu0 0.0
      %2016 = vmatprep.subr.mxu0 0.0
      %2017 = vmatpush1.msra.mxu0 0.0
      %2018 = vmatprep.subr.mxu0 0.0
      %2019 = vmatpush1.msra.mxu0 0.0
      %2020 = vmatprep.subr.mxu0 0.0
      %2021 = vmatpush1.msra.mxu0 0.0
      %2022 = vmatprep.subr.mxu0 0.0
      %2023 = vmatpush1.msra.mxu0 0.0
      %2024 = vmatprep.subr.mxu0 0.0
      %2025 = vmatpush1.msra.mxu0 0.0
      %2026 = vmatprep.subr.mxu0 0.0
      %2027 = vmatpush1.msra.mxu0 0.0
      %2028 = vmatprep.subr.mxu0 0.0
      %2029 = vmatpush1.msra.mxu0 0.0
      %2030 = vmatprep.subr.mxu0 0.0
      %2031 = vmatpush1.msra.mxu0 0.0
      %2032 = vmatprep.subr.mxu0 0.0
      %2033 = vmatpush1.msra.mxu0 0.0
      %2034 = vmatprep.subr.mxu0 0.0
      %2035 = vmatpush1.msra.mxu0 0.0
      %2036 = vmatprep.subr.mxu0 0.0
      %2037 = vmatpush1.msra.mxu0 0.0
      %2038 = vmatprep.subr.mxu0 0.0
      %2039 = vmatpush1.msra.mxu0 0.0
      %2040 = vmatprep.subr.mxu0 0.0
      %2041 = vmatpush1.msra.mxu0 0.0
      %2042 = vmatprep.subr.mxu0 0.0
      %2043 = vmatpush1.msra.mxu0 0.0
      %2044 = vmatprep.subr.mxu0 0.0
      %2045 = vmatpush1.msra.mxu0 0.0
      %2046 = vmatprep.subr.mxu0 0.0
      %2047 = vmatpush1.msra.mxu0 0.0
      %2048 = vmatprep.subr.mxu0 0.0
      %2049 = vmatpush1.msra.mxu0 0.0
      %2050 = vmatprep.subr.mxu0 0.0
      %2051 = vmatpush1.msra.mxu0 0.0
      %2052 = vmatprep.subr.mxu0 0.0
      %2053 = vmatpush1.msra.mxu0 0.0
      %2054 = vmatprep.subr.mxu0 0.0
      %2055 = vmatpush1.msra.mxu0 0.0
      %2056 = vmatprep.subr.mxu0 0.0
      %2057 = vmatpush1.msra.mxu0 0.0
      %2058 = vmatprep.subr.mxu0 0.0
      %2059 = vmatpush1.msra.mxu0 0.0
      %2060 = vmatprep.subr.mxu0 0.0
      %2061 = vmatpush1.msra.mxu0 0.0
      %2062 = vmatprep.subr.mxu0 0.0
      %2063 = vmatpush1.msra.mxu0 0.0
      %2064 = vmatprep.subr.mxu0 0.0
      %2065 = vmatpush1.msra.mxu0 0.0
      %2066 = vmatprep.subr.mxu0 0.0
      %2067 = vmatpush1.msra.mxu0 0.0
      %2068 = vmatprep.subr.mxu0 0.0
      %2069 = vmatpush1.msra.mxu0 0.0
      %2070 = vmatprep.subr.mxu0 0.0
      %2071 = vmatpush1.msra.mxu0 0.0
      %2072 = vmatprep.mubr.f32.mxu0 0.0
      %2073 = vmatmul.mubr.f32.gmra.mrb[0].mxu0 %v2003
      %v2074 = vpop.f32.mrb[0].mxu0
      %v2075 = vadd.f32 0.0, %v2074
      %v2076 = vpop.f32.mrb[0].mxu0
      %2077 = vmatprep.mubr.f32.mxu0 0.0
      %2078 = vmatmul.mubr.f32.gmra.mrb[0].mxu0 %v2006
      %v2079 = vpop.f32.mrb[0].mxu0
      %v2080 = vadd.f32 0.0, %v2079
      %v2081 = vpop.f32.mrb[0].mxu0
      %2082 = vdwg.mxu0
      %v2083 = vlaneseq
      %v2084 = vshrl.u32 %v2083, 7
      %v2085 = vsub.s32 0, %v2084
      %v2086 = vrot.slane %v1262, %v2085
      %v2087 = vmul.f32 %v2075, %v2086
      %v2088 = vmul.f32 %v2080, %v2086
      %v2089 = vadd.f32 %v1997, %v2087
      %v2090 = vadd.f32 %v1998, %v2088
      %s2091 = scalar_lea.vmem %s10, 144
      %v2092 = vld [vmem:[%s2091] sm:$0xff]
      %v2093 = vld [vmem:[%s2091 + $0x8] sm:$0xf]
      %v2095 = vsel %vm1265, %v2092, 0
      %v2098 = vsel %vm1265, %v2093, 0
      %2100 = vmatprep.subr.mxu0 0.0
      %2101 = vmatpush1.msra.mxu0 %v1258
      %2102 = vmatprep.subr.mxu0 0.0
      %2103 = vmatpush1.msra.mxu0 %v1259
      %2104 = vmatprep.subr.mxu0 0.0
      %2105 = vmatpush1.msra.mxu0 %v1260
      %2106 = vmatprep.subr.mxu0 0.0
      %2107 = vmatpush1.msra.mxu0 0.0
      %2108 = vmatprep.subr.mxu0 0.0
      %2109 = vmatpush1.msra.mxu0 0.0
      %2110 = vmatprep.subr.mxu0 0.0
      %2111 = vmatpush1.msra.mxu0 0.0
      %2112 = vmatprep.subr.mxu0 0.0
      %2113 = vmatpush1.msra.mxu0 0.0
      %2114 = vmatprep.subr.mxu0 0.0
      %2115 = vmatpush1.msra.mxu0 0.0
      %2116 = vmatprep.subr.mxu0 0.0
      %2117 = vmatpush1.msra.mxu0 0.0
      %2118 = vmatprep.subr.mxu0 0.0
      %2119 = vmatpush1.msra.mxu0 0.0
      %2120 = vmatprep.subr.mxu0 0.0
      %2121 = vmatpush1.msra.mxu0 0.0
      %2122 = vmatprep.subr.mxu0 0.0
      %2123 = vmatpush1.msra.mxu0 0.0
      %2124 = vmatprep.subr.mxu0 0.0
      %2125 = vmatpush1.msra.mxu0 0.0
      %2126 = vmatprep.subr.mxu0 0.0
      %2127 = vmatpush1.msra.mxu0 0.0
      %2128 = vmatprep.subr.mxu0 0.0
      %2129 = vmatpush1.msra.mxu0 0.0
      %2130 = vmatprep.subr.mxu0 0.0
      %2131 = vmatpush1.msra.mxu0 0.0
      %2132 = vmatprep.subr.mxu0 0.0
      %2133 = vmatpush1.msra.mxu0 0.0
      %2134 = vmatprep.subr.mxu0 0.0
      %2135 = vmatpush1.msra.mxu0 0.0
      %2136 = vmatprep.subr.mxu0 0.0
      %2137 = vmatpush1.msra.mxu0 0.0
      %2138 = vmatprep.subr.mxu0 0.0
      %2139 = vmatpush1.msra.mxu0 0.0
      %2140 = vmatprep.subr.mxu0 0.0
      %2141 = vmatpush1.msra.mxu0 0.0
      %2142 = vmatprep.subr.mxu0 0.0
      %2143 = vmatpush1.msra.mxu0 0.0
      %2144 = vmatprep.subr.mxu0 0.0
      %2145 = vmatpush1.msra.mxu0 0.0
      %2146 = vmatprep.subr.mxu0 0.0
      %2147 = vmatpush1.msra.mxu0 0.0
      %2148 = vmatprep.subr.mxu0 0.0
      %2149 = vmatpush1.msra.mxu0 0.0
      %2150 = vmatprep.subr.mxu0 0.0
      %2151 = vmatpush1.msra.mxu0 0.0
      %2152 = vmatprep.subr.mxu0 0.0
      %2153 = vmatpush1.msra.mxu0 0.0
      %2154 = vmatprep.subr.mxu0 0.0
      %2155 = vmatpush1.msra.mxu0 0.0
      %2156 = vmatprep.subr.mxu0 0.0
      %2157 = vmatpush1.msra.mxu0 0.0
      %2158 = vmatprep.subr.mxu0 0.0
      %2159 = vmatpush1.msra.mxu0 0.0
      %2160 = vmatprep.subr.mxu0 0.0
      %2161 = vmatpush1.msra.mxu0 0.0
      %2162 = vmatprep.subr.mxu0 0.0
      %2163 = vmatpush1.msra.mxu0 0.0
      %2164 = vmatprep.mubr.f32.mxu0 0.0
      %2165 = vmatmul.mubr.f32.gmra.mrb[0].mxu0 %v2095
      %v2166 = vpop.f32.mrb[0].mxu0
      %v2167 = vadd.f32 0.0, %v2166
      %v2168 = vpop.f32.mrb[0].mxu0
      %2169 = vmatprep.mubr.f32.mxu0 0.0
      %2170 = vmatmul.mubr.f32.gmra.mrb[0].mxu0 %v2098
      %v2171 = vpop.f32.mrb[0].mxu0
      %v2172 = vadd.f32 0.0, %v2171
      %v2173 = vpop.f32.mrb[0].mxu0
      %2174 = vdwg.mxu0
      %v2175 = vlaneseq
      %v2176 = vshrl.u32 %v2175, 7
      %v2177 = vsub.s32 1, %v2176
      %v2178 = vrot.slane %v1262, %v2177
      %v2179 = vmul.f32 %v2167, %v2178
      %v2180 = vmul.f32 %v2172, %v2178
      %v2181 = vadd.f32 %v2089, %v2179
      %v2182 = vadd.f32 %v2090, %v2180
      %s2183 = scalar_lea.vmem %s10, 160
      %v2184 = vld [vmem:[%s2183] sm:$0xff]
      %v2185 = vld [vmem:[%s2183 + $0x8] sm:$0xf]
      %v2187 = vsel %vm1265, %v2184, 0
      %v2190 = vsel %vm1265, %v2185, 0
      %2192 = vmatprep.subr.mxu0 0.0
      %2193 = vmatpush1.msra.mxu0 %v1258
      %2194 = vmatprep.subr.mxu0 0.0
      %2195 = vmatpush1.msra.mxu0 %v1259
      %2196 = vmatprep.subr.mxu0 0.0
      %2197 = vmatpush1.msra.mxu0 %v1260
      %2198 = vmatprep.subr.mxu0 0.0
      %2199 = vmatpush1.msra.mxu0 0.0
      %2200 = vmatprep.subr.mxu0 0.0
      %2201 = vmatpush1.msra.mxu0 0.0
      %2202 = vmatprep.subr.mxu0 0.0
      %2203 = vmatpush1.msra.mxu0 0.0
      %2204 = vmatprep.subr.mxu0 0.0
      %2205 = vmatpush1.msra.mxu0 0.0
      %2206 = vmatprep.subr.mxu0 0.0
      %2207 = vmatpush1.msra.mxu0 0.0
      %2208 = vmatprep.subr.mxu0 0.0
      %2209 = vmatpush1.msra.mxu0 0.0
      %2210 = vmatprep.subr.mxu0 0.0
      %2211 = vmatpush1.msra.mxu0 0.0
      %2212 = vmatprep.subr.mxu0 0.0
      %2213 = vmatpush1.msra.mxu0 0.0
      %2214 = vmatprep.subr.mxu0 0.0
      %2215 = vmatpush1.msra.mxu0 0.0
      %2216 = vmatprep.subr.mxu0 0.0
      %2217 = vmatpush1.msra.mxu0 0.0
      %2218 = vmatprep.subr.mxu0 0.0
      %2219 = vmatpush1.msra.mxu0 0.0
      %2220 = vmatprep.subr.mxu0 0.0
      %2221 = vmatpush1.msra.mxu0 0.0
      %2222 = vmatprep.subr.mxu0 0.0
      %2223 = vmatpush1.msra.mxu0 0.0
      %2224 = vmatprep.subr.mxu0 0.0
      %2225 = vmatpush1.msra.mxu0 0.0
      %2226 = vmatprep.subr.mxu0 0.0
      %2227 = vmatpush1.msra.mxu0 0.0
      %2228 = vmatprep.subr.mxu0 0.0
      %2229 = vmatpush1.msra.mxu0 0.0
      %2230 = vmatprep.subr.mxu0 0.0
      %2231 = vmatpush1.msra.mxu0 0.0
      %2232 = vmatprep.subr.mxu0 0.0
      %2233 = vmatpush1.msra.mxu0 0.0
      %2234 = vmatprep.subr.mxu0 0.0
      %2235 = vmatpush1.msra.mxu0 0.0
      %2236 = vmatprep.subr.mxu0 0.0
      %2237 = vmatpush1.msra.mxu0 0.0
      %2238 = vmatprep.subr.mxu0 0.0
      %2239 = vmatpush1.msra.mxu0 0.0
      %2240 = vmatprep.subr.mxu0 0.0
      %2241 = vmatpush1.msra.mxu0 0.0
      %2242 = vmatprep.subr.mxu0 0.0
      %2243 = vmatpush1.msra.mxu0 0.0
      %2244 = vmatprep.subr.mxu0 0.0
      %2245 = vmatpush1.msra.mxu0 0.0
      %2246 = vmatprep.subr.mxu0 0.0
      %2247 = vmatpush1.msra.mxu0 0.0
      %2248 = vmatprep.subr.mxu0 0.0
      %2249 = vmatpush1.msra.mxu0 0.0
      %2250 = vmatprep.subr.mxu0 0.0
      %2251 = vmatpush1.msra.mxu0 0.0
      %2252 = vmatprep.subr.mxu0 0.0
      %2253 = vmatpush1.msra.mxu0 0.0
      %2254 = vmatprep.subr.mxu0 0.0
      %2255 = vmatpush1.msra.mxu0 0.0
      %2256 = vmatprep.mubr.f32.mxu0 0.0
      %2257 = vmatmul.mubr.f32.gmra.mrb[0].mxu0 %v2187
      %v2258 = vpop.f32.mrb[0].mxu0
      %v2259 = vadd.f32 0.0, %v2258
      %v2260 = vpop.f32.mrb[0].mxu0
      %2261 = vmatprep.mubr.f32.mxu0 0.0
      %2262 = vmatmul.mubr.f32.gmra.mrb[0].mxu0 %v2190
      %v2263 = vpop.f32.mrb[0].mxu0
      %v2264 = vadd.f32 0.0, %v2263
      %v2265 = vpop.f32.mrb[0].mxu0
      %2266 = vdwg.mxu0
      %v2267 = vlaneseq
      %v2268 = vshrl.u32 %v2267, 7
      %v2269 = vsub.s32 2, %v2268
      %v2270 = vrot.slane %v1262, %v2269
      %v2271 = vmul.f32 %v2259, %v2270
      %v2272 = vmul.f32 %v2264, %v2270
      %v2273 = vadd.f32 %v2181, %v2271
      %v2274 = vadd.f32 %v2182, %v2272
      %s2275 = scalar_lea.vmem %s10, 176
      %v2276 = vld [vmem:[%s2275] sm:$0xff]
      %v2277 = vld [vmem:[%s2275 + $0x8] sm:$0xf]
      %v2279 = vsel %vm1265, %v2276, 0
      %v2282 = vsel %vm1265, %v2277, 0
      %2284 = vmatprep.subr.mxu0 0.0
      %2285 = vmatpush1.msra.mxu0 %v1258
      %2286 = vmatprep.subr.mxu0 0.0
      %2287 = vmatpush1.msra.mxu0 %v1259
      %2288 = vmatprep.subr.mxu0 0.0
      %2289 = vmatpush1.msra.mxu0 %v1260
      %2290 = vmatprep.subr.mxu0 0.0
      %2291 = vmatpush1.msra.mxu0 0.0
      %2292 = vmatprep.subr.mxu0 0.0
      %2293 = vmatpush1.msra.mxu0 0.0
      %2294 = vmatprep.subr.mxu0 0.0
      %2295 = vmatpush1.msra.mxu0 0.0
      %2296 = vmatprep.subr.mxu0 0.0
      %2297 = vmatpush1.msra.mxu0 0.0
      %2298 = vmatprep.subr.mxu0 0.0
      %2299 = vmatpush1.msra.mxu0 0.0
      %2300 = vmatprep.subr.mxu0 0.0
      %2301 = vmatpush1.msra.mxu0 0.0
      %2302 = vmatprep.subr.mxu0 0.0
      %2303 = vmatpush1.msra.mxu0 0.0
      %2304 = vmatprep.subr.mxu0 0.0
      %2305 = vmatpush1.msra.mxu0 0.0
      %2306 = vmatprep.subr.mxu0 0.0
      %2307 = vmatpush1.msra.mxu0 0.0
      %2308 = vmatprep.subr.mxu0 0.0
      %2309 = vmatpush1.msra.mxu0 0.0
      %2310 = vmatprep.subr.mxu0 0.0
      %2311 = vmatpush1.msra.mxu0 0.0
      %2312 = vmatprep.subr.mxu0 0.0
      %2313 = vmatpush1.msra.mxu0 0.0
      %2314 = vmatprep.subr.mxu0 0.0
      %2315 = vmatpush1.msra.mxu0 0.0
      %2316 = vmatprep.subr.mxu0 0.0
      %2317 = vmatpush1.msra.mxu0 0.0
      %2318 = vmatprep.subr.mxu0 0.0
      %2319 = vmatpush1.msra.mxu0 0.0
      %2320 = vmatprep.subr.mxu0 0.0
      %2321 = vmatpush1.msra.mxu0 0.0
      %2322 = vmatprep.subr.mxu0 0.0
      %2323 = vmatpush1.msra.mxu0 0.0
      %2324 = vmatprep.subr.mxu0 0.0
      %2325 = vmatpush1.msra.mxu0 0.0
      %2326 = vmatprep.subr.mxu0 0.0
      %2327 = vmatpush1.msra.mxu0 0.0
      %2328 = vmatprep.subr.mxu0 0.0
      %2329 = vmatpush1.msra.mxu0 0.0
      %2330 = vmatprep.subr.mxu0 0.0
      %2331 = vmatpush1.msra.mxu0 0.0
      %2332 = vmatprep.subr.mxu0 0.0
      %2333 = vmatpush1.msra.mxu0 0.0
      %2334 = vmatprep.subr.mxu0 0.0
      %2335 = vmatpush1.msra.mxu0 0.0
      %2336 = vmatprep.subr.mxu0 0.0
      %2337 = vmatpush1.msra.mxu0 0.0
      %2338 = vmatprep.subr.mxu0 0.0
      %2339 = vmatpush1.msra.mxu0 0.0
      %2340 = vmatprep.subr.mxu0 0.0
      %2341 = vmatpush1.msra.mxu0 0.0
      %2342 = vmatprep.subr.mxu0 0.0
      %2343 = vmatpush1.msra.mxu0 0.0
      %2344 = vmatprep.subr.mxu0 0.0
      %2345 = vmatpush1.msra.mxu0 0.0
      %2346 = vmatprep.subr.mxu0 0.0
      %2347 = vmatpush1.msra.mxu0 0.0
      %2348 = vmatprep.mubr.f32.mxu0 0.0
      %2349 = vmatmul.mubr.f32.gmra.mrb[0].mxu0 %v2279
      %v2350 = vpop.f32.mrb[0].mxu0
      %v2351 = vadd.f32 0.0, %v2350
      %v2352 = vpop.f32.mrb[0].mxu0
      %2353 = vmatprep.mubr.f32.mxu0 0.0
      %2354 = vmatmul.mubr.f32.gmra.mrb[0].mxu0 %v2282
      %v2355 = vpop.f32.mrb[0].mxu0
      %v2356 = vadd.f32 0.0, %v2355
      %v2357 = vpop.f32.mrb[0].mxu0
      %2358 = vdwg.mxu0
      %v2359 = vlaneseq
      %v2360 = vshrl.u32 %v2359, 7
      %v2361 = vsub.s32 3, %v2360
      %v2362 = vrot.slane %v1262, %v2361
      %v2363 = vmul.f32 %v2351, %v2362
      %v2364 = vmul.f32 %v2356, %v2362
      %v2365 = vadd.f32 %v2273, %v2363
      %v2366 = vadd.f32 %v2274, %v2364
      %s2367 = scalar_lea.vmem %s10, 192
      %v2368 = vld [vmem:[%s2367] sm:$0xff]
      %v2369 = vld [vmem:[%s2367 + $0x8] sm:$0xf]
      %v2371 = vsel %vm1265, %v2368, 0
      %v2374 = vsel %vm1265, %v2369, 0
      %2376 = vmatprep.subr.mxu0 0.0
      %2377 = vmatpush1.msra.mxu0 %v1258
      %2378 = vmatprep.subr.mxu0 0.0
      %2379 = vmatpush1.msra.mxu0 %v1259
      %2380 = vmatprep.subr.mxu0 0.0
      %2381 = vmatpush1.msra.mxu0 %v1260
      %2382 = vmatprep.subr.mxu0 0.0
      %2383 = vmatpush1.msra.mxu0 0.0
      %2384 = vmatprep.subr.mxu0 0.0
      %2385 = vmatpush1.msra.mxu0 0.0
      %2386 = vmatprep.subr.mxu0 0.0
      %2387 = vmatpush1.msra.mxu0 0.0
      %2388 = vmatprep.subr.mxu0 0.0
      %2389 = vmatpush1.msra.mxu0 0.0
      %2390 = vmatprep.subr.mxu0 0.0
      %2391 = vmatpush1.msra.mxu0 0.0
      %2392 = vmatprep.subr.mxu0 0.0
      %2393 = vmatpush1.msra.mxu0 0.0
      %2394 = vmatprep.subr.mxu0 0.0
      %2395 = vmatpush1.msra.mxu0 0.0
      %2396 = vmatprep.subr.mxu0 0.0
      %2397 = vmatpush1.msra.mxu0 0.0
      %2398 = vmatprep.subr.mxu0 0.0
      %2399 = vmatpush1.msra.mxu0 0.0
      %2400 = vmatprep.subr.mxu0 0.0
      %2401 = vmatpush1.msra.mxu0 0.0
      %2402 = vmatprep.subr.mxu0 0.0
      %2403 = vmatpush1.msra.mxu0 0.0
      %2404 = vmatprep.subr.mxu0 0.0
      %2405 = vmatpush1.msra.mxu0 0.0
      %2406 = vmatprep.subr.mxu0 0.0
      %2407 = vmatpush1.msra.mxu0 0.0
      %2408 = vmatprep.subr.mxu0 0.0
      %2409 = vmatpush1.msra.mxu0 0.0
      %2410 = vmatprep.subr.mxu0 0.0
      %2411 = vmatpush1.msra.mxu0 0.0
      %2412 = vmatprep.subr.mxu0 0.0
      %2413 = vmatpush1.msra.mxu0 0.0
      %2414 = vmatprep.subr.mxu0 0.0
      %2415 = vmatpush1.msra.mxu0 0.0
      %2416 = vmatprep.subr.mxu0 0.0
      %2417 = vmatpush1.msra.mxu0 0.0
      %2418 = vmatprep.subr.mxu0 0.0
      %2419 = vmatpush1.msra.mxu0 0.0
      %2420 = vmatprep.subr.mxu0 0.0
      %2421 = vmatpush1.msra.mxu0 0.0
      %2422 = vmatprep.subr.mxu0 0.0
      %2423 = vmatpush1.msra.mxu0 0.0
      %2424 = vmatprep.subr.mxu0 0.0
      %2425 = vmatpush1.msra.mxu0 0.0
      %2426 = vmatprep.subr.mxu0 0.0
      %2427 = vmatpush1.msra.mxu0 0.0
      %2428 = vmatprep.subr.mxu0 0.0
      %2429 = vmatpush1.msra.mxu0 0.0
      %2430 = vmatprep.subr.mxu0 0.0
      %2431 = vmatpush1.msra.mxu0 0.0
      %2432 = vmatprep.subr.mxu0 0.0
      %2433 = vmatpush1.msra.mxu0 0.0
      %2434 = vmatprep.subr.mxu0 0.0
      %2435 = vmatpush1.msra.mxu0 0.0
      %2436 = vmatprep.subr.mxu0 0.0
      %2437 = vmatpush1.msra.mxu0 0.0
      %2438 = vmatprep.subr.mxu0 0.0
      %2439 = vmatpush1.msra.mxu0 0.0
      %2440 = vmatprep.mubr.f32.mxu0 0.0
      %2441 = vmatmul.mubr.f32.gmra.mrb[0].mxu0 %v2371
      %v2442 = vpop.f32.mrb[0].mxu0
      %v2443 = vadd.f32 0.0, %v2442
      %v2444 = vpop.f32.mrb[0].mxu0
      %2445 = vmatprep.mubr.f32.mxu0 0.0
      %2446 = vmatmul.mubr.f32.gmra.mrb[0].mxu0 %v2374
      %v2447 = vpop.f32.mrb[0].mxu0
      %v2448 = vadd.f32 0.0, %v2447
      %v2449 = vpop.f32.mrb[0].mxu0
      %2450 = vdwg.mxu0
      %v2451 = vlaneseq
      %v2452 = vshrl.u32 %v2451, 7
      %v2453 = vsub.s32 4, %v2452
      %v2454 = vrot.slane %v1262, %v2453
      %v2455 = vmul.f32 %v2443, %v2454
      %v2456 = vmul.f32 %v2448, %v2454
      %v2457 = vadd.f32 %v2365, %v2455
      %v2458 = vadd.f32 %v2366, %v2456
      %s2459 = scalar_lea.vmem %s10, 208
      %v2460 = vld [vmem:[%s2459] sm:$0xff]
      %v2461 = vld [vmem:[%s2459 + $0x8] sm:$0xf]
      %v2463 = vsel %vm1265, %v2460, 0
      %v2466 = vsel %vm1265, %v2461, 0
      %2468 = vmatprep.subr.mxu0 0.0
      %2469 = vmatpush1.msra.mxu0 %v1258
      %2470 = vmatprep.subr.mxu0 0.0
      %2471 = vmatpush1.msra.mxu0 %v1259
      %2472 = vmatprep.subr.mxu0 0.0
      %2473 = vmatpush1.msra.mxu0 %v1260
      %2474 = vmatprep.subr.mxu0 0.0
      %2475 = vmatpush1.msra.mxu0 0.0
      %2476 = vmatprep.subr.mxu0 0.0
      %2477 = vmatpush1.msra.mxu0 0.0
      %2478 = vmatprep.subr.mxu0 0.0
      %2479 = vmatpush1.msra.mxu0 0.0
      %2480 = vmatprep.subr.mxu0 0.0
      %2481 = vmatpush1.msra.mxu0 0.0
      %2482 = vmatprep.subr.mxu0 0.0
      %2483 = vmatpush1.msra.mxu0 0.0
      %2484 = vmatprep.subr.mxu0 0.0
      %2485 = vmatpush1.msra.mxu0 0.0
      %2486 = vmatprep.subr.mxu0 0.0
      %2487 = vmatpush1.msra.mxu0 0.0
      %2488 = vmatprep.subr.mxu0 0.0
      %2489 = vmatpush1.msra.mxu0 0.0
      %2490 = vmatprep.subr.mxu0 0.0
      %2491 = vmatpush1.msra.mxu0 0.0
      %2492 = vmatprep.subr.mxu0 0.0
      %2493 = vmatpush1.msra.mxu0 0.0
      %2494 = vmatprep.subr.mxu0 0.0
      %2495 = vmatpush1.msra.mxu0 0.0
      %2496 = vmatprep.subr.mxu0 0.0
      %2497 = vmatpush1.msra.mxu0 0.0
      %2498 = vmatprep.subr.mxu0 0.0
      %2499 = vmatpush1.msra.mxu0 0.0
      %2500 = vmatprep.subr.mxu0 0.0
      %2501 = vmatpush1.msra.mxu0 0.0
      %2502 = vmatprep.subr.mxu0 0.0
      %2503 = vmatpush1.msra.mxu0 0.0
      %2504 = vmatprep.subr.mxu0 0.0
      %2505 = vmatpush1.msra.mxu0 0.0
      %2506 = vmatprep.subr.mxu0 0.0
      %2507 = vmatpush1.msra.mxu0 0.0
      %2508 = vmatprep.subr.mxu0 0.0
      %2509 = vmatpush1.msra.mxu0 0.0
      %2510 = vmatprep.subr.mxu0 0.0
      %2511 = vmatpush1.msra.mxu0 0.0
      %2512 = vmatprep.subr.mxu0 0.0
      %2513 = vmatpush1.msra.mxu0 0.0
      %2514 = vmatprep.subr.mxu0 0.0
      %2515 = vmatpush1.msra.mxu0 0.0
      %2516 = vmatprep.subr.mxu0 0.0
      %2517 = vmatpush1.msra.mxu0 0.0
      %2518 = vmatprep.subr.mxu0 0.0
      %2519 = vmatpush1.msra.mxu0 0.0
      %2520 = vmatprep.subr.mxu0 0.0
      %2521 = vmatpush1.msra.mxu0 0.0
      %2522 = vmatprep.subr.mxu0 0.0
      %2523 = vmatpush1.msra.mxu0 0.0
      %2524 = vmatprep.subr.mxu0 0.0
      %2525 = vmatpush1.msra.mxu0 0.0
      %2526 = vmatprep.subr.mxu0 0.0
      %2527 = vmatpush1.msra.mxu0 0.0
      %2528 = vmatprep.subr.mxu0 0.0
      %2529 = vmatpush1.msra.mxu0 0.0
      %2530 = vmatprep.subr.mxu0 0.0
      %2531 = vmatpush1.msra.mxu0 0.0
      %2532 = vmatprep.mubr.f32.mxu0 0.0
      %2533 = vmatmul.mubr.f32.gmra.mrb[0].mxu0 %v2463
      %v2534 = vpop.f32.mrb[0].mxu0
      %v2535 = vadd.f32 0.0, %v2534
      %v2536 = vpop.f32.mrb[0].mxu0
      %2537 = vmatprep.mubr.f32.mxu0 0.0
      %2538 = vmatmul.mubr.f32.gmra.mrb[0].mxu0 %v2466
      %v2539 = vpop.f32.mrb[0].mxu0
      %v2540 = vadd.f32 0.0, %v2539
      %v2541 = vpop.f32.mrb[0].mxu0
      %2542 = vdwg.mxu0
      %v2543 = vlaneseq
      %v2544 = vshrl.u32 %v2543, 7
      %v2545 = vsub.s32 5, %v2544
      %v2546 = vrot.slane %v1262, %v2545
      %v2547 = vmul.f32 %v2535, %v2546
      %v2548 = vmul.f32 %v2540, %v2546
      %v2549 = vadd.f32 %v2457, %v2547
      %v2550 = vadd.f32 %v2458, %v2548
      %s2551 = scalar_lea.vmem %s10, 224
      %v2552 = vld [vmem:[%s2551] sm:$0xff]
      %v2553 = vld [vmem:[%s2551 + $0x8] sm:$0xf]
      %v2555 = vsel %vm1265, %v2552, 0
      %v2558 = vsel %vm1265, %v2553, 0
      %2560 = vmatprep.subr.mxu0 0.0
      %2561 = vmatpush1.msra.mxu0 %v1258
      %2562 = vmatprep.subr.mxu0 0.0
      %2563 = vmatpush1.msra.mxu0 %v1259
      %2564 = vmatprep.subr.mxu0 0.0
      %2565 = vmatpush1.msra.mxu0 %v1260
      %2566 = vmatprep.subr.mxu0 0.0
      %2567 = vmatpush1.msra.mxu0 0.0
      %2568 = vmatprep.subr.mxu0 0.0
      %2569 = vmatpush1.msra.mxu0 0.0
      %2570 = vmatprep.subr.mxu0 0.0
      %2571 = vmatpush1.msra.mxu0 0.0
      %2572 = vmatprep.subr.mxu0 0.0
      %2573 = vmatpush1.msra.mxu0 0.0
      %2574 = vmatprep.subr.mxu0 0.0
      %2575 = vmatpush1.msra.mxu0 0.0
      %2576 = vmatprep.subr.mxu0 0.0
      %2577 = vmatpush1.msra.mxu0 0.0
      %2578 = vmatprep.subr.mxu0 0.0
      %2579 = vmatpush1.msra.mxu0 0.0
      %2580 = vmatprep.subr.mxu0 0.0
      %2581 = vmatpush1.msra.mxu0 0.0
      %2582 = vmatprep.subr.mxu0 0.0
      %2583 = vmatpush1.msra.mxu0 0.0
      %2584 = vmatprep.subr.mxu0 0.0
      %2585 = vmatpush1.msra.mxu0 0.0
      %2586 = vmatprep.subr.mxu0 0.0
      %2587 = vmatpush1.msra.mxu0 0.0
      %2588 = vmatprep.subr.mxu0 0.0
      %2589 = vmatpush1.msra.mxu0 0.0
      %2590 = vmatprep.subr.mxu0 0.0
      %2591 = vmatpush1.msra.mxu0 0.0
      %2592 = vmatprep.subr.mxu0 0.0
      %2593 = vmatpush1.msra.mxu0 0.0
      %2594 = vmatprep.subr.mxu0 0.0
      %2595 = vmatpush1.msra.mxu0 0.0
      %2596 = vmatprep.subr.mxu0 0.0
      %2597 = vmatpush1.msra.mxu0 0.0
      %2598 = vmatprep.subr.mxu0 0.0
      %2599 = vmatpush1.msra.mxu0 0.0
      %2600 = vmatprep.subr.mxu0 0.0
      %2601 = vmatpush1.msra.mxu0 0.0
      %2602 = vmatprep.subr.mxu0 0.0
      %2603 = vmatpush1.msra.mxu0 0.0
      %2604 = vmatprep.subr.mxu0 0.0
      %2605 = vmatpush1.msra.mxu0 0.0
      %2606 = vmatprep.subr.mxu0 0.0
      %2607 = vmatpush1.msra.mxu0 0.0
      %2608 = vmatprep.subr.mxu0 0.0
      %2609 = vmatpush1.msra.mxu0 0.0
      %2610 = vmatprep.subr.mxu0 0.0
      %2611 = vmatpush1.msra.mxu0 0.0
      %2612 = vmatprep.subr.mxu0 0.0
      %2613 = vmatpush1.msra.mxu0 0.0
      %2614 = vmatprep.subr.mxu0 0.0
      %2615 = vmatpush1.msra.mxu0 0.0
      %2616 = vmatprep.subr.mxu0 0.0
      %2617 = vmatpush1.msra.mxu0 0.0
      %2618 = vmatprep.subr.mxu0 0.0
      %2619 = vmatpush1.msra.mxu0 0.0
      %2620 = vmatprep.subr.mxu0 0.0
      %2621 = vmatpush1.msra.mxu0 0.0
      %2622 = vmatprep.subr.mxu0 0.0
      %2623 = vmatpush1.msra.mxu0 0.0
      %2624 = vmatprep.mubr.f32.mxu0 0.0
      %2625 = vmatmul.mubr.f32.gmra.mrb[0].mxu0 %v2555
      %v2626 = vpop.f32.mrb[0].mxu0
      %v2627 = vadd.f32 0.0, %v2626
      %v2628 = vpop.f32.mrb[0].mxu0
      %2629 = vmatprep.mubr.f32.mxu0 0.0
      %2630 = vmatmul.mubr.f32.gmra.mrb[0].mxu0 %v2558
      %v2631 = vpop.f32.mrb[0].mxu0
      %v2632 = vadd.f32 0.0, %v2631
      %v2633 = vpop.f32.mrb[0].mxu0
      %2634 = vdwg.mxu0
      %v2635 = vlaneseq
      %v2636 = vshrl.u32 %v2635, 7
      %v2637 = vsub.s32 6, %v2636
      %v2638 = vrot.slane %v1262, %v2637
      %v2639 = vmul.f32 %v2627, %v2638
      %v2640 = vmul.f32 %v2632, %v2638
      %v2641 = vadd.f32 %v2549, %v2639
      %v2642 = vadd.f32 %v2550, %v2640
      %v2643 = vld [vmem:[%s12] sm:$0xff]
      %v2644 = vld [vmem:[%s12 + $0x8] sm:$0xff]
      %v2645 = vld [vmem:[%s12 + $0x10] sm:$0xff]
      %v2647 = vsel %vm1265, %v2641, 0
      %v2650 = vsel %vm1265, %v2642, 0
      %2652 = vmatprep.subr.mxu0 0.0
      %2653 = vmatpush1.msra.mxu0 %v2643
      %2654 = vmatprep.subr.mxu0 0.0
      %2655 = vmatpush1.msra.mxu0 %v2644
      %2656 = vmatprep.subr.mxu0 0.0
      %2657 = vmatpush1.msra.mxu0 %v2645
      %2658 = vmatprep.subr.mxu0 0.0
      %2659 = vmatpush1.msra.mxu0 0.0
      %2660 = vmatprep.subr.mxu0 0.0
      %2661 = vmatpush1.msra.mxu0 0.0
      %2662 = vmatprep.subr.mxu0 0.0
      %2663 = vmatpush1.msra.mxu0 0.0
      %2664 = vmatprep.subr.mxu0 0.0
      %2665 = vmatpush1.msra.mxu0 0.0
      %2666 = vmatprep.subr.mxu0 0.0
      %2667 = vmatpush1.msra.mxu0 0.0
      %2668 = vmatprep.subr.mxu0 0.0
      %2669 = vmatpush1.msra.mxu0 0.0
      %2670 = vmatprep.subr.mxu0 0.0
      %2671 = vmatpush1.msra.mxu0 0.0
      %2672 = vmatprep.subr.mxu0 0.0
      %2673 = vmatpush1.msra.mxu0 0.0
      %2674 = vmatprep.subr.mxu0 0.0
      %2675 = vmatpush1.msra.mxu0 0.0
      %2676 = vmatprep.subr.mxu0 0.0
      %2677 = vmatpush1.msra.mxu0 0.0
      %2678 = vmatprep.subr.mxu0 0.0
      %2679 = vmatpush1.msra.mxu0 0.0
      %2680 = vmatprep.subr.mxu0 0.0
      %2681 = vmatpush1.msra.mxu0 0.0
      %2682 = vmatprep.subr.mxu0 0.0
      %2683 = vmatpush1.msra.mxu0 0.0
      %2684 = vmatprep.subr.mxu0 0.0
      %2685 = vmatpush1.msra.mxu0 0.0
      %2686 = vmatprep.subr.mxu0 0.0
      %2687 = vmatpush1.msra.mxu0 0.0
      %2688 = vmatprep.subr.mxu0 0.0
      %2689 = vmatpush1.msra.mxu0 0.0
      %2690 = vmatprep.subr.mxu0 0.0
      %2691 = vmatpush1.msra.mxu0 0.0
      %2692 = vmatprep.subr.mxu0 0.0
      %2693 = vmatpush1.msra.mxu0 0.0
      %2694 = vmatprep.subr.mxu0 0.0
      %2695 = vmatpush1.msra.mxu0 0.0
      %2696 = vmatprep.subr.mxu0 0.0
      %2697 = vmatpush1.msra.mxu0 0.0
      %2698 = vmatprep.subr.mxu0 0.0
      %2699 = vmatpush1.msra.mxu0 0.0
      %2700 = vmatprep.subr.mxu0 0.0
      %2701 = vmatpush1.msra.mxu0 0.0
      %2702 = vmatprep.subr.mxu0 0.0
      %2703 = vmatpush1.msra.mxu0 0.0
      %2704 = vmatprep.subr.mxu0 0.0
      %2705 = vmatpush1.msra.mxu0 0.0
      %2706 = vmatprep.subr.mxu0 0.0
      %2707 = vmatpush1.msra.mxu0 0.0
      %2708 = vmatprep.subr.mxu0 0.0
      %2709 = vmatpush1.msra.mxu0 0.0
      %2710 = vmatprep.subr.mxu0 0.0
      %2711 = vmatpush1.msra.mxu0 0.0
      %2712 = vmatprep.subr.mxu0 0.0
      %2713 = vmatpush1.msra.mxu0 0.0
      %2714 = vmatprep.subr.mxu0 0.0
      %2715 = vmatpush1.msra.mxu0 0.0
      %2716 = vmatprep.mubr.f32.mxu0 0.0
      %2717 = vmatmul.mubr.f32.gmra.mrb[0].mxu0 %v2647
      %v2718 = vpop.f32.mrb[0].mxu0
      %v2719 = vadd.f32 0.0, %v2718
      %v2720 = vpop.f32.mrb[0].mxu0
      %2721 = vmatprep.mubr.f32.mxu0 0.0
      %2722 = vmatmul.mubr.f32.gmra.mrb[0].mxu0 %v2650
      %v2723 = vpop.f32.mrb[0].mxu0
      %v2724 = vadd.f32 0.0, %v2723
      %v2725 = vpop.f32.mrb[0].mxu0
      %2726 = vdwg.mxu0
      %v2727 = vadd.f32 %v2719, 3.0
      %v2728 = vadd.f32 %v2724, 3.0
      %v2729 = vmax.f32 %v2727, 0.0
      %v2730 = vmax.f32 %v2728, 0.0
      %v2731 = vmin.f32 %v2729, 6.0
      %v2732 = vmin.f32 %v2730, 6.0
      %v2733 = vmul.f32 %v2731, 0.16666667
      %v2734 = vmul.f32 %v2732, 0.16666667
      %v2735 = vmul.f32 %v2719, %v2733
      %v2736 = vmul.f32 %v2724, %v2734
      %v2737 = vld [vmem:[%s13] sm:$0xff]
      %v2738 = vld [vmem:[%s13 + $0x8] sm:$0xff]
      %v2739 = vld [vmem:[%s13 + $0x10] sm:$0xff]
      %v2740 = vld [vmem:[%s13 + $0x18] sm:$0xff]
      %v2741 = vld [vmem:[%s13 + $0x20] sm:$0xff]
      %v2742 = vld [vmem:[%s13 + $0x28] sm:$0xff]
      %v2743 = vld [vmem:[%s13 + $0x30] sm:$0xff]
      %v2744 = vld [vmem:[%s13 + $0x38] sm:$0xff]
      %v2745 = vld [vmem:[%s13 + $0x40] sm:$0xff]
      %v2746 = vld [vmem:[%s13 + $0x48] sm:$0xff]
      %v2747 = vld [vmem:[%s13 + $0x50] sm:$0xff]
      %v2748 = vld [vmem:[%s13 + $0x58] sm:$0xff]
      %vm2749 = vcmask 785408
      %v2751 = vsel %vm2749, %v2735, 0
      %v2754 = vsel %vm2749, %v2736, 0
      %2756 = vmatprep.subr.mxu0 0.0
      %2757 = vmatpush1.msra.mxu0 %v2737
      %2758 = vmatprep.subr.mxu0 0.0
      %2759 = vmatpush1.msra.mxu0 %v2738
      %2760 = vmatprep.subr.mxu0 0.0
      %2761 = vmatpush1.msra.mxu0 %v2739
      %2762 = vmatprep.subr.mxu0 0.0
      %2763 = vmatpush1.msra.mxu0 %v2740
      %2764 = vmatprep.subr.mxu0 0.0
      %2765 = vmatpush1.msra.mxu0 %v2741
      %2766 = vmatprep.subr.mxu0 0.0
      %2767 = vmatpush1.msra.mxu0 %v2742
      %2768 = vmatprep.subr.mxu0 0.0
      %2769 = vmatpush1.msra.mxu0 %v2743
      %2770 = vmatprep.subr.mxu0 0.0
      %2771 = vmatpush1.msra.mxu0 %v2744
      %2772 = vmatprep.subr.mxu0 0.0
      %2773 = vmatpush1.msra.mxu0 %v2745
      %2774 = vmatprep.subr.mxu0 0.0
      %2775 = vmatpush1.msra.mxu0 %v2746
      %2776 = vmatprep.subr.mxu0 0.0
      %2777 = vmatpush1.msra.mxu0 %v2747
      %2778 = vmatprep.subr.mxu0 0.0
      %2779 = vmatpush1.msra.mxu0 %v2748
      %2780 = vmatprep.subr.mxu0 0.0
      %2781 = vmatpush1.msra.mxu0 0.0
      %2782 = vmatprep.subr.mxu0 0.0
      %2783 = vmatpush1.msra.mxu0 0.0
      %2784 = vmatprep.subr.mxu0 0.0
      %2785 = vmatpush1.msra.mxu0 0.0
      %2786 = vmatprep.subr.mxu0 0.0
      %2787 = vmatpush1.msra.mxu0 0.0
      %2788 = vmatprep.subr.mxu0 0.0
      %2789 = vmatpush1.msra.mxu0 0.0
      %2790 = vmatprep.subr.mxu0 0.0
      %2791 = vmatpush1.msra.mxu0 0.0
      %2792 = vmatprep.subr.mxu0 0.0
      %2793 = vmatpush1.msra.mxu0 0.0
      %2794 = vmatprep.subr.mxu0 0.0
      %2795 = vmatpush1.msra.mxu0 0.0
      %2796 = vmatprep.subr.mxu0 0.0
      %2797 = vmatpush1.msra.mxu0 0.0
      %2798 = vmatprep.subr.mxu0 0.0
      %2799 = vmatpush1.msra.mxu0 0.0
      %2800 = vmatprep.subr.mxu0 0.0
      %2801 = vmatpush1.msra.mxu0 0.0
      %2802 = vmatprep.subr.mxu0 0.0
      %2803 = vmatpush1.msra.mxu0 0.0
      %2804 = vmatprep.subr.mxu0 0.0
      %2805 = vmatpush1.msra.mxu0 0.0
      %2806 = vmatprep.subr.mxu0 0.0
      %2807 = vmatpush1.msra.mxu0 0.0
      %2808 = vmatprep.subr.mxu0 0.0
      %2809 = vmatpush1.msra.mxu0 0.0
      %2810 = vmatprep.subr.mxu0 0.0
      %2811 = vmatpush1.msra.mxu0 0.0
      %2812 = vmatprep.subr.mxu0 0.0
      %2813 = vmatpush1.msra.mxu0 0.0
      %2814 = vmatprep.subr.mxu0 0.0
      %2815 = vmatpush1.msra.mxu0 0.0
      %2816 = vmatprep.subr.mxu0 0.0
      %2817 = vmatpush1.msra.mxu0 0.0
      %2818 = vmatprep.subr.mxu0 0.0
      %2819 = vmatpush1.msra.mxu0 0.0
      %2820 = vmatprep.mubr.f32.mxu0 0.0
      %2821 = vmatmul.mubr.f32.gmra.mrb[0].mxu0 %v2751
      %v2822 = vpop.f32.mrb[0].mxu0
      %v2823 = vadd.f32 0.0, %v2822
      %v2824 = vpop.f32.mrb[0].mxu0
      %2825 = vmatprep.mubr.f32.mxu0 0.0
      %2826 = vmatmul.mubr.f32.gmra.mrb[0].mxu0 %v2754
      %v2827 = vpop.f32.mrb[0].mxu0
      %v2828 = vadd.f32 0.0, %v2827
      %v2829 = vpop.f32.mrb[0].mxu0
      %2830 = vdwg.mxu0
      %v2831 = vsel %vm1057, %v2823, 0.0
      %2832 = vadd.xlane.f32.xlu0 %v2831
      %v2833 = vpop.xlane.xlu0 %2832
      %vm2834 = vcmask 125952
      %v2835 = vsel %vm2834, %v2828, 0.0
      %2836 = vadd.xlane.f32.xlu0 %v2835
      %v2837 = vpop.xlane.xlu0 %2836
      %v2838 = vrcp.pop 16.0
      %v2839 = vmul.f32 %v2833, %v2838
      %v2840 = vmul.f32 %v2837, %v2838
      %v2841 = vsub.f32 %v2823, %v2839
      %v2842 = vsub.f32 %v2828, %v2840
      %v2843 = vmul.f32 %v2841, %v2841
      %v2844 = vmul.f32 %v2842, %v2842
      %v2845 = vsel %vm1057, %v2843, 0.0
      %2846 = vadd.xlane.f32.xlu0 %v2845
      %v2847 = vpop.xlane.xlu0 %2846
      %v2848 = vsel %vm2834, %v2844, 0.0
      %2849 = vadd.xlane.f32.xlu0 %v2848
      %v2850 = vpop.xlane.xlu0 %2849
      %v2851 = vmul.f32 %v2847, %v2838
      %v2852 = vmul.f32 %v2850, %v2838
      %v2853 = vadd.f32 %v2851, 1e-05
      %v2854 = vadd.f32 %v2852, 1e-05
      %v2855 = vrsqrt.pop %v2853
      %v2856 = vrsqrt.pop %v2854
      %v2857 = vmul.f32 %v2841, %v2855
      %v2858 = vmul.f32 %v2842, %v2856
      %2859 = vst.msk [vmem:[%s467] sm:$0xff] %vm1057, %v2857
      %2860 = vst.msk [vmem:[%s467 + $0x8] sm:$0xf] %vm2834, %v2858
      %2863 = vrot.lane.b32.xlu0 %v2823, 112
      %v2864 = vpop.permute.xlu0 %2863
      %2865 = vrot.lane.b32.xlu0 %v2828, 112
      %v2866 = vpop.permute.xlu0 %2865
      %v2869 = vsel %vm1057, %v2864, 0.0
      %2870 = vadd.xlane.f32.xlu0 %v2869
      %v2871 = vpop.xlane.xlu0 %2870
      %v2872 = vsel %vm2834, %v2866, 0.0
      %2873 = vadd.xlane.f32.xlu0 %v2872
      %v2874 = vpop.xlane.xlu0 %2873
      %v2875 = vmul.f32 %v2871, %v2838
      %v2876 = vmul.f32 %v2874, %v2838
      %v2877 = vsub.f32 %v2823, %v2875
      %v2878 = vsub.f32 %v2828, %v2876
      %v2879 = vmul.f32 %v2877, %v2877
      %v2880 = vmul.f32 %v2878, %v2878
      %2883 = vrot.lane.b32.xlu0 %v2879, 112
      %v2884 = vpop.permute.xlu0 %2883
      %2885 = vrot.lane.b32.xlu0 %v2880, 112
      %v2886 = vpop.permute.xlu0 %2885
      %v2889 = vsel %vm1057, %v2884, 0.0
      %2890 = vadd.xlane.f32.xlu0 %v2889
      %v2891 = vpop.xlane.xlu0 %2890
      %v2892 = vsel %vm2834, %v2886, 0.0
      %2893 = vadd.xlane.f32.xlu0 %v2892
      %v2894 = vpop.xlane.xlu0 %2893
      %v2895 = vmul.f32 %v2891, %v2838
      %v2896 = vmul.f32 %v2894, %v2838
      %v2897 = vadd.f32 %v2895, 1e-05
      %v2898 = vadd.f32 %v2896, 1e-05
      %v2899 = vrsqrt.pop %v2897
      %v2900 = vrsqrt.pop %v2898
      %v2901 = vmul.f32 %v2877, %v2899
      %v2902 = vmul.f32 %v2878, %v2900
      %vm2903 = vcmask 261248
      %2904 = vst.msk [vmem:[%s467] sm:$0xff] %vm2903, %v2901
      %vm2905 = vcmask 257152
      %2906 = vst.msk [vmem:[%s467 + $0x8] sm:$0xf] %vm2905, %v2902
      %2907 = vrot.lane.b32.xlu0 %v2823, 96
      %v2908 = vpop.permute.xlu0 %2907
      %2909 = vrot.lane.b32.xlu0 %v2828, 96
      %v2910 = vpop.permute.xlu0 %2909
      %v2913 = vsel %vm1057, %v2908, 0.0
      %2914 = vadd.xlane.f32.xlu0 %v2913
      %v2915 = vpop.xlane.xlu0 %2914
      %v2916 = vsel %vm2834, %v2910, 0.0
      %2917 = vadd.xlane.f32.xlu0 %v2916
      %v2918 = vpop.xlane.xlu0 %2917
      %v2919 = vmul.f32 %v2915, %v2838
      %v2920 = vmul.f32 %v2918, %v2838
      %v2921 = vsub.f32 %v2823, %v2919
      %v2922 = vsub.f32 %v2828, %v2920
      %v2923 = vmul.f32 %v2921, %v2921
      %v2924 = vmul.f32 %v2922, %v2922
      %2927 = vrot.lane.b32.xlu0 %v2923, 96
      %v2928 = vpop.permute.xlu0 %2927
      %2929 = vrot.lane.b32.xlu0 %v2924, 96
      %v2930 = vpop.permute.xlu0 %2929
      %v2933 = vsel %vm1057, %v2928, 0.0
      %2934 = vadd.xlane.f32.xlu0 %v2933
      %v2935 = vpop.xlane.xlu0 %2934
      %v2936 = vsel %vm2834, %v2930, 0.0
      %2937 = vadd.xlane.f32.xlu0 %v2936
      %v2938 = vpop.xlane.xlu0 %2937
      %v2939 = vmul.f32 %v2935, %v2838
      %v2940 = vmul.f32 %v2938, %v2838
      %v2941 = vadd.f32 %v2939, 1e-05
      %v2942 = vadd.f32 %v2940, 1e-05
      %v2943 = vrsqrt.pop %v2941
      %v2944 = vrsqrt.pop %v2942
      %v2945 = vmul.f32 %v2921, %v2943
      %v2946 = vmul.f32 %v2922, %v2944
      %vm2947 = vcmask 392448
      %2948 = vst.msk [vmem:[%s467] sm:$0xff] %vm2947, %v2945
      %vm2949 = vcmask 388352
      %2950 = vst.msk [vmem:[%s467 + $0x8] sm:$0xf] %vm2949, %v2946
      %2951 = vrot.lane.b32.xlu0 %v2823, 80
      %v2952 = vpop.permute.xlu0 %2951
      %2953 = vrot.lane.b32.xlu0 %v2828, 80
      %v2954 = vpop.permute.xlu0 %2953
      %v2957 = vsel %vm1057, %v2952, 0.0
      %2958 = vadd.xlane.f32.xlu0 %v2957
      %v2959 = vpop.xlane.xlu0 %2958
      %v2960 = vsel %vm2834, %v2954, 0.0
      %2961 = vadd.xlane.f32.xlu0 %v2960
      %v2962 = vpop.xlane.xlu0 %2961
      %v2963 = vmul.f32 %v2959, %v2838
      %v2964 = vmul.f32 %v2962, %v2838
      %v2965 = vsub.f32 %v2823, %v2963
      %v2966 = vsub.f32 %v2828, %v2964
      %v2967 = vmul.f32 %v2965, %v2965
      %v2968 = vmul.f32 %v2966, %v2966
      %2971 = vrot.lane.b32.xlu0 %v2967, 80
      %v2972 = vpop.permute.xlu0 %2971
      %2973 = vrot.lane.b32.xlu0 %v2968, 80
      %v2974 = vpop.permute.xlu0 %2973
      %v2977 = vsel %vm1057, %v2972, 0.0
      %2978 = vadd.xlane.f32.xlu0 %v2977
      %v2979 = vpop.xlane.xlu0 %2978
      %v2980 = vsel %vm2834, %v2974, 0.0
      %2981 = vadd.xlane.f32.xlu0 %v2980
      %v2982 = vpop.xlane.xlu0 %2981
      %v2983 = vmul.f32 %v2979, %v2838
      %v2984 = vmul.f32 %v2982, %v2838
      %v2985 = vadd.f32 %v2983, 1e-05
      %v2986 = vadd.f32 %v2984, 1e-05
      %v2987 = vrsqrt.pop %v2985
      %v2988 = vrsqrt.pop %v2986
      %v2989 = vmul.f32 %v2965, %v2987
      %v2990 = vmul.f32 %v2966, %v2988
      %vm2991 = vcmask 523648
      %2992 = vst.msk [vmem:[%s467] sm:$0xff] %vm2991, %v2989
      %vm2993 = vcmask 519552
      %2994 = vst.msk [vmem:[%s467 + $0x8] sm:$0xf] %vm2993, %v2990
      %vm2995 = vcmask 785920
      %2996 = vst.msk [vmem:[%s467] sm:$0xff] %vm2995, %v2823
      %vm2997 = vcmask 781824
      %2998 = vst.msk [vmem:[%s467 + $0x8] sm:$0xf] %vm2997, %v2828
      %p2999 = scmp.lt.s32.totalorder %s25, 1
      %s3000 = scalar_select %p2999, %s25, 1
      %s3001 = smul.addr %s3000, 2
      %s3002 = smul.addr %s3001, 8
      %s3003 = scalar_lea.vmem %s14, %s3002
      // Predicated region
      $region77: #{gcanet_forward.2} parent=75 // pred_check
        %p3004 = pneg %p342
      $region78: #{gcanet_forward.2} parent=75 // pred_check_branch
        %3006 = sbr.rel (%p3004) target = $region80
      $region79: #{gcanet_forward.2} parent=75 // pred_region
        _
      $region80: #{gcanet_forward.2} parent=75 // pred_fallthru
        _
    $region76: #{gcanet_forward.2} parent=5 // pred_fallthru
      _
    %p3007 = scmp.le.s32.totalorder 2, %s20
    // Predicated region
    $region81: #{gcanet_forward.2} parent=5 // pred_check
      %p3008 = pneg %p3007
    $region82: #{gcanet_forward.2} parent=5 // pred_check_branch
      %3010 = sbr.rel (%p3008) target = $region84
    $region83: #{gcanet_forward.2} parent=5 // pred_region
      %s3011 = ssub.s32 %s20, 2
      // Predicated region
      $region85: #{gcanet_forward.2} parent=83 // pred_check
        %p3012 = pneg %p348
      $region86: #{gcanet_forward.2} parent=83 // pred_check_branch
        %3014 = sbr.rel (%p3012) target = $region88
      $region87: #{gcanet_forward.2} parent=83 // pred_region
        %p3015 = scmp.lt.s32.totalorder %s26, 1
        %s3016 = scalar_select %p3015, %s26, 1
        %s3017 = smul.addr %s3016, 2
        %s3018 = smul.addr %s3017, 8
        %s3019 = scalar_lea.vmem %s14, %s3018
      $region88: #{gcanet_forward.2} parent=83 // pred_fallthru
        _
    $region84: #{gcanet_forward.2} parent=5 // pred_fallthru
      _
  $region6: #{gcanet_forward.2} parent=0 // loop_footer
    %s24 = sadd.s32 1, %s20
  $region7: #{gcanet_forward.2} parent=0 // loop_footer_branch
    %19 = sbr.rel target = $region3
  $region8: #{gcanet_forward.2} parent=0 // loop_exit
    _

</llo_original>
